<compile_context>
chip_gen: v7x
topology: tpu7x:2x2x1
jax: 0.10.0
libtpu: 0.0.40
codegen_flags: <defaults>
</compile_context>

<pallas_src>
import jax
import jax.numpy as jnp
from jax.experimental import pallas as pl
from jax.experimental.pallas import tpu as pltpu

LEAK = 0.2
BN_EPS = 1e-5

Z_DIM = 100
EMB_DIM = 10
IN_DIM = Z_DIM + EMB_DIM          # 110
IN_PAD = 128                      # padded to lane multiple
H1, H2, H3 = 256, 512, 1024
OUT_DIM = 28 * 28                 # 784
OUT_PAD = 896                     # internal matmul width (next multiple of 128)


def _leaky_relu(x):
    return jnp.where(x >= 0, x, LEAK * x)


def _generator_kernel(x_ref,
                      w1_ref, b1_ref,
                      w2_ref, g2_ref, be2_ref,
                      w3_ref, g3_ref, be3_ref,
                      w4_ref, b4_ref,
                      out_ref):
    f32 = jnp.float32
    bf16 = jnp.bfloat16

    x = x_ref[...]                                                  # (B,128) bf16

    # Linear(110->256) + LeakyReLU                        (bf16 MXU, f32 acc)
    h1 = jnp.dot(x, w1_ref[...], preferred_element_type=f32) + b1_ref[...]
    h1 = _leaky_relu(h1)

    # Linear(256->512) [bias dropped: cancels in BN] + BatchNorm + LeakyReLU
    h2 = jnp.dot(h1.astype(bf16), w2_ref[...], preferred_element_type=f32)
    mu2 = jnp.mean(h2, axis=0, keepdims=True)
    var2 = jnp.mean(h2 * h2, axis=0, keepdims=True) - mu2 * mu2
    s2 = g2_ref[...] * jax.lax.rsqrt(var2 + BN_EPS)                 # (1,512)
    h2 = _leaky_relu(h2 * s2 + (be2_ref[...] - mu2 * s2))

    # Linear(512->1024) [bias dropped] + BatchNorm + LeakyReLU
    h3 = jnp.dot(h2.astype(bf16), w3_ref[...], preferred_element_type=f32)
    mu3 = jnp.mean(h3, axis=0, keepdims=True)
    var3 = jnp.mean(h3 * h3, axis=0, keepdims=True) - mu3 * mu3
    s3 = g3_ref[...] * jax.lax.rsqrt(var3 + BN_EPS)                 # (1,1024)
    h3 = _leaky_relu(h3 * s3 + (be3_ref[...] - mu3 * s3))

    # Linear(1024->784, computed at 896 lanes) + Tanh; crop pad before store
    h4 = jnp.dot(h3.astype(bf16), w4_ref[...], preferred_element_type=f32) + b4_ref[...]
    out_ref[...] = jnp.tanh(h4[:, :OUT_DIM])


def init_params(key):
    """Parameter init mirroring PyTorch shapes/defaults; weights pre-padded
    and pre-cast to bf16 once (not per forward call)."""
    ks = jax.random.split(key, 10)

    def linear(kw, kb, fan_in, fan_out):
        bound = 1.0 / jnp.sqrt(fan_in)
        # stored transposed: (in, out) so the kernel does x @ W
        w = jax.random.uniform(kw, (fan_in, fan_out), jnp.float32, -bound, bound)
        b = jax.random.uniform(kb, (1, fan_out), jnp.float32, -bound, bound)
        return w, b

    emb = jax.random.normal(ks[0], (10, EMB_DIM), jnp.float32)  # Embedding ~ N(0,1)
    w1, b1 = linear(ks[1], ks[2], IN_DIM, H1)
    w2, b2 = linear(ks[3], ks[4], H1, H2)
    w3, b3 = linear(ks[5], ks[6], H2, H3)
    w4, b4 = linear(ks[7], ks[8], H3, OUT_DIM)

    # one-time padding + bf16 cast (perf: no per-call re-padding / HBM pass)
    w1 = jnp.pad(w1, ((0, IN_PAD - IN_DIM), (0, 0))).astype(jnp.bfloat16)   # (128,256)
    w2 = w2.astype(jnp.bfloat16)                                            # (256,512)
    w3 = w3.astype(jnp.bfloat16)                                            # (512,1024)
    w4 = jnp.pad(w4, ((0, 0), (0, OUT_PAD - OUT_DIM))).astype(jnp.bfloat16) # (1024,896)
    b4 = jnp.pad(b4, ((0, 0), (0, OUT_PAD - OUT_DIM)))                      # (1,896) f32

    # BatchNorm1d defaults: gamma = 1, beta = 0 (kept f32)
    g2, be2 = jnp.ones((1, H2), jnp.float32), jnp.zeros((1, H2), jnp.float32)
    g3, be3 = jnp.ones((1, H3), jnp.float32), jnp.zeros((1, H3), jnp.float32)

    # b2/b3 kept only to mirror the PyTorch parameter set (cancel against BN).
    return dict(emb=emb, w1=w1, b1=b1, w2=w2, b2=b2, g2=g2, be2=be2,
                w3=w3, b3=b3, g3=g3, be3=be3, w4=w4, b4=b4)


def _vmem_limit_bytes(batch):
    """Actual VMEM requirement + headroom (instead of claiming all of a v7x TC)."""
    w_bytes = 2 * (IN_PAD * H1 + H1 * H2 + H2 * H3 + H3 * OUT_PAD)      # bf16 weights
    p_bytes = 4 * (H1 + 2 * H2 + 2 * H3 + OUT_PAD)                      # f32 (1,N) params
    # generous: f32 activations + bf16 matmul copies for every live slab
    act_bytes = batch * 6 * (IN_PAD + H1 + H2 + H3 + OUT_PAD)
    return min(w_bytes + p_bytes + act_bytes + (8 << 20), 128 << 20)


@jax.jit
def generator_forward(params, z, labels):
    B = z.shape[0]

    # --- plain-JAX glue: embedding gather, concat, pad, bf16 cast ----------
    c = jnp.take(params["emb"], labels, axis=0)                 # (B, 10)
    x = jnp.concatenate([z, c], axis=1)                         # (B, 110)
    x = jnp.pad(x, ((0, 0), (0, IN_PAD - IN_DIM))).astype(jnp.bfloat16)  # (B,128) bf16

    vmem = pl.BlockSpec(memory_space=pltpu.MemorySpace.VMEM)
    img = pl.pallas_call(
        _generator_kernel,
        out_shape=jax.ShapeDtypeStruct((B, OUT_DIM), jnp.float32),   # (B, 784), no post-slice
        in_specs=[vmem] * 11,
        out_specs=vmem,
        compiler_params=pltpu.CompilerParams(
            vmem_limit_bytes=_vmem_limit_bytes(B)),
    )(x,
      params["w1"], params["b1"],
      params["w2"], params["g2"], params["be2"],
      params["w3"], params["g3"], params["be3"],
      params["w4"], params["b4"])

    return img.reshape(B, 1, 28, 28)                            # NCHW, like PyTorch


def _reference_forward(params, z, labels):
    """Pure-JAX reference with the same mixed-precision policy (bf16 matmuls,
    f32 accumulation/BN).  Keeps the b2/b3 linear biases to verify they cancel
    against training-mode BatchNorm."""
    bf16, f32 = jnp.bfloat16, jnp.float32
    dot = lambda a, w: jnp.dot(a.astype(bf16), w, preferred_element_type=f32)

    c = jnp.take(params["emb"], labels, axis=0)
    x = jnp.pad(jnp.concatenate([z, c], axis=1), ((0, 0), (0, IN_PAD - IN_DIM)))

    h = _leaky_relu(dot(x, params["w1"]) + params["b1"])
    h = dot(h, params["w2"]) + params["b2"]
    h = (h - h.mean(0, keepdims=True)) * jax.lax.rsqrt(h.var(0, keepdims=True) + BN_EPS)
    h = _leaky_relu(h * params["g2"] + params["be2"])
    h = dot(h, params["w3"]) + params["b3"]
    h = (h - h.mean(0, keepdims=True)) * jax.lax.rsqrt(h.var(0, keepdims=True) + BN_EPS)
    h = _leaky_relu(h * params["g3"] + params["be3"])
    h = jnp.tanh(dot(h, params["w4"]) + params["b4"])[:, :OUT_DIM]
    return h.reshape(-1, 1, 28, 28)


if __name__ == "__main__":
    key = jax.random.PRNGKey(0)
    kp, kz, kl = jax.random.split(key, 3)

    params = init_params(kp)
    B = 8  # small demo batch; use >=128/256 per call for real throughput
    z = jax.random.normal(kz, (B, Z_DIM), jnp.float32)
    labels = jax.random.randint(kl, (B,), 0, 10, jnp.int32)

    img = generator_forward(params, z, labels)
    img = jax.block_until_ready(img)

    ref = _reference_forward(params, z, labels)
    assert img.shape == (B, 1, 28, 28)
    assert jnp.allclose(img, ref, atol=1e-2, rtol=1e-2), "mismatch vs reference"

    print("KERNEL_OK")
</pallas_src>

<mosaic_0001>
module attributes {stable_mosaic.version = 11 : i64} {
  func.func @_generator_kernel(%arg0: memref<8x128xbf16, #tpu.memory_space<vmem>>, %arg1: memref<128x256xbf16, #tpu.memory_space<vmem>>, %arg2: memref<1x256xf32, #tpu.memory_space<vmem>>, %arg3: memref<256x512xbf16, #tpu.memory_space<vmem>>, %arg4: memref<1x512xf32, #tpu.memory_space<vmem>>, %arg5: memref<1x512xf32, #tpu.memory_space<vmem>>, %arg6: memref<512x1024xbf16, #tpu.memory_space<vmem>>, %arg7: memref<1x1024xf32, #tpu.memory_space<vmem>>, %arg8: memref<1x1024xf32, #tpu.memory_space<vmem>>, %arg9: memref<1024x896xbf16, #tpu.memory_space<vmem>>, %arg10: memref<1x896xf32, #tpu.memory_space<vmem>>, %arg11: memref<8x784xf32, #tpu.memory_space<vmem>>) attributes {dimension_semantics = [], scalar_prefetch = 0 : i64, scratch_operands = 0 : i64, tpu.core_type = #tpu.core_type<tc>} {
    %c0 = arith.constant 0 : index
    %c0_0 = arith.constant 0 : index
    %0 = vector.load %arg0[%c0, %c0_0] : memref<8x128xbf16, #tpu.memory_space<vmem>>, vector<8x128xbf16>
    %c0_1 = arith.constant 0 : index
    %c0_2 = arith.constant 0 : index
    %1 = vector.load %arg1[%c0_1, %c0_2] : memref<128x256xbf16, #tpu.memory_space<vmem>>, vector<128x256xbf16>
    %cst = arith.constant dense<0.000000e+00> : vector<8x256xf32>
    %2 = tpu.matmul %0, %1, %cst {dimension_numbers = #tpu.dot_dimension_numbers<[1], [0], [0], [1], [0, 0, 1, 1], [], []>} : vector<8x128xbf16>, vector<128x256xbf16>, vector<8x256xf32> -> vector<8x256xf32>
    %c0_3 = arith.constant 0 : index
    %c0_4 = arith.constant 0 : index
    %3 = vector.load %arg2[%c0_3, %c0_4] : memref<1x256xf32, #tpu.memory_space<vmem>>, vector<1x256xf32>
    %4 = vector.broadcast %3 : vector<1x256xf32> to vector<8x256xf32>
    %5 = arith.addf %2, %4 : vector<8x256xf32>
    %cst_5 = arith.constant 0.000000e+00 : f32
    %6 = vector.broadcast %cst_5 : f32 to vector<8x256xf32>
    %7 = arith.cmpf oge, %5, %6 : vector<8x256xf32>
    %cst_6 = arith.constant 2.000000e-01 : f32
    %8 = vector.broadcast %cst_6 : f32 to vector<8x256xf32>
    %9 = arith.mulf %8, %5 : vector<8x256xf32>
    %10 = arith.select %7, %5, %9 : vector<8x256xi1>, vector<8x256xf32>
    %11 = arith.truncf %10 : vector<8x256xf32> to vector<8x256xbf16>
    %c0_7 = arith.constant 0 : index
    %c0_8 = arith.constant 0 : index
    %12 = vector.load %arg3[%c0_7, %c0_8] : memref<256x512xbf16, #tpu.memory_space<vmem>>, vector<256x512xbf16>
    %cst_9 = arith.constant dense<0.000000e+00> : vector<8x512xf32>
    %13 = tpu.matmul %11, %12, %cst_9 {dimension_numbers = #tpu.dot_dimension_numbers<[1], [0], [0], [1], [0, 0, 1, 1], [], []>} : vector<8x256xbf16>, vector<256x512xbf16>, vector<8x512xf32> -> vector<8x512xf32>
    %cst_10 = arith.constant dense<0.000000e+00> : vector<512xf32>
    %14 = vector.multi_reduction <add>, %13, %cst_10 [0] : vector<8x512xf32> to vector<512xf32>
    %15 = vector.shape_cast %14 : vector<512xf32> to vector<1x512xf32>
    %cst_11 = arith.constant 8.000000e+00 : f32
    %16 = vector.broadcast %cst_11 : f32 to vector<1x512xf32>
    %17 = arith.divf %15, %16 : vector<1x512xf32>
    %18 = arith.mulf %13, %13 : vector<8x512xf32>
    %cst_12 = arith.constant dense<0.000000e+00> : vector<512xf32>
    %19 = vector.multi_reduction <add>, %18, %cst_12 [0] : vector<8x512xf32> to vector<512xf32>
    %20 = vector.shape_cast %19 : vector<512xf32> to vector<1x512xf32>
    %cst_13 = arith.constant 8.000000e+00 : f32
    %21 = vector.broadcast %cst_13 : f32 to vector<1x512xf32>
    %22 = arith.divf %20, %21 : vector<1x512xf32>
    %23 = arith.mulf %17, %17 : vector<1x512xf32>
    %24 = arith.subf %22, %23 : vector<1x512xf32>
    %c0_14 = arith.constant 0 : index
    %c0_15 = arith.constant 0 : index
    %25 = vector.load %arg4[%c0_14, %c0_15] : memref<1x512xf32, #tpu.memory_space<vmem>>, vector<1x512xf32>
    %cst_16 = arith.constant 9.99999974E-6 : f32
    %26 = vector.broadcast %cst_16 : f32 to vector<1x512xf32>
    %27 = arith.addf %24, %26 : vector<1x512xf32>
    %28 = math.rsqrt %27 : vector<1x512xf32>
    %29 = arith.mulf %25, %28 : vector<1x512xf32>
    %30 = vector.broadcast %29 : vector<1x512xf32> to vector<8x512xf32>
    %31 = arith.mulf %13, %30 : vector<8x512xf32>
    %c0_17 = arith.constant 0 : index
    %c0_18 = arith.constant 0 : index
    %32 = vector.load %arg5[%c0_17, %c0_18] : memref<1x512xf32, #tpu.memory_space<vmem>>, vector<1x512xf32>
    %33 = arith.mulf %17, %29 : vector<1x512xf32>
    %34 = arith.subf %32, %33 : vector<1x512xf32>
    %35 = vector.broadcast %34 : vector<1x512xf32> to vector<8x512xf32>
    %36 = arith.addf %31, %35 : vector<8x512xf32>
    %cst_19 = arith.constant 0.000000e+00 : f32
    %37 = vector.broadcast %cst_19 : f32 to vector<8x512xf32>
    %38 = arith.cmpf oge, %36, %37 : vector<8x512xf32>
    %cst_20 = arith.constant 2.000000e-01 : f32
    %39 = vector.broadcast %cst_20 : f32 to vector<8x512xf32>
    %40 = arith.mulf %39, %36 : vector<8x512xf32>
    %41 = arith.select %38, %36, %40 : vector<8x512xi1>, vector<8x512xf32>
    %42 = arith.truncf %41 : vector<8x512xf32> to vector<8x512xbf16>
    %c0_21 = arith.constant 0 : index
    %c0_22 = arith.constant 0 : index
    %43 = vector.load %arg6[%c0_21, %c0_22] : memref<512x1024xbf16, #tpu.memory_space<vmem>>, vector<512x1024xbf16>
    %cst_23 = arith.constant dense<0.000000e+00> : vector<8x1024xf32>
    %44 = tpu.matmul %42, %43, %cst_23 {dimension_numbers = #tpu.dot_dimension_numbers<[1], [0], [0], [1], [0, 0, 1, 1], [], []>} : vector<8x512xbf16>, vector<512x1024xbf16>, vector<8x1024xf32> -> vector<8x1024xf32>
    %cst_24 = arith.constant dense<0.000000e+00> : vector<1024xf32>
    %45 = vector.multi_reduction <add>, %44, %cst_24 [0] : vector<8x1024xf32> to vector<1024xf32>
    %46 = vector.shape_cast %45 : vector<1024xf32> to vector<1x1024xf32>
    %cst_25 = arith.constant 8.000000e+00 : f32
    %47 = vector.broadcast %cst_25 : f32 to vector<1x1024xf32>
    %48 = arith.divf %46, %47 : vector<1x1024xf32>
    %49 = arith.mulf %44, %44 : vector<8x1024xf32>
    %cst_26 = arith.constant dense<0.000000e+00> : vector<1024xf32>
    %50 = vector.multi_reduction <add>, %49, %cst_26 [0] : vector<8x1024xf32> to vector<1024xf32>
    %51 = vector.shape_cast %50 : vector<1024xf32> to vector<1x1024xf32>
    %cst_27 = arith.constant 8.000000e+00 : f32
    %52 = vector.broadcast %cst_27 : f32 to vector<1x1024xf32>
    %53 = arith.divf %51, %52 : vector<1x1024xf32>
    %54 = arith.mulf %48, %48 : vector<1x1024xf32>
    %55 = arith.subf %53, %54 : vector<1x1024xf32>
    %c0_28 = arith.constant 0 : index
    %c0_29 = arith.constant 0 : index
    %56 = vector.load %arg7[%c0_28, %c0_29] : memref<1x1024xf32, #tpu.memory_space<vmem>>, vector<1x1024xf32>
    %cst_30 = arith.constant 9.99999974E-6 : f32
    %57 = vector.broadcast %cst_30 : f32 to vector<1x1024xf32>
    %58 = arith.addf %55, %57 : vector<1x1024xf32>
    %59 = math.rsqrt %58 : vector<1x1024xf32>
    %60 = arith.mulf %56, %59 : vector<1x1024xf32>
    %61 = vector.broadcast %60 : vector<1x1024xf32> to vector<8x1024xf32>
    %62 = arith.mulf %44, %61 : vector<8x1024xf32>
    %c0_31 = arith.constant 0 : index
    %c0_32 = arith.constant 0 : index
    %63 = vector.load %arg8[%c0_31, %c0_32] : memref<1x1024xf32, #tpu.memory_space<vmem>>, vector<1x1024xf32>
    %64 = arith.mulf %48, %60 : vector<1x1024xf32>
    %65 = arith.subf %63, %64 : vector<1x1024xf32>
    %66 = vector.broadcast %65 : vector<1x1024xf32> to vector<8x1024xf32>
    %67 = arith.addf %62, %66 : vector<8x1024xf32>
    %cst_33 = arith.constant 0.000000e+00 : f32
    %68 = vector.broadcast %cst_33 : f32 to vector<8x1024xf32>
    %69 = arith.cmpf oge, %67, %68 : vector<8x1024xf32>
    %cst_34 = arith.constant 2.000000e-01 : f32
    %70 = vector.broadcast %cst_34 : f32 to vector<8x1024xf32>
    %71 = arith.mulf %70, %67 : vector<8x1024xf32>
    %72 = arith.select %69, %67, %71 : vector<8x1024xi1>, vector<8x1024xf32>
    %73 = arith.truncf %72 : vector<8x1024xf32> to vector<8x1024xbf16>
    %c0_35 = arith.constant 0 : index
    %c0_36 = arith.constant 0 : index
    %74 = vector.load %arg9[%c0_35, %c0_36] : memref<1024x896xbf16, #tpu.memory_space<vmem>>, vector<1024x896xbf16>
    %cst_37 = arith.constant dense<0.000000e+00> : vector<8x896xf32>
    %75 = tpu.matmul %73, %74, %cst_37 {dimension_numbers = #tpu.dot_dimension_numbers<[1], [0], [0], [1], [0, 0, 1, 1], [], []>} : vector<8x1024xbf16>, vector<1024x896xbf16>, vector<8x896xf32> -> vector<8x896xf32>
    %c0_38 = arith.constant 0 : index
    %c0_39 = arith.constant 0 : index
    %76 = vector.load %arg10[%c0_38, %c0_39] : memref<1x896xf32, #tpu.memory_space<vmem>>, vector<1x896xf32>
    %77 = vector.broadcast %76 : vector<1x896xf32> to vector<8x896xf32>
    %78 = arith.addf %75, %77 : vector<8x896xf32>
    %79 = vector.extract_strided_slice %78 {offsets = [0, 0], sizes = [8, 784], strides = [1, 1]} : vector<8x896xf32> to vector<8x784xf32>
    %80 = math.tanh %79 : vector<8x784xf32>
    %c0_40 = arith.constant 0 : index
    %c0_41 = arith.constant 0 : index
    %81 = vector.load %arg11[%c0_40, %c0_41] : memref<8x784xf32, #tpu.memory_space<vmem>>, vector<8x784xf32>
    tpu.vector_store %arg11[%c0_40, %c0_41], %80 {strides = array<i32>} : memref<8x784xf32, #tpu.memory_space<vmem>>, vector<8x784xf32>,
    return
  }
}

</mosaic_0001>

<llo_original>
// kernel: generator_forward.1
$region0: #{generator_forward.1}
  #allocation0 [shape = 'u32[]', space=smem, size = 0x4, offset = 0x4, fixed_abs, tag = 'smem constant byte address 0x4 - core index']
  #allocation1 [shape = 'u32[144,128]{1,0:T(1,128)}', space=vmem, size = 0x12000, scoped, tag = 'internal scratch']
  %s0 = inlined_call_operand.vmem [shape: bf16[8,128], index: 0, kind: input, shape index: {}]
  %s1 = inlined_call_operand.hbm [shape: bf16[128,256], index: 1, kind: input, shape index: {}]
  %s2 = inlined_call_operand.hbm [shape: f32[1,256], index: 2, kind: input, shape index: {}]
  %s3 = inlined_call_operand.hbm [shape: bf16[256,512], index: 3, kind: input, shape index: {}]
  %s4 = inlined_call_operand.hbm [shape: f32[1,512], index: 4, kind: input, shape index: {}]
  %s5 = inlined_call_operand.hbm [shape: f32[1,512], index: 5, kind: input, shape index: {}]
  %s6 = inlined_call_operand.hbm [shape: bf16[512,1024], index: 6, kind: input, shape index: {}]
  %s7 = inlined_call_operand.hbm [shape: f32[1,1024], index: 7, kind: input, shape index: {}]
  %s8 = inlined_call_operand.hbm [shape: f32[1,1024], index: 8, kind: input, shape index: {}]
  %s9 = inlined_call_operand.hbm [shape: bf16[1024,896], index: 9, kind: input, shape index: {}]
  %s10 = inlined_call_operand.hbm [shape: f32[1,896], index: 10, kind: input, shape index: {}]
  %s11 = inlined_call_operand.vmem [shape: f32[8,784], index: 11, kind: output, shape index: {}]
  %s12 = sld [smem:[#allocation0]]
  $region94: #{generator_forward.1} parent=0
    _
  %s14 = ssub.s32 1, %s12
  %s15 = scalar_select 0, %s14, %s12
  $region1: #{generator_forward.1} parent=0
    #allocation2 [shape = 'u8[65536]{0}', space=vmem, size = 0x10000, scoped, tag = 'input window, operand 1, single buffered']
    #allocation3 [shape = 's32[1]{0}', space=sflag, size = 0x4, scoped, tag = 'scoped memory for generator_forward.1']
    #allocation4 [shape = 'u8[1024]{0}', space=vmem, size = 0x400, scoped, tag = 'input window, operand 2, single buffered']
    #allocation5 [shape = 's32[1]{0}', space=sflag, size = 0x4, scoped, tag = 'scoped memory for generator_forward.1']
    #allocation6 [shape = 'u8[262144]{0}', space=vmem, size = 0x40000, scoped, tag = 'input window, operand 3, single buffered']
    #allocation7 [shape = 'u8[2048]{0}', space=vmem, size = 0x800, scoped, tag = 'input window, operand 4, single buffered']
    #allocation8 [shape = 's32[1]{0}', space=sflag, size = 0x4, scoped, tag = 'scoped memory for generator_forward.1']
    #allocation9 [shape = 'u8[2048]{0}', space=vmem, size = 0x800, scoped, tag = 'input window, operand 5, single buffered']
    #allocation10 [shape = 'u8[1048576]{0}', space=vmem, size = 0x100000, scoped, tag = 'input window, operand 6, single buffered']
    #allocation11 [shape = 's32[1]{0}', space=sflag, size = 0x4, scoped, tag = 'scoped memory for generator_forward.1']
    #allocation12 [shape = 'u8[4096]{0}', space=vmem, size = 0x1000, scoped, tag = 'input window, operand 7, single buffered']
    #allocation13 [shape = 'u8[4096]{0}', space=vmem, size = 0x1000, scoped, tag = 'input window, operand 8, single buffered']
    #allocation14 [shape = 's32[1]{0}', space=sflag, size = 0x4, scoped, tag = 'scoped memory for generator_forward.1']
    #allocation15 [shape = 'u8[1835008]{0}', space=vmem, size = 0x1c0000, scoped, tag = 'input window, operand 9, single buffered']
    #allocation16 [shape = 'u8[3584]{0}', space=vmem, size = 0x1000, scoped, tag = 'input window, operand 10, single buffered']
    #allocation17 [shape = 's32[1]{0}', space=sflag, size = 0x4, scoped, tag = 'scoped memory for generator_forward.1']
    %16 = vsyncpa [#allocation3], 0
    %17 = vsyncpa [#allocation5], 0
    %18 = vsyncpa [#allocation8], 0
    %19 = vsyncpa [#allocation11], 0
    %20 = vsyncpa [#allocation14], 0
    %21 = vsyncpa [#allocation17], 0
    // Predicated region
    $region2: #{generator_forward.1} parent=1 // pred_check
      _
    $region3: #{generator_forward.1} parent=1 // pred_check_branch
      %23 = sbr.rel (0) target = $region5
    $region4: #{generator_forward.1} parent=1 // pred_region
      _
    $region5: #{generator_forward.1} parent=1 // pred_fallthru
      _
    // Predicated region
    $region6: #{generator_forward.1} parent=1 // pred_check
      _
    $region7: #{generator_forward.1} parent=1 // pred_check_branch
      %25 = sbr.rel (0) target = $region9
    $region8: #{generator_forward.1} parent=1 // pred_region
      %s27 = ssub.s32 2048, 2048
      %28 = vsyncadd [#allocation3], %s27
      %s29 = sshll.u32 [#allocation2], 4
      %s30 = int_to_ptr.vmem [resolvable:$true] %s29
      %35 = dma.hbm_to_vmem [thread:$0]  %s1, 2048, %s30, [#allocation3], 128, 128, 8
    $region9: #{generator_forward.1} parent=1 // pred_fallthru
      _
    // Predicated region
    $region10: #{generator_forward.1} parent=1 // pred_check
      _
    $region11: #{generator_forward.1} parent=1 // pred_check_branch
      %37 = sbr.rel (0) target = $region13
    $region12: #{generator_forward.1} parent=1 // pred_region
      %s39 = ssub.s32 32, 32
      %40 = vsyncadd [#allocation5], %s39
      %s42 = sshll.u32 [#allocation4], 4
      %s43 = int_to_ptr.vmem [resolvable:$true] %s42
      %45 = dma.hbm_to_vmem [thread:$0]  %s2, 32, %s43, [#allocation5]
    $region13: #{generator_forward.1} parent=1 // pred_fallthru
      _
    // Predicated region
    $region14: #{generator_forward.1} parent=1 // pred_check
      _
    $region15: #{generator_forward.1} parent=1 // pred_check_branch
      %47 = sbr.rel (0) target = $region17
    $region16: #{generator_forward.1} parent=1 // pred_region
      %s49 = ssub.s32 8192, 8192
      %50 = vsyncadd [#allocation5], %s49
      %s51 = sshll.u32 [#allocation6], 4
      %s52 = int_to_ptr.vmem [resolvable:$true] %s51
      %57 = dma.hbm_to_vmem [thread:$0]  %s3, 8192, %s52, [#allocation5], 256, 256, 16
    $region17: #{generator_forward.1} parent=1 // pred_fallthru
      _
    // Predicated region
    $region18: #{generator_forward.1} parent=1 // pred_check
      _
    $region19: #{generator_forward.1} parent=1 // pred_check_branch
      %59 = sbr.rel (0) target = $region21
    $region20: #{generator_forward.1} parent=1 // pred_region
      %s61 = ssub.s32 64, 64
      %62 = vsyncadd [#allocation8], %s61
      %s64 = sshll.u32 [#allocation7], 4
      %s65 = int_to_ptr.vmem [resolvable:$true] %s64
      %67 = dma.hbm_to_vmem [thread:$0]  %s4, 64, %s65, [#allocation8]
    $region21: #{generator_forward.1} parent=1 // pred_fallthru
      _
    // Predicated region
    $region22: #{generator_forward.1} parent=1 // pred_check
      _
    $region23: #{generator_forward.1} parent=1 // pred_check_branch
      %69 = sbr.rel (0) target = $region25
    $region24: #{generator_forward.1} parent=1 // pred_region
      %s71 = ssub.s32 64, 64
      %72 = vsyncadd [#allocation8], %s71
      %s74 = sshll.u32 [#allocation9], 4
      %s75 = int_to_ptr.vmem [resolvable:$true] %s74
      %77 = dma.hbm_to_vmem [thread:$0]  %s5, 64, %s75, [#allocation8]
    $region25: #{generator_forward.1} parent=1 // pred_fallthru
      _
    // Predicated region
    $region26: #{generator_forward.1} parent=1 // pred_check
      _
    $region27: #{generator_forward.1} parent=1 // pred_check_branch
      %79 = sbr.rel (0) target = $region29
    $region28: #{generator_forward.1} parent=1 // pred_region
      %s81 = ssub.s32 32768, 32768
      %82 = vsyncadd [#allocation11], %s81
      %s83 = sshll.u32 [#allocation10], 4
      %s84 = int_to_ptr.vmem [resolvable:$true] %s83
      %89 = dma.hbm_to_vmem [thread:$0]  %s6, 32768, %s84, [#allocation11], 512, 512, 32
    $region29: #{generator_forward.1} parent=1 // pred_fallthru
      _
    // Predicated region
    $region30: #{generator_forward.1} parent=1 // pred_check
      _
    $region31: #{generator_forward.1} parent=1 // pred_check_branch
      %91 = sbr.rel (0) target = $region33
    $region32: #{generator_forward.1} parent=1 // pred_region
      %s93 = ssub.s32 128, 128
      %94 = vsyncadd [#allocation11], %s93
      %s96 = sshll.u32 [#allocation12], 4
      %s97 = int_to_ptr.vmem [resolvable:$true] %s96
      %99 = dma.hbm_to_vmem [thread:$0]  %s7, 128, %s97, [#allocation11]
    $region33: #{generator_forward.1} parent=1 // pred_fallthru
      _
    // Predicated region
    $region34: #{generator_forward.1} parent=1 // pred_check
      _
    $region35: #{generator_forward.1} parent=1 // pred_check_branch
      %101 = sbr.rel (0) target = $region37
    $region36: #{generator_forward.1} parent=1 // pred_region
      %s103 = ssub.s32 128, 128
      %104 = vsyncadd [#allocation14], %s103
      %s106 = sshll.u32 [#allocation13], 4
      %s107 = int_to_ptr.vmem [resolvable:$true] %s106
      %109 = dma.hbm_to_vmem [thread:$0]  %s8, 128, %s107, [#allocation14]
    $region37: #{generator_forward.1} parent=1 // pred_fallthru
      _
    // Predicated region
    $region38: #{generator_forward.1} parent=1 // pred_check
      _
    $region39: #{generator_forward.1} parent=1 // pred_check_branch
      %111 = sbr.rel (0) target = $region41
    $region40: #{generator_forward.1} parent=1 // pred_region
      %s113 = ssub.s32 57344, 57344
      %114 = vsyncadd [#allocation14], %s113
      %s115 = sshll.u32 [#allocation15], 4
      %s116 = int_to_ptr.vmem [resolvable:$true] %s115
      %121 = dma.hbm_to_vmem [thread:$0]  %s9, 57344, %s116, [#allocation14], 448, 448, 28
    $region41: #{generator_forward.1} parent=1 // pred_fallthru
      _
    // Predicated region
    $region42: #{generator_forward.1} parent=1 // pred_check
      _
    $region43: #{generator_forward.1} parent=1 // pred_check_branch
      %123 = sbr.rel (0) target = $region45
    $region44: #{generator_forward.1} parent=1 // pred_region
      %s125 = ssub.s32 112, 112
      %126 = vsyncadd [#allocation17], %s125
      %s128 = sshll.u32 [#allocation16], 4
      %s129 = int_to_ptr.vmem [resolvable:$true] %s128
      %131 = dma.hbm_to_vmem [thread:$0]  %s10, 112, %s129, [#allocation17]
    $region45: #{generator_forward.1} parent=1 // pred_fallthru
      _
    // Predicated region
    $region46: #{generator_forward.1} parent=1 // pred_check
      _
    $region47: #{generator_forward.1} parent=1 // pred_check_branch
      %133 = sbr.rel (0) target = $region49
    $region48: #{generator_forward.1} parent=1 // pred_region
      %134 = dma.done [#allocation3], 2048
    $region49: #{generator_forward.1} parent=1 // pred_fallthru
      _
    // Predicated region
    $region50: #{generator_forward.1} parent=1 // pred_check
      _
    $region51: #{generator_forward.1} parent=1 // pred_check_branch
      %136 = sbr.rel (0) target = $region53
    $region52: #{generator_forward.1} parent=1 // pred_region
      %137 = dma.done [#allocation5], 32
    $region53: #{generator_forward.1} parent=1 // pred_fallthru
      _
    // Predicated region
    $region54: #{generator_forward.1} parent=1 // pred_check
      _
    $region55: #{generator_forward.1} parent=1 // pred_check_branch
      %139 = sbr.rel (0) target = $region57
    $region56: #{generator_forward.1} parent=1 // pred_region
      %140 = dma.done [#allocation5], 8192
    $region57: #{generator_forward.1} parent=1 // pred_fallthru
      _
    // Predicated region
    $region58: #{generator_forward.1} parent=1 // pred_check
      _
    $region59: #{generator_forward.1} parent=1 // pred_check_branch
      %142 = sbr.rel (0) target = $region61
    $region60: #{generator_forward.1} parent=1 // pred_region
      %143 = dma.done [#allocation8], 64
    $region61: #{generator_forward.1} parent=1 // pred_fallthru
      _
    // Predicated region
    $region62: #{generator_forward.1} parent=1 // pred_check
      _
    $region63: #{generator_forward.1} parent=1 // pred_check_branch
      %145 = sbr.rel (0) target = $region65
    $region64: #{generator_forward.1} parent=1 // pred_region
      %146 = dma.done [#allocation8], 64
    $region65: #{generator_forward.1} parent=1 // pred_fallthru
      _
    // Predicated region
    $region66: #{generator_forward.1} parent=1 // pred_check
      _
    $region67: #{generator_forward.1} parent=1 // pred_check_branch
      %148 = sbr.rel (0) target = $region69
    $region68: #{generator_forward.1} parent=1 // pred_region
      %149 = dma.done [#allocation11], 32768
    $region69: #{generator_forward.1} parent=1 // pred_fallthru
      _
    // Predicated region
    $region70: #{generator_forward.1} parent=1 // pred_check
      _
    $region71: #{generator_forward.1} parent=1 // pred_check_branch
      %151 = sbr.rel (0) target = $region73
    $region72: #{generator_forward.1} parent=1 // pred_region
      %152 = dma.done [#allocation11], 128
    $region73: #{generator_forward.1} parent=1 // pred_fallthru
      _
    // Predicated region
    $region74: #{generator_forward.1} parent=1 // pred_check
      _
    $region75: #{generator_forward.1} parent=1 // pred_check_branch
      %154 = sbr.rel (0) target = $region77
    $region76: #{generator_forward.1} parent=1 // pred_region
      %155 = dma.done [#allocation14], 128
    $region77: #{generator_forward.1} parent=1 // pred_fallthru
      _
    // Predicated region
    $region78: #{generator_forward.1} parent=1 // pred_check
      _
    $region79: #{generator_forward.1} parent=1 // pred_check_branch
      %157 = sbr.rel (0) target = $region81
    $region80: #{generator_forward.1} parent=1 // pred_region
      %158 = dma.done [#allocation14], 57344
    $region81: #{generator_forward.1} parent=1 // pred_fallthru
      _
    // Predicated region
    $region82: #{generator_forward.1} parent=1 // pred_check
      _
    $region83: #{generator_forward.1} parent=1 // pred_check_branch
      %160 = sbr.rel (0) target = $region85
    $region84: #{generator_forward.1} parent=1 // pred_region
      %161 = dma.done [#allocation17], 112
    $region85: #{generator_forward.1} parent=1 // pred_fallthru
      _
    %v163 = vld [vmem:[%s0] sm:$0xf]
    %v164 = vld [vmem:[#allocation2] sm:$0xff]
    %v165 = vld [vmem:[#allocation2 + $0x8] sm:$0xff]
    %v166 = vld [vmem:[#allocation2 + $0x10] sm:$0xff]
    %v167 = vld [vmem:[#allocation2 + $0x18] sm:$0xff]
    %v168 = vld [vmem:[#allocation2 + $0x20] sm:$0xff]
    %v169 = vld [vmem:[#allocation2 + $0x28] sm:$0xff]
    %v170 = vld [vmem:[#allocation2 + $0x30] sm:$0xff]
    %v171 = vld [vmem:[#allocation2 + $0x38] sm:$0xff]
    %v172 = vld [vmem:[#allocation2 + $0x40] sm:$0xff]
    %v173 = vld [vmem:[#allocation2 + $0x48] sm:$0xff]
    %v174 = vld [vmem:[#allocation2 + $0x50] sm:$0xff]
    %v175 = vld [vmem:[#allocation2 + $0x58] sm:$0xff]
    %v176 = vld [vmem:[#allocation2 + $0x60] sm:$0xff]
    %v177 = vld [vmem:[#allocation2 + $0x68] sm:$0xff]
    %v178 = vld [vmem:[#allocation2 + $0x70] sm:$0xff]
    %v179 = vld [vmem:[#allocation2 + $0x78] sm:$0xff]
    %v180 = vld [vmem:[#allocation4] sm:$0x3]
    %v182 = vlaneseq
    %v183 = vshrl.u32 %v182, 7
    %v184 = vsub.s32 0, %v183
    %v185 = vrot.slane %v180, %v184
    %v186 = vlaneseq
    %v187 = vshrl.u32 %v186, 7
    %v188 = vsub.s32 1, %v187
    %v189 = vrot.slane %v180, %v188
    %v208 = vunpack.c.l.b16 %v164
    %v209 = vunpack.c.h.b16 %v164
    %v210 = vunpack.c.l.b16 %v165
    %v211 = vunpack.c.h.b16 %v165
    %v212 = vunpack.c.l.b16 %v166
    %v213 = vunpack.c.h.b16 %v166
    %v214 = vunpack.c.l.b16 %v167
    %v215 = vunpack.c.h.b16 %v167
    %v216 = vunpack.c.l.b16 %v168
    %v217 = vunpack.c.h.b16 %v168
    %v218 = vunpack.c.l.b16 %v169
    %v219 = vunpack.c.h.b16 %v169
    %v220 = vunpack.c.l.b16 %v170
    %v221 = vunpack.c.h.b16 %v170
    %v222 = vunpack.c.l.b16 %v171
    %v223 = vunpack.c.h.b16 %v171
    %v224 = vunpack.c.l.b16 %v172
    %v225 = vunpack.c.h.b16 %v172
    %v226 = vunpack.c.l.b16 %v173
    %v227 = vunpack.c.h.b16 %v173
    %v228 = vunpack.c.l.b16 %v174
    %v229 = vunpack.c.h.b16 %v174
    %v230 = vunpack.c.l.b16 %v175
    %v231 = vunpack.c.h.b16 %v175
    %v232 = vunpack.c.l.b16 %v176
    %v233 = vunpack.c.h.b16 %v176
    %v234 = vunpack.c.l.b16 %v177
    %v235 = vunpack.c.h.b16 %v177
    %v236 = vunpack.c.l.b16 %v178
    %v237 = vunpack.c.h.b16 %v178
    %v238 = vunpack.c.l.b16 %v179
    %v239 = vunpack.c.h.b16 %v179
    %v240 = vpack.c.b16 %v210, %v208
    %v241 = vpack.c.b16 %v211, %v209
    %v242 = vpack.c.b16 %v214, %v212
    %v243 = vpack.c.b16 %v215, %v213
    %v244 = vpack.c.b16 %v218, %v216
    %v245 = vpack.c.b16 %v219, %v217
    %v246 = vpack.c.b16 %v222, %v220
    %v247 = vpack.c.b16 %v223, %v221
    %v248 = vpack.c.b16 %v226, %v224
    %v249 = vpack.c.b16 %v227, %v225
    %v250 = vpack.c.b16 %v230, %v228
    %v251 = vpack.c.b16 %v231, %v229
    %v252 = vpack.c.b16 %v234, %v232
    %v253 = vpack.c.b16 %v235, %v233
    %v254 = vpack.c.b16 %v238, %v236
    %v255 = vpack.c.b16 %v239, %v237
    %272 = vmatprep.subr.bf16.mxu0 %v241
    %273 = vmatpush1.bf16.msra.mxu0 %v240
    %274 = vmatprep.subr.bf16.mxu0 %v243
    %275 = vmatpush1.bf16.msra.mxu0 %v242
    %276 = vmatprep.subr.bf16.mxu0 %v245
    %277 = vmatpush1.bf16.msra.mxu0 %v244
    %278 = vmatprep.subr.bf16.mxu0 %v247
    %279 = vmatpush1.bf16.msra.mxu0 %v246
    %280 = vmatprep.subr.bf16.mxu0 %v249
    %281 = vmatpush1.bf16.msra.mxu0 %v248
    %282 = vmatprep.subr.bf16.mxu0 %v251
    %283 = vmatpush1.bf16.msra.mxu0 %v250
    %284 = vmatprep.subr.bf16.mxu0 %v253
    %285 = vmatpush1.bf16.msra.mxu0 %v252
    %286 = vmatprep.subr.bf16.mxu0 %v255
    %287 = vmatpush1.bf16.msra.mxu0 %v254
    %288 = vmatprep.subr.bf16.mxu0 0
    %289 = vmatpush1.bf16.msra.mxu0 0
    %290 = vmatprep.subr.bf16.mxu0 0
    %291 = vmatpush1.bf16.msra.mxu0 0
    %292 = vmatprep.subr.bf16.mxu0 0
    %293 = vmatpush1.bf16.msra.mxu0 0
    %294 = vmatprep.subr.bf16.mxu0 0
    %295 = vmatpush1.bf16.msra.mxu0 0
    %296 = vmatprep.subr.bf16.mxu0 0
    %297 = vmatpush1.bf16.msra.mxu0 0
    %298 = vmatprep.subr.bf16.mxu0 0
    %299 = vmatpush1.bf16.msra.mxu0 0
    %300 = vmatprep.subr.bf16.mxu0 0
    %301 = vmatpush1.bf16.msra.mxu0 0
    %302 = vmatprep.subr.bf16.mxu0 0
    %303 = vmatpush1.bf16.msra.mxu0 0
    %304 = vmatprep.mubr.bf16.mxu0 0
    %305 = vmatmul.mubr.bf16.gmra.mrb[0].mxu0 %v163
    %v306 = vpop.f32.mrb[0].mxu0
    %v307 = vadd.f32 %v185, %v306
    %v308 = vpop.f32.mrb[0].mxu0
    %v309 = vadd.f32 %v189, %v308
    %v310 = vpop.f32.mrb[0].mxu0
    %v311 = vpop.f32.mrb[0].mxu0
    %312 = vdwg.mxu0
    %vm313 = vcmp.ge.f32.partialorder %v307, 0.0
    %vm314 = vcmp.ge.f32.partialorder %v309, 0.0
    %v315 = vmul.f32 %v307, 0.2
    %v316 = vmul.f32 %v309, 0.2
    %v317 = vsel %vm313, %v307, %v315
    %v318 = vsel %vm314, %v309, %v316
    %v319 = vpack.c.bf16 %v317, %v317
    %v320 = vpack.c.bf16 %v318, %v318
    %v321 = vld [vmem:[#allocation6] sm:$0xff]
    %v322 = vld [vmem:[#allocation6 + $0x8] sm:$0xff]
    %v323 = vld [vmem:[#allocation6 + $0x10] sm:$0xff]
    %v324 = vld [vmem:[#allocation6 + $0x18] sm:$0xff]
    %v325 = vld [vmem:[#allocation6 + $0x20] sm:$0xff]
    %v326 = vld [vmem:[#allocation6 + $0x28] sm:$0xff]
    %v327 = vld [vmem:[#allocation6 + $0x30] sm:$0xff]
    %v328 = vld [vmem:[#allocation6 + $0x38] sm:$0xff]
    %v329 = vld [vmem:[#allocation6 + $0x40] sm:$0xff]
    %v330 = vld [vmem:[#allocation6 + $0x48] sm:$0xff]
    %v331 = vld [vmem:[#allocation6 + $0x50] sm:$0xff]
    %v332 = vld [vmem:[#allocation6 + $0x58] sm:$0xff]
    %v333 = vld [vmem:[#allocation6 + $0x60] sm:$0xff]
    %v334 = vld [vmem:[#allocation6 + $0x68] sm:$0xff]
    %v335 = vld [vmem:[#allocation6 + $0x70] sm:$0xff]
    %v336 = vld [vmem:[#allocation6 + $0x78] sm:$0xff]
    %v337 = vld [vmem:[#allocation6 + $0x80] sm:$0xff]
    %v338 = vld [vmem:[#allocation6 + $0x88] sm:$0xff]
    %v339 = vld [vmem:[#allocation6 + $0x90] sm:$0xff]
    %v340 = vld [vmem:[#allocation6 + $0x98] sm:$0xff]
    %v341 = vld [vmem:[#allocation6 + $0xa0] sm:$0xff]
    %v342 = vld [vmem:[#allocation6 + $0xa8] sm:$0xff]
    %v343 = vld [vmem:[#allocation6 + $0xb0] sm:$0xff]
    %v344 = vld [vmem:[#allocation6 + $0xb8] sm:$0xff]
    %v345 = vld [vmem:[#allocation6 + $0xc0] sm:$0xff]
    %v346 = vld [vmem:[#allocation6 + $0xc8] sm:$0xff]
    %v347 = vld [vmem:[#allocation6 + $0xd0] sm:$0xff]
    %v348 = vld [vmem:[#allocation6 + $0xd8] sm:$0xff]
    %v349 = vld [vmem:[#allocation6 + $0xe0] sm:$0xff]
    %v350 = vld [vmem:[#allocation6 + $0xe8] sm:$0xff]
    %v351 = vld [vmem:[#allocation6 + $0xf0] sm:$0xff]
    %v352 = vld [vmem:[#allocation6 + $0xf8] sm:$0xff]
    %v353 = vld [vmem:[#allocation6 + $0x100] sm:$0xff]
    %v354 = vld [vmem:[#allocation6 + $0x108] sm:$0xff]
    %v355 = vld [vmem:[#allocation6 + $0x110] sm:$0xff]
    %v356 = vld [vmem:[#allocation6 + $0x118] sm:$0xff]
    %v357 = vld [vmem:[#allocation6 + $0x120] sm:$0xff]
    %v358 = vld [vmem:[#allocation6 + $0x128] sm:$0xff]
    %v359 = vld [vmem:[#allocation6 + $0x130] sm:$0xff]
    %v360 = vld [vmem:[#allocation6 + $0x138] sm:$0xff]
    %v361 = vld [vmem:[#allocation6 + $0x140] sm:$0xff]
    %v362 = vld [vmem:[#allocation6 + $0x148] sm:$0xff]
    %v363 = vld [vmem:[#allocation6 + $0x150] sm:$0xff]
    %v364 = vld [vmem:[#allocation6 + $0x158] sm:$0xff]
    %v365 = vld [vmem:[#allocation6 + $0x160] sm:$0xff]
    %v366 = vld [vmem:[#allocation6 + $0x168] sm:$0xff]
    %v367 = vld [vmem:[#allocation6 + $0x170] sm:$0xff]
    %v368 = vld [vmem:[#allocation6 + $0x178] sm:$0xff]
    %v369 = vld [vmem:[#allocation6 + $0x180] sm:$0xff]
    %v370 = vld [vmem:[#allocation6 + $0x188] sm:$0xff]
    %v371 = vld [vmem:[#allocation6 + $0x190] sm:$0xff]
    %v372 = vld [vmem:[#allocation6 + $0x198] sm:$0xff]
    %v373 = vld [vmem:[#allocation6 + $0x1a0] sm:$0xff]
    %v374 = vld [vmem:[#allocation6 + $0x1a8] sm:$0xff]
    %v375 = vld [vmem:[#allocation6 + $0x1b0] sm:$0xff]
    %v376 = vld [vmem:[#allocation6 + $0x1b8] sm:$0xff]
    %v377 = vld [vmem:[#allocation6 + $0x1c0] sm:$0xff]
    %v378 = vld [vmem:[#allocation6 + $0x1c8] sm:$0xff]
    %v379 = vld [vmem:[#allocation6 + $0x1d0] sm:$0xff]
    %v380 = vld [vmem:[#allocation6 + $0x1d8] sm:$0xff]
    %v381 = vld [vmem:[#allocation6 + $0x1e0] sm:$0xff]
    %v382 = vld [vmem:[#allocation6 + $0x1e8] sm:$0xff]
    %v383 = vld [vmem:[#allocation6 + $0x1f0] sm:$0xff]
    %v384 = vld [vmem:[#allocation6 + $0x1f8] sm:$0xff]
    %v449 = vunpack.c.l.b16 %v321
    %v450 = vunpack.c.h.b16 %v321
    %v451 = vunpack.c.l.b16 %v322
    %v452 = vunpack.c.h.b16 %v322
    %v453 = vunpack.c.l.b16 %v323
    %v454 = vunpack.c.h.b16 %v323
    %v455 = vunpack.c.l.b16 %v324
    %v456 = vunpack.c.h.b16 %v324
    %v457 = vunpack.c.l.b16 %v325
    %v458 = vunpack.c.h.b16 %v325
    %v459 = vunpack.c.l.b16 %v326
    %v460 = vunpack.c.h.b16 %v326
    %v461 = vunpack.c.l.b16 %v327
    %v462 = vunpack.c.h.b16 %v327
    %v463 = vunpack.c.l.b16 %v328
    %v464 = vunpack.c.h.b16 %v328
    %v465 = vunpack.c.l.b16 %v329
    %v466 = vunpack.c.h.b16 %v329
    %v467 = vunpack.c.l.b16 %v330
    %v468 = vunpack.c.h.b16 %v330
    %v469 = vunpack.c.l.b16 %v331
    %v470 = vunpack.c.h.b16 %v331
    %v471 = vunpack.c.l.b16 %v332
    %v472 = vunpack.c.h.b16 %v332
    %v473 = vunpack.c.l.b16 %v333
    %v474 = vunpack.c.h.b16 %v333
    %v475 = vunpack.c.l.b16 %v334
    %v476 = vunpack.c.h.b16 %v334
    %v477 = vunpack.c.l.b16 %v335
    %v478 = vunpack.c.h.b16 %v335
    %v479 = vunpack.c.l.b16 %v336
    %v480 = vunpack.c.h.b16 %v336
    %v481 = vunpack.c.l.b16 %v337
    %v482 = vunpack.c.h.b16 %v337
    %v483 = vunpack.c.l.b16 %v338
    %v484 = vunpack.c.h.b16 %v338
    %v485 = vunpack.c.l.b16 %v339
    %v486 = vunpack.c.h.b16 %v339
    %v487 = vunpack.c.l.b16 %v340
    %v488 = vunpack.c.h.b16 %v340
    %v489 = vunpack.c.l.b16 %v341
    %v490 = vunpack.c.h.b16 %v341
    %v491 = vunpack.c.l.b16 %v342
    %v492 = vunpack.c.h.b16 %v342
    %v493 = vunpack.c.l.b16 %v343
    %v494 = vunpack.c.h.b16 %v343
    %v495 = vunpack.c.l.b16 %v344
    %v496 = vunpack.c.h.b16 %v344
    %v497 = vunpack.c.l.b16 %v345
    %v498 = vunpack.c.h.b16 %v345
    %v499 = vunpack.c.l.b16 %v346
    %v500 = vunpack.c.h.b16 %v346
    %v501 = vunpack.c.l.b16 %v347
    %v502 = vunpack.c.h.b16 %v347
    %v503 = vunpack.c.l.b16 %v348
    %v504 = vunpack.c.h.b16 %v348
    %v505 = vunpack.c.l.b16 %v349
    %v506 = vunpack.c.h.b16 %v349
    %v507 = vunpack.c.l.b16 %v350
    %v508 = vunpack.c.h.b16 %v350
    %v509 = vunpack.c.l.b16 %v351
    %v510 = vunpack.c.h.b16 %v351
    %v511 = vunpack.c.l.b16 %v352
    %v512 = vunpack.c.h.b16 %v352
    %v513 = vunpack.c.l.b16 %v353
    %v514 = vunpack.c.h.b16 %v353
    %v515 = vunpack.c.l.b16 %v354
    %v516 = vunpack.c.h.b16 %v354
    %v517 = vunpack.c.l.b16 %v355
    %v518 = vunpack.c.h.b16 %v355
    %v519 = vunpack.c.l.b16 %v356
    %v520 = vunpack.c.h.b16 %v356
    %v521 = vunpack.c.l.b16 %v357
    %v522 = vunpack.c.h.b16 %v357
    %v523 = vunpack.c.l.b16 %v358
    %v524 = vunpack.c.h.b16 %v358
    %v525 = vunpack.c.l.b16 %v359
    %v526 = vunpack.c.h.b16 %v359
    %v527 = vunpack.c.l.b16 %v360
    %v528 = vunpack.c.h.b16 %v360
    %v529 = vunpack.c.l.b16 %v361
    %v530 = vunpack.c.h.b16 %v361
    %v531 = vunpack.c.l.b16 %v362
    %v532 = vunpack.c.h.b16 %v362
    %v533 = vunpack.c.l.b16 %v363
    %v534 = vunpack.c.h.b16 %v363
    %v535 = vunpack.c.l.b16 %v364
    %v536 = vunpack.c.h.b16 %v364
    %v537 = vunpack.c.l.b16 %v365
    %v538 = vunpack.c.h.b16 %v365
    %v539 = vunpack.c.l.b16 %v366
    %v540 = vunpack.c.h.b16 %v366
    %v541 = vunpack.c.l.b16 %v367
    %v542 = vunpack.c.h.b16 %v367
    %v543 = vunpack.c.l.b16 %v368
    %v544 = vunpack.c.h.b16 %v368
    %v545 = vunpack.c.l.b16 %v369
    %v546 = vunpack.c.h.b16 %v369
    %v547 = vunpack.c.l.b16 %v370
    %v548 = vunpack.c.h.b16 %v370
    %v549 = vunpack.c.l.b16 %v371
    %v550 = vunpack.c.h.b16 %v371
    %v551 = vunpack.c.l.b16 %v372
    %v552 = vunpack.c.h.b16 %v372
    %v553 = vunpack.c.l.b16 %v373
    %v554 = vunpack.c.h.b16 %v373
    %v555 = vunpack.c.l.b16 %v374
    %v556 = vunpack.c.h.b16 %v374
    %v557 = vunpack.c.l.b16 %v375
    %v558 = vunpack.c.h.b16 %v375
    %v559 = vunpack.c.l.b16 %v376
    %v560 = vunpack.c.h.b16 %v376
    %v561 = vunpack.c.l.b16 %v377
    %v562 = vunpack.c.h.b16 %v377
    %v563 = vunpack.c.l.b16 %v378
    %v564 = vunpack.c.h.b16 %v378
    %v565 = vunpack.c.l.b16 %v379
    %v566 = vunpack.c.h.b16 %v379
    %v567 = vunpack.c.l.b16 %v380
    %v568 = vunpack.c.h.b16 %v380
    %v569 = vunpack.c.l.b16 %v381
    %v570 = vunpack.c.h.b16 %v381
    %v571 = vunpack.c.l.b16 %v382
    %v572 = vunpack.c.h.b16 %v382
    %v573 = vunpack.c.l.b16 %v383
    %v574 = vunpack.c.h.b16 %v383
    %v575 = vunpack.c.l.b16 %v384
    %v576 = vunpack.c.h.b16 %v384
    %v577 = vpack.c.b16 %v453, %v449
    %v578 = vpack.c.b16 %v454, %v450
    %v579 = vpack.c.b16 %v455, %v451
    %v580 = vpack.c.b16 %v456, %v452
    %v581 = vpack.c.b16 %v461, %v457
    %v582 = vpack.c.b16 %v462, %v458
    %v583 = vpack.c.b16 %v463, %v459
    %v584 = vpack.c.b16 %v464, %v460
    %v585 = vpack.c.b16 %v469, %v465
    %v586 = vpack.c.b16 %v470, %v466
    %v587 = vpack.c.b16 %v471, %v467
    %v588 = vpack.c.b16 %v472, %v468
    %v589 = vpack.c.b16 %v477, %v473
    %v590 = vpack.c.b16 %v478, %v474
    %v591 = vpack.c.b16 %v479, %v475
    %v592 = vpack.c.b16 %v480, %v476
    %v593 = vpack.c.b16 %v485, %v481
    %v594 = vpack.c.b16 %v486, %v482
    %v595 = vpack.c.b16 %v487, %v483
    %v596 = vpack.c.b16 %v488, %v484
    %v597 = vpack.c.b16 %v493, %v489
    %v598 = vpack.c.b16 %v494, %v490
    %v599 = vpack.c.b16 %v495, %v491
    %v600 = vpack.c.b16 %v496, %v492
    %v601 = vpack.c.b16 %v501, %v497
    %v602 = vpack.c.b16 %v502, %v498
    %v603 = vpack.c.b16 %v503, %v499
    %v604 = vpack.c.b16 %v504, %v500
    %v605 = vpack.c.b16 %v509, %v505
    %v606 = vpack.c.b16 %v510, %v506
    %v607 = vpack.c.b16 %v511, %v507
    %v608 = vpack.c.b16 %v512, %v508
    %v609 = vpack.c.b16 %v517, %v513
    %v610 = vpack.c.b16 %v518, %v514
    %v611 = vpack.c.b16 %v519, %v515
    %v612 = vpack.c.b16 %v520, %v516
    %v613 = vpack.c.b16 %v525, %v521
    %v614 = vpack.c.b16 %v526, %v522
    %v615 = vpack.c.b16 %v527, %v523
    %v616 = vpack.c.b16 %v528, %v524
    %v617 = vpack.c.b16 %v533, %v529
    %v618 = vpack.c.b16 %v534, %v530
    %v619 = vpack.c.b16 %v535, %v531
    %v620 = vpack.c.b16 %v536, %v532
    %v621 = vpack.c.b16 %v541, %v537
    %v622 = vpack.c.b16 %v542, %v538
    %v623 = vpack.c.b16 %v543, %v539
    %v624 = vpack.c.b16 %v544, %v540
    %v625 = vpack.c.b16 %v549, %v545
    %v626 = vpack.c.b16 %v550, %v546
    %v627 = vpack.c.b16 %v551, %v547
    %v628 = vpack.c.b16 %v552, %v548
    %v629 = vpack.c.b16 %v557, %v553
    %v630 = vpack.c.b16 %v558, %v554
    %v631 = vpack.c.b16 %v559, %v555
    %v632 = vpack.c.b16 %v560, %v556
    %v633 = vpack.c.b16 %v565, %v561
    %v634 = vpack.c.b16 %v566, %v562
    %v635 = vpack.c.b16 %v567, %v563
    %v636 = vpack.c.b16 %v568, %v564
    %v637 = vpack.c.b16 %v573, %v569
    %v638 = vpack.c.b16 %v574, %v570
    %v639 = vpack.c.b16 %v575, %v571
    %v640 = vpack.c.b16 %v576, %v572
    %705 = vmatprep.subr.bf16.mxu0 %v578
    %706 = vmatpush1.bf16.msra.mxu0 %v577
    %707 = vmatprep.subr.bf16.mxu0 %v582
    %708 = vmatpush1.bf16.msra.mxu0 %v581
    %709 = vmatprep.subr.bf16.mxu0 %v586
    %710 = vmatpush1.bf16.msra.mxu0 %v585
    %711 = vmatprep.subr.bf16.mxu0 %v590
    %712 = vmatpush1.bf16.msra.mxu0 %v589
    %713 = vmatprep.subr.bf16.mxu0 %v594
    %714 = vmatpush1.bf16.msra.mxu0 %v593
    %715 = vmatprep.subr.bf16.mxu0 %v598
    %716 = vmatpush1.bf16.msra.mxu0 %v597
    %717 = vmatprep.subr.bf16.mxu0 %v602
    %718 = vmatpush1.bf16.msra.mxu0 %v601
    %719 = vmatprep.subr.bf16.mxu0 %v606
    %720 = vmatpush1.bf16.msra.mxu0 %v605
    %721 = vmatprep.subr.bf16.mxu0 %v610
    %722 = vmatpush1.bf16.msra.mxu0 %v609
    %723 = vmatprep.subr.bf16.mxu0 %v614
    %724 = vmatpush1.bf16.msra.mxu0 %v613
    %725 = vmatprep.subr.bf16.mxu0 %v618
    %726 = vmatpush1.bf16.msra.mxu0 %v617
    %727 = vmatprep.subr.bf16.mxu0 %v622
    %728 = vmatpush1.bf16.msra.mxu0 %v621
    %729 = vmatprep.subr.bf16.mxu0 %v626
    %730 = vmatpush1.bf16.msra.mxu0 %v625
    %731 = vmatprep.subr.bf16.mxu0 %v630
    %732 = vmatpush1.bf16.msra.mxu0 %v629
    %733 = vmatprep.subr.bf16.mxu0 %v634
    %734 = vmatpush1.bf16.msra.mxu0 %v633
    %735 = vmatprep.subr.bf16.mxu0 %v638
    %736 = vmatpush1.bf16.msra.mxu0 %v637
    %737 = vmatprep.mubr.bf16.mxu0 %v320
    %738 = vmatmul.mubr.bf16.gmra.mrb[0].mxu0 %v319
    %v739 = vpop.f32.mrb[0].mxu0
    %v740 = vadd.f32 0.0, %v739
    %v741 = vpop.f32.mrb[0].mxu0
    %v742 = vadd.f32 0.0, %v741
    %v743 = vpop.f32.mrb[0].mxu0
    %v744 = vpop.f32.mrb[0].mxu0
    %745 = vdwg.mxu0
    %746 = vmatprep.subr.bf16.mxu0 %v580
    %747 = vmatpush1.bf16.msra.mxu0 %v579
    %748 = vmatprep.subr.bf16.mxu0 %v584
    %749 = vmatpush1.bf16.msra.mxu0 %v583
    %750 = vmatprep.subr.bf16.mxu0 %v588
    %751 = vmatpush1.bf16.msra.mxu0 %v587
    %752 = vmatprep.subr.bf16.mxu0 %v592
    %753 = vmatpush1.bf16.msra.mxu0 %v591
    %754 = vmatprep.subr.bf16.mxu0 %v596
    %755 = vmatpush1.bf16.msra.mxu0 %v595
    %756 = vmatprep.subr.bf16.mxu0 %v600
    %757 = vmatpush1.bf16.msra.mxu0 %v599
    %758 = vmatprep.subr.bf16.mxu0 %v604
    %759 = vmatpush1.bf16.msra.mxu0 %v603
    %760 = vmatprep.subr.bf16.mxu0 %v608
    %761 = vmatpush1.bf16.msra.mxu0 %v607
    %762 = vmatprep.subr.bf16.mxu0 %v612
    %763 = vmatpush1.bf16.msra.mxu0 %v611
    %764 = vmatprep.subr.bf16.mxu0 %v616
    %765 = vmatpush1.bf16.msra.mxu0 %v615
    %766 = vmatprep.subr.bf16.mxu0 %v620
    %767 = vmatpush1.bf16.msra.mxu0 %v619
    %768 = vmatprep.subr.bf16.mxu0 %v624
    %769 = vmatpush1.bf16.msra.mxu0 %v623
    %770 = vmatprep.subr.bf16.mxu0 %v628
    %771 = vmatpush1.bf16.msra.mxu0 %v627
    %772 = vmatprep.subr.bf16.mxu0 %v632
    %773 = vmatpush1.bf16.msra.mxu0 %v631
    %774 = vmatprep.subr.bf16.mxu0 %v636
    %775 = vmatpush1.bf16.msra.mxu0 %v635
    %776 = vmatprep.subr.bf16.mxu0 %v640
    %777 = vmatpush1.bf16.msra.mxu0 %v639
    %778 = vmatprep.mubr.bf16.mxu0 %v320
    %779 = vmatmul.mubr.bf16.gmra.mrb[0].mxu0 %v319
    %v780 = vpop.f32.mrb[0].mxu0
    %v781 = vadd.f32 0.0, %v780
    %v782 = vpop.f32.mrb[0].mxu0
    %v783 = vadd.f32 0.0, %v782
    %v784 = vpop.f32.mrb[0].mxu0
    %v785 = vpop.f32.mrb[0].mxu0
    %786 = vdwg.mxu0
    %v787 = vrot.slane %v740, 4
    %v788 = vadd.f32 %v740, %v787
    %v789 = vrot.slane %v788, 2
    %v790 = vadd.f32 %v788, %v789
    %v791 = vrot.slane %v790, 1
    %v792 = vadd.f32 %v790, %v791
    %v793 = vrot.slane %v742, 4
    %v794 = vadd.f32 %v742, %v793
    %v795 = vrot.slane %v794, 2
    %v796 = vadd.f32 %v794, %v795
    %v797 = vrot.slane %v796, 1
    %v798 = vadd.f32 %v796, %v797
    %v799 = vrot.slane %v781, 4
    %v800 = vadd.f32 %v781, %v799
    %v801 = vrot.slane %v800, 2
    %v802 = vadd.f32 %v800, %v801
    %v803 = vrot.slane %v802, 1
    %v804 = vadd.f32 %v802, %v803
    %v805 = vrot.slane %v783, 4
    %v806 = vadd.f32 %v783, %v805
    %v807 = vrot.slane %v806, 2
    %v808 = vadd.f32 %v806, %v807
    %v809 = vrot.slane %v808, 1
    %v810 = vadd.f32 %v808, %v809
    %v811 = vrcp.pop 8.0
    %v812 = vmul.f32 %v792, %v811
    %v813 = vmul.f32 %v798, %v811
    %v814 = vmul.f32 %v804, %v811
    %v815 = vmul.f32 %v810, %v811
    %v816 = vmul.f32 %v740, %v740
    %v817 = vmul.f32 %v742, %v742
    %v818 = vmul.f32 %v781, %v781
    %v819 = vmul.f32 %v783, %v783
    %v820 = vrot.slane %v816, 4
    %v821 = vadd.f32 %v816, %v820
    %v822 = vrot.slane %v821, 2
    %v823 = vadd.f32 %v821, %v822
    %v824 = vrot.slane %v823, 1
    %v825 = vadd.f32 %v823, %v824
    %v826 = vrot.slane %v817, 4
    %v827 = vadd.f32 %v817, %v826
    %v828 = vrot.slane %v827, 2
    %v829 = vadd.f32 %v827, %v828
    %v830 = vrot.slane %v829, 1
    %v831 = vadd.f32 %v829, %v830
    %v832 = vrot.slane %v818, 4
    %v833 = vadd.f32 %v818, %v832
    %v834 = vrot.slane %v833, 2
    %v835 = vadd.f32 %v833, %v834
    %v836 = vrot.slane %v835, 1
    %v837 = vadd.f32 %v835, %v836
    %v838 = vrot.slane %v819, 4
    %v839 = vadd.f32 %v819, %v838
    %v840 = vrot.slane %v839, 2
    %v841 = vadd.f32 %v839, %v840
    %v842 = vrot.slane %v841, 1
    %v843 = vadd.f32 %v841, %v842
    %v844 = vmul.f32 %v825, %v811
    %v845 = vmul.f32 %v831, %v811
    %v846 = vmul.f32 %v837, %v811
    %v847 = vmul.f32 %v843, %v811
    %v848 = vmul.f32 %v812, %v812
    %v849 = vmul.f32 %v813, %v813
    %v850 = vmul.f32 %v814, %v814
    %v851 = vmul.f32 %v815, %v815
    %v852 = vsub.f32 %v844, %v848
    %v853 = vsub.f32 %v845, %v849
    %v854 = vsub.f32 %v846, %v850
    %v855 = vsub.f32 %v847, %v851
    %v856 = vld [vmem:[#allocation7] sm:$0xf]
    %v857 = vadd.f32 %v852, 1e-05
    %v858 = vadd.f32 %v853, 1e-05
    %v859 = vadd.f32 %v854, 1e-05
    %v860 = vadd.f32 %v855, 1e-05
    %v861 = vrsqrt.pop %v857
    %v862 = vrsqrt.pop %v858
    %v863 = vrsqrt.pop %v859
    %v864 = vrsqrt.pop %v860
    %v869 = vcombine.low %v861, %v862
    %v870 = vcombine.low %v863, %v864
    %v872 = vunpack.c.l.s4 1966171168
    %v873 = vunpack.c.0.s8 %v872
    %v874 = vlaneseq
    %v875 = vshrl.u32 %v874, 7
    %v876 = vsub.s32 %v873, %v875
    %v877 = vrot.slane %v869, %v876
    %v879 = vunpack.c.l.s4 1966171168
    %v880 = vunpack.c.0.s8 %v879
    %v881 = vlaneseq
    %v882 = vshrl.u32 %v881, 7
    %v883 = vsub.s32 %v880, %v882
    %v884 = vrot.slane %v870, %v883
    %v885 = vcombine.low %v877, %v884
    %v887 = vunpack.c.l.s4 1966171168
    %v888 = vunpack.c.0.s8 %v887
    %v889 = vlaneseq
    %v890 = vshrl.u32 %v889, 7
    %v891 = vsub.s32 %v888, %v890
    %v892 = vrot.slane %v885, %v891
    %v894 = vmul.f32 %v856, %v892
    %v896 = vlaneseq
    %v897 = vshrl.u32 %v896, 7
    %v898 = vsub.s32 0, %v897
    %v899 = vrot.slane %v894, %v898
    %v900 = vlaneseq
    %v901 = vshrl.u32 %v900, 7
    %v902 = vsub.s32 1, %v901
    %v903 = vrot.slane %v894, %v902
    %v904 = vlaneseq
    %v905 = vshrl.u32 %v904, 7
    %v906 = vsub.s32 2, %v905
    %v907 = vrot.slane %v894, %v906
    %v908 = vlaneseq
    %v909 = vshrl.u32 %v908, 7
    %v910 = vsub.s32 3, %v909
    %v911 = vrot.slane %v894, %v910
    %v916 = vmul.f32 %v740, %v899
    %v917 = vmul.f32 %v742, %v903
    %v918 = vmul.f32 %v781, %v907
    %v919 = vmul.f32 %v783, %v911
    %v920 = vld [vmem:[#allocation9] sm:$0xf]
    %v921 = vmul.f32 %v812, %v899
    %v922 = vmul.f32 %v813, %v903
    %v923 = vmul.f32 %v814, %v907
    %v924 = vmul.f32 %v815, %v911
    %v929 = vcombine.low %v921, %v922
    %v930 = vcombine.low %v923, %v924
    %v932 = vunpack.c.l.s4 1966171168
    %v933 = vunpack.c.0.s8 %v932
    %v934 = vlaneseq
    %v935 = vshrl.u32 %v934, 7
    %v936 = vsub.s32 %v933, %v935
    %v937 = vrot.slane %v929, %v936
    %v939 = vunpack.c.l.s4 1966171168
    %v940 = vunpack.c.0.s8 %v939
    %v941 = vlaneseq
    %v942 = vshrl.u32 %v941, 7
    %v943 = vsub.s32 %v940, %v942
    %v944 = vrot.slane %v930, %v943
    %v945 = vcombine.low %v937, %v944
    %v947 = vunpack.c.l.s4 1966171168
    %v948 = vunpack.c.0.s8 %v947
    %v949 = vlaneseq
    %v950 = vshrl.u32 %v949, 7
    %v951 = vsub.s32 %v948, %v950
    %v952 = vrot.slane %v945, %v951
    %v954 = vsub.f32 %v920, %v952
    %v956 = vlaneseq
    %v957 = vshrl.u32 %v956, 7
    %v958 = vsub.s32 0, %v957
    %v959 = vrot.slane %v954, %v958
    %v960 = vlaneseq
    %v961 = vshrl.u32 %v960, 7
    %v962 = vsub.s32 1, %v961
    %v963 = vrot.slane %v954, %v962
    %v964 = vlaneseq
    %v965 = vshrl.u32 %v964, 7
    %v966 = vsub.s32 2, %v965
    %v967 = vrot.slane %v954, %v966
    %v968 = vlaneseq
    %v969 = vshrl.u32 %v968, 7
    %v970 = vsub.s32 3, %v969
    %v971 = vrot.slane %v954, %v970
    %v976 = vadd.f32 %v916, %v959
    %v977 = vadd.f32 %v917, %v963
    %v978 = vadd.f32 %v918, %v967
    %v979 = vadd.f32 %v919, %v971
    %vm980 = vcmp.ge.f32.partialorder %v976, 0.0
    %vm981 = vcmp.ge.f32.partialorder %v977, 0.0
    %vm982 = vcmp.ge.f32.partialorder %v978, 0.0
    %vm983 = vcmp.ge.f32.partialorder %v979, 0.0
    %v984 = vmul.f32 %v976, 0.2
    %v985 = vmul.f32 %v977, 0.2
    %v986 = vmul.f32 %v978, 0.2
    %v987 = vmul.f32 %v979, 0.2
    %v988 = vsel %vm980, %v976, %v984
    %v989 = vsel %vm981, %v977, %v985
    %v990 = vsel %vm982, %v978, %v986
    %v991 = vsel %vm983, %v979, %v987
    %v992 = vpack.c.bf16 %v988, %v988
    %v993 = vpack.c.bf16 %v989, %v989
    %v994 = vpack.c.bf16 %v990, %v990
    %v995 = vpack.c.bf16 %v991, %v991
    %v996 = vld [vmem:[#allocation10] sm:$0xff]
    %v997 = vld [vmem:[#allocation10 + $0x8] sm:$0xff]
    %v998 = vld [vmem:[#allocation10 + $0x10] sm:$0xff]
    %v999 = vld [vmem:[#allocation10 + $0x18] sm:$0xff]
    %v1000 = vld [vmem:[#allocation10 + $0x20] sm:$0xff]
    %v1001 = vld [vmem:[#allocation10 + $0x28] sm:$0xff]
    %v1002 = vld [vmem:[#allocation10 + $0x30] sm:$0xff]
    %v1003 = vld [vmem:[#allocation10 + $0x38] sm:$0xff]
    %v1004 = vld [vmem:[#allocation10 + $0x40] sm:$0xff]
    %v1005 = vld [vmem:[#allocation10 + $0x48] sm:$0xff]
    %v1006 = vld [vmem:[#allocation10 + $0x50] sm:$0xff]
    %v1007 = vld [vmem:[#allocation10 + $0x58] sm:$0xff]
    %v1008 = vld [vmem:[#allocation10 + $0x60] sm:$0xff]
    %v1009 = vld [vmem:[#allocation10 + $0x68] sm:$0xff]
    %v1010 = vld [vmem:[#allocation10 + $0x70] sm:$0xff]
    %v1011 = vld [vmem:[#allocation10 + $0x78] sm:$0xff]
    %v1012 = vld [vmem:[#allocation10 + $0x80] sm:$0xff]
    %v1013 = vld [vmem:[#allocation10 + $0x88] sm:$0xff]
    %v1014 = vld [vmem:[#allocation10 + $0x90] sm:$0xff]
    %v1015 = vld [vmem:[#allocation10 + $0x98] sm:$0xff]
    %v1016 = vld [vmem:[#allocation10 + $0xa0] sm:$0xff]
    %v1017 = vld [vmem:[#allocation10 + $0xa8] sm:$0xff]
    %v1018 = vld [vmem:[#allocation10 + $0xb0] sm:$0xff]
    %v1019 = vld [vmem:[#allocation10 + $0xb8] sm:$0xff]
    %v1020 = vld [vmem:[#allocation10 + $0xc0] sm:$0xff]
    %v1021 = vld [vmem:[#allocation10 + $0xc8] sm:$0xff]
    %v1022 = vld [vmem:[#allocation10 + $0xd0] sm:$0xff]
    %v1023 = vld [vmem:[#allocation10 + $0xd8] sm:$0xff]
    %v1024 = vld [vmem:[#allocation10 + $0xe0] sm:$0xff]
    %v1025 = vld [vmem:[#allocation10 + $0xe8] sm:$0xff]
    %v1026 = vld [vmem:[#allocation10 + $0xf0] sm:$0xff]
    %v1027 = vld [vmem:[#allocation10 + $0xf8] sm:$0xff]
    %v1028 = vld [vmem:[#allocation10 + $0x100] sm:$0xff]
    %v1029 = vld [vmem:[#allocation10 + $0x108] sm:$0xff]
    %v1030 = vld [vmem:[#allocation10 + $0x110] sm:$0xff]
    %v1031 = vld [vmem:[#allocation10 + $0x118] sm:$0xff]
    %v1032 = vld [vmem:[#allocation10 + $0x120] sm:$0xff]
    %v1033 = vld [vmem:[#allocation10 + $0x128] sm:$0xff]
    %v1034 = vld [vmem:[#allocation10 + $0x130] sm:$0xff]
    %v1035 = vld [vmem:[#allocation10 + $0x138] sm:$0xff]
    %v1036 = vld [vmem:[#allocation10 + $0x140] sm:$0xff]
    %v1037 = vld [vmem:[#allocation10 + $0x148] sm:$0xff]
    %v1038 = vld [vmem:[#allocation10 + $0x150] sm:$0xff]
    %v1039 = vld [vmem:[#allocation10 + $0x158] sm:$0xff]
    %v1040 = vld [vmem:[#allocation10 + $0x160] sm:$0xff]
    %v1041 = vld [vmem:[#allocation10 + $0x168] sm:$0xff]
    %v1042 = vld [vmem:[#allocation10 + $0x170] sm:$0xff]
    %v1043 = vld [vmem:[#allocation10 + $0x178] sm:$0xff]
    %v1044 = vld [vmem:[#allocation10 + $0x180] sm:$0xff]
    %v1045 = vld [vmem:[#allocation10 + $0x188] sm:$0xff]
    %v1046 = vld [vmem:[#allocation10 + $0x190] sm:$0xff]
    %v1047 = vld [vmem:[#allocation10 + $0x198] sm:$0xff]
    %v1048 = vld [vmem:[#allocation10 + $0x1a0] sm:$0xff]
    %v1049 = vld [vmem:[#allocation10 + $0x1a8] sm:$0xff]
    %v1050 = vld [vmem:[#allocation10 + $0x1b0] sm:$0xff]
    %v1051 = vld [vmem:[#allocation10 + $0x1b8] sm:$0xff]
    %v1052 = vld [vmem:[#allocation10 + $0x1c0] sm:$0xff]
    %v1053 = vld [vmem:[#allocation10 + $0x1c8] sm:$0xff]
    %v1054 = vld [vmem:[#allocation10 + $0x1d0] sm:$0xff]
    %v1055 = vld [vmem:[#allocation10 + $0x1d8] sm:$0xff]
    %v1056 = vld [vmem:[#allocation10 + $0x1e0] sm:$0xff]
    %v1057 = vld [vmem:[#allocation10 + $0x1e8] sm:$0xff]
    %v1058 = vld [vmem:[#allocation10 + $0x1f0] sm:$0xff]
    %v1059 = vld [vmem:[#allocation10 + $0x1f8] sm:$0xff]
    %v1060 = vld [vmem:[#allocation10 + $0x200] sm:$0xff]
    %v1061 = vld [vmem:[#allocation10 + $0x208] sm:$0xff]
    %v1062 = vld [vmem:[#allocation10 + $0x210] sm:$0xff]
    %v1063 = vld [vmem:[#allocation10 + $0x218] sm:$0xff]
    %v1064 = vld [vmem:[#allocation10 + $0x220] sm:$0xff]
    %v1065 = vld [vmem:[#allocation10 + $0x228] sm:$0xff]
    %v1066 = vld [vmem:[#allocation10 + $0x230] sm:$0xff]
    %v1067 = vld [vmem:[#allocation10 + $0x238] sm:$0xff]
    %v1068 = vld [vmem:[#allocation10 + $0x240] sm:$0xff]
    %v1069 = vld [vmem:[#allocation10 + $0x248] sm:$0xff]
    %v1070 = vld [vmem:[#allocation10 + $0x250] sm:$0xff]
    %v1071 = vld [vmem:[#allocation10 + $0x258] sm:$0xff]
    %v1072 = vld [vmem:[#allocation10 + $0x260] sm:$0xff]
    %v1073 = vld [vmem:[#allocation10 + $0x268] sm:$0xff]
    %v1074 = vld [vmem:[#allocation10 + $0x270] sm:$0xff]
    %v1075 = vld [vmem:[#allocation10 + $0x278] sm:$0xff]
    %v1076 = vld [vmem:[#allocation10 + $0x280] sm:$0xff]
    %v1077 = vld [vmem:[#allocation10 + $0x288] sm:$0xff]
    %v1078 = vld [vmem:[#allocation10 + $0x290] sm:$0xff]
    %v1079 = vld [vmem:[#allocation10 + $0x298] sm:$0xff]
    %v1080 = vld [vmem:[#allocation10 + $0x2a0] sm:$0xff]
    %v1081 = vld [vmem:[#allocation10 + $0x2a8] sm:$0xff]
    %v1082 = vld [vmem:[#allocation10 + $0x2b0] sm:$0xff]
    %v1083 = vld [vmem:[#allocation10 + $0x2b8] sm:$0xff]
    %v1084 = vld [vmem:[#allocation10 + $0x2c0] sm:$0xff]
    %v1085 = vld [vmem:[#allocation10 + $0x2c8] sm:$0xff]
    %v1086 = vld [vmem:[#allocation10 + $0x2d0] sm:$0xff]
    %v1087 = vld [vmem:[#allocation10 + $0x2d8] sm:$0xff]
    %v1088 = vld [vmem:[#allocation10 + $0x2e0] sm:$0xff]
    %v1089 = vld [vmem:[#allocation10 + $0x2e8] sm:$0xff]
    %v1090 = vld [vmem:[#allocation10 + $0x2f0] sm:$0xff]
    %v1091 = vld [vmem:[#allocation10 + $0x2f8] sm:$0xff]
    %v1092 = vld [vmem:[#allocation10 + $0x300] sm:$0xff]
    %v1093 = vld [vmem:[#allocation10 + $0x308] sm:$0xff]
    %v1094 = vld [vmem:[#allocation10 + $0x310] sm:$0xff]
    %v1095 = vld [vmem:[#allocation10 + $0x318] sm:$0xff]
    %v1096 = vld [vmem:[#allocation10 + $0x320] sm:$0xff]
    %v1097 = vld [vmem:[#allocation10 + $0x328] sm:$0xff]
    %v1098 = vld [vmem:[#allocation10 + $0x330] sm:$0xff]
    %v1099 = vld [vmem:[#allocation10 + $0x338] sm:$0xff]
    %v1100 = vld [vmem:[#allocation10 + $0x340] sm:$0xff]
    %v1101 = vld [vmem:[#allocation10 + $0x348] sm:$0xff]
    %v1102 = vld [vmem:[#allocation10 + $0x350] sm:$0xff]
    %v1103 = vld [vmem:[#allocation10 + $0x358] sm:$0xff]
    %v1104 = vld [vmem:[#allocation10 + $0x360] sm:$0xff]
    %v1105 = vld [vmem:[#allocation10 + $0x368] sm:$0xff]
    %v1106 = vld [vmem:[#allocation10 + $0x370] sm:$0xff]
    %v1107 = vld [vmem:[#allocation10 + $0x378] sm:$0xff]
    %v1108 = vld [vmem:[#allocation10 + $0x380] sm:$0xff]
    %v1109 = vld [vmem:[#allocation10 + $0x388] sm:$0xff]
    %v1110 = vld [vmem:[#allocation10 + $0x390] sm:$0xff]
    %v1111 = vld [vmem:[#allocation10 + $0x398] sm:$0xff]
    %v1112 = vld [vmem:[#allocation10 + $0x3a0] sm:$0xff]
    %v1113 = vld [vmem:[#allocation10 + $0x3a8] sm:$0xff]
    %v1114 = vld [vmem:[#allocation10 + $0x3b0] sm:$0xff]
    %v1115 = vld [vmem:[#allocation10 + $0x3b8] sm:$0xff]
    %v1116 = vld [vmem:[#allocation10 + $0x3c0] sm:$0xff]
    %v1117 = vld [vmem:[#allocation10 + $0x3c8] sm:$0xff]
    %v1118 = vld [vmem:[#allocation10 + $0x3d0] sm:$0xff]
    %v1119 = vld [vmem:[#allocation10 + $0x3d8] sm:$0xff]
    %v1120 = vld [vmem:[#allocation10 + $0x3e0] sm:$0xff]
    %v1121 = vld [vmem:[#allocation10 + $0x3e8] sm:$0xff]
    %v1122 = vld [vmem:[#allocation10 + $0x3f0] sm:$0xff]
    %v1123 = vld [vmem:[#allocation10 + $0x3f8] sm:$0xff]
    %v1124 = vld [vmem:[#allocation10 + $0x400] sm:$0xff]
    %v1125 = vld [vmem:[#allocation10 + $0x408] sm:$0xff]
    %v1126 = vld [vmem:[#allocation10 + $0x410] sm:$0xff]
    %v1127 = vld [vmem:[#allocation10 + $0x418] sm:$0xff]
    %v1128 = vld [vmem:[#allocation10 + $0x420] sm:$0xff]
    %v1129 = vld [vmem:[#allocation10 + $0x428] sm:$0xff]
    %v1130 = vld [vmem:[#allocation10 + $0x430] sm:$0xff]
    %v1131 = vld [vmem:[#allocation10 + $0x438] sm:$0xff]
    %v1132 = vld [vmem:[#allocation10 + $0x440] sm:$0xff]
    %v1133 = vld [vmem:[#allocation10 + $0x448] sm:$0xff]
    %v1134 = vld [vmem:[#allocation10 + $0x450] sm:$0xff]
    %v1135 = vld [vmem:[#allocation10 + $0x458] sm:$0xff]
    %v1136 = vld [vmem:[#allocation10 + $0x460] sm:$0xff]
    %v1137 = vld [vmem:[#allocation10 + $0x468] sm:$0xff]
    %v1138 = vld [vmem:[#allocation10 + $0x470] sm:$0xff]
    %v1139 = vld [vmem:[#allocation10 + $0x478] sm:$0xff]
    %v1140 = vld [vmem:[#allocation10 + $0x480] sm:$0xff]
    %v1141 = vld [vmem:[#allocation10 + $0x488] sm:$0xff]
    %v1142 = vld [vmem:[#allocation10 + $0x490] sm:$0xff]
    %v1143 = vld [vmem:[#allocation10 + $0x498] sm:$0xff]
    %v1144 = vld [vmem:[#allocation10 + $0x4a0] sm:$0xff]
    %v1145 = vld [vmem:[#allocation10 + $0x4a8] sm:$0xff]
    %v1146 = vld [vmem:[#allocation10 + $0x4b0] sm:$0xff]
    %v1147 = vld [vmem:[#allocation10 + $0x4b8] sm:$0xff]
    %v1148 = vld [vmem:[#allocation10 + $0x4c0] sm:$0xff]
    %v1149 = vld [vmem:[#allocation10 + $0x4c8] sm:$0xff]
    %v1150 = vld [vmem:[#allocation10 + $0x4d0] sm:$0xff]
    %v1151 = vld [vmem:[#allocation10 + $0x4d8] sm:$0xff]
    %v1152 = vld [vmem:[#allocation10 + $0x4e0] sm:$0xff]
    %v1153 = vld [vmem:[#allocation10 + $0x4e8] sm:$0xff]
    %v1154 = vld [vmem:[#allocation10 + $0x4f0] sm:$0xff]
    %v1155 = vld [vmem:[#allocation10 + $0x4f8] sm:$0xff]
    %v1156 = vld [vmem:[#allocation10 + $0x500] sm:$0xff]
    %v1157 = vld [vmem:[#allocation10 + $0x508] sm:$0xff]
    %v1158 = vld [vmem:[#allocation10 + $0x510] sm:$0xff]
    %v1159 = vld [vmem:[#allocation10 + $0x518] sm:$0xff]
    %v1160 = vld [vmem:[#allocation10 + $0x520] sm:$0xff]
    %v1161 = vld [vmem:[#allocation10 + $0x528] sm:$0xff]
    %v1162 = vld [vmem:[#allocation10 + $0x530] sm:$0xff]
    %v1163 = vld [vmem:[#allocation10 + $0x538] sm:$0xff]
    %v1164 = vld [vmem:[#allocation10 + $0x540] sm:$0xff]
    %v1165 = vld [vmem:[#allocation10 + $0x548] sm:$0xff]
    %v1166 = vld [vmem:[#allocation10 + $0x550] sm:$0xff]
    %v1167 = vld [vmem:[#allocation10 + $0x558] sm:$0xff]
    %v1168 = vld [vmem:[#allocation10 + $0x560] sm:$0xff]
    %v1169 = vld [vmem:[#allocation10 + $0x568] sm:$0xff]
    %v1170 = vld [vmem:[#allocation10 + $0x570] sm:$0xff]
    %v1171 = vld [vmem:[#allocation10 + $0x578] sm:$0xff]
    %v1172 = vld [vmem:[#allocation10 + $0x580] sm:$0xff]
    %v1173 = vld [vmem:[#allocation10 + $0x588] sm:$0xff]
    %v1174 = vld [vmem:[#allocation10 + $0x590] sm:$0xff]
    %v1175 = vld [vmem:[#allocation10 + $0x598] sm:$0xff]
    %v1176 = vld [vmem:[#allocation10 + $0x5a0] sm:$0xff]
    %v1177 = vld [vmem:[#allocation10 + $0x5a8] sm:$0xff]
    %v1178 = vld [vmem:[#allocation10 + $0x5b0] sm:$0xff]
    %v1179 = vld [vmem:[#allocation10 + $0x5b8] sm:$0xff]
    %v1180 = vld [vmem:[#allocation10 + $0x5c0] sm:$0xff]
    %v1181 = vld [vmem:[#allocation10 + $0x5c8] sm:$0xff]
    %v1182 = vld [vmem:[#allocation10 + $0x5d0] sm:$0xff]
    %v1183 = vld [vmem:[#allocation10 + $0x5d8] sm:$0xff]
    %v1184 = vld [vmem:[#allocation10 + $0x5e0] sm:$0xff]
    %v1185 = vld [vmem:[#allocation10 + $0x5e8] sm:$0xff]
    %v1186 = vld [vmem:[#allocation10 + $0x5f0] sm:$0xff]
    %v1187 = vld [vmem:[#allocation10 + $0x5f8] sm:$0xff]
    %v1188 = vld [vmem:[#allocation10 + $0x600] sm:$0xff]
    %v1189 = vld [vmem:[#allocation10 + $0x608] sm:$0xff]
    %v1190 = vld [vmem:[#allocation10 + $0x610] sm:$0xff]
    %v1191 = vld [vmem:[#allocation10 + $0x618] sm:$0xff]
    %v1192 = vld [vmem:[#allocation10 + $0x620] sm:$0xff]
    %v1193 = vld [vmem:[#allocation10 + $0x628] sm:$0xff]
    %v1194 = vld [vmem:[#allocation10 + $0x630] sm:$0xff]
    %v1195 = vld [vmem:[#allocation10 + $0x638] sm:$0xff]
    %v1196 = vld [vmem:[#allocation10 + $0x640] sm:$0xff]
    %v1197 = vld [vmem:[#allocation10 + $0x648] sm:$0xff]
    %v1198 = vld [vmem:[#allocation10 + $0x650] sm:$0xff]
    %v1199 = vld [vmem:[#allocation10 + $0x658] sm:$0xff]
    %v1200 = vld [vmem:[#allocation10 + $0x660] sm:$0xff]
    %v1201 = vld [vmem:[#allocation10 + $0x668] sm:$0xff]
    %v1202 = vld [vmem:[#allocation10 + $0x670] sm:$0xff]
    %v1203 = vld [vmem:[#allocation10 + $0x678] sm:$0xff]
    %v1204 = vld [vmem:[#allocation10 + $0x680] sm:$0xff]
    %v1205 = vld [vmem:[#allocation10 + $0x688] sm:$0xff]
    %v1206 = vld [vmem:[#allocation10 + $0x690] sm:$0xff]
    %v1207 = vld [vmem:[#allocation10 + $0x698] sm:$0xff]
    %v1208 = vld [vmem:[#allocation10 + $0x6a0] sm:$0xff]
    %v1209 = vld [vmem:[#allocation10 + $0x6a8] sm:$0xff]
    %v1210 = vld [vmem:[#allocation10 + $0x6b0] sm:$0xff]
    %v1211 = vld [vmem:[#allocation10 + $0x6b8] sm:$0xff]
    %v1212 = vld [vmem:[#allocation10 + $0x6c0] sm:$0xff]
    %v1213 = vld [vmem:[#allocation10 + $0x6c8] sm:$0xff]
    %v1214 = vld [vmem:[#allocation10 + $0x6d0] sm:$0xff]
    %v1215 = vld [vmem:[#allocation10 + $0x6d8] sm:$0xff]
    %v1216 = vld [vmem:[#allocation10 + $0x6e0] sm:$0xff]
    %v1217 = vld [vmem:[#allocation10 + $0x6e8] sm:$0xff]
    %v1218 = vld [vmem:[#allocation10 + $0x6f0] sm:$0xff]
    %v1219 = vld [vmem:[#allocation10 + $0x6f8] sm:$0xff]
    %v1220 = vld [vmem:[#allocation10 + $0x700] sm:$0xff]
    %v1221 = vld [vmem:[#allocation10 + $0x708] sm:$0xff]
    %v1222 = vld [vmem:[#allocation10 + $0x710] sm:$0xff]
    %v1223 = vld [vmem:[#allocation10 + $0x718] sm:$0xff]
    %v1224 = vld [vmem:[#allocation10 + $0x720] sm:$0xff]
    %v1225 = vld [vmem:[#allocation10 + $0x728] sm:$0xff]
    %v1226 = vld [vmem:[#allocation10 + $0x730] sm:$0xff]
    %v1227 = vld [vmem:[#allocation10 + $0x738] sm:$0xff]
    %v1228 = vld [vmem:[#allocation10 + $0x740] sm:$0xff]
    %v1229 = vld [vmem:[#allocation10 + $0x748] sm:$0xff]
    %v1230 = vld [vmem:[#allocation10 + $0x750] sm:$0xff]
    %v1231 = vld [vmem:[#allocation10 + $0x758] sm:$0xff]
    %v1232 = vld [vmem:[#allocation10 + $0x760] sm:$0xff]
    %v1233 = vld [vmem:[#allocation10 + $0x768] sm:$0xff]
    %v1234 = vld [vmem:[#allocation10 + $0x770] sm:$0xff]
    %v1235 = vld [vmem:[#allocation10 + $0x778] sm:$0xff]
    %v1236 = vld [vmem:[#allocation10 + $0x780] sm:$0xff]
    %v1237 = vld [vmem:[#allocation10 + $0x788] sm:$0xff]
    %v1238 = vld [vmem:[#allocation10 + $0x790] sm:$0xff]
    %v1239 = vld [vmem:[#allocation10 + $0x798] sm:$0xff]
    %v1240 = vld [vmem:[#allocation10 + $0x7a0] sm:$0xff]
    %v1241 = vld [vmem:[#allocation10 + $0x7a8] sm:$0xff]
    %v1242 = vld [vmem:[#allocation10 + $0x7b0] sm:$0xff]
    %v1243 = vld [vmem:[#allocation10 + $0x7b8] sm:$0xff]
    %v1244 = vld [vmem:[#allocation10 + $0x7c0] sm:$0xff]
    %v1245 = vld [vmem:[#allocation10 + $0x7c8] sm:$0xff]
    %v1246 = vld [vmem:[#allocation10 + $0x7d0] sm:$0xff]
    %v1247 = vld [vmem:[#allocation10 + $0x7d8] sm:$0xff]
    %v1248 = vld [vmem:[#allocation10 + $0x7e0] sm:$0xff]
    %v1249 = vld [vmem:[#allocation10 + $0x7e8] sm:$0xff]
    %v1250 = vld [vmem:[#allocation10 + $0x7f0] sm:$0xff]
    %v1251 = vld [vmem:[#allocation10 + $0x7f8] sm:$0xff]
    %v1508 = vunpack.c.l.b16 %v996
    %v1509 = vunpack.c.h.b16 %v996
    %v1510 = vunpack.c.l.b16 %v997
    %v1511 = vunpack.c.h.b16 %v997
    %v1512 = vunpack.c.l.b16 %v998
    %v1513 = vunpack.c.h.b16 %v998
    %v1514 = vunpack.c.l.b16 %v999
    %v1515 = vunpack.c.h.b16 %v999
    %v1516 = vunpack.c.l.b16 %v1000
    %v1517 = vunpack.c.h.b16 %v1000
    %v1518 = vunpack.c.l.b16 %v1001
    %v1519 = vunpack.c.h.b16 %v1001
    %v1520 = vunpack.c.l.b16 %v1002
    %v1521 = vunpack.c.h.b16 %v1002
    %v1522 = vunpack.c.l.b16 %v1003
    %v1523 = vunpack.c.h.b16 %v1003
    %v1524 = vunpack.c.l.b16 %v1004
    %v1525 = vunpack.c.h.b16 %v1004
    %v1526 = vunpack.c.l.b16 %v1005
    %v1527 = vunpack.c.h.b16 %v1005
    %v1528 = vunpack.c.l.b16 %v1006
    %v1529 = vunpack.c.h.b16 %v1006
    %v1530 = vunpack.c.l.b16 %v1007
    %v1531 = vunpack.c.h.b16 %v1007
    %v1532 = vunpack.c.l.b16 %v1008
    %v1533 = vunpack.c.h.b16 %v1008
    %v1534 = vunpack.c.l.b16 %v1009
    %v1535 = vunpack.c.h.b16 %v1009
    %v1536 = vunpack.c.l.b16 %v1010
    %v1537 = vunpack.c.h.b16 %v1010
    %v1538 = vunpack.c.l.b16 %v1011
    %v1539 = vunpack.c.h.b16 %v1011
    %v1540 = vunpack.c.l.b16 %v1012
    %v1541 = vunpack.c.h.b16 %v1012
    %v1542 = vunpack.c.l.b16 %v1013
    %v1543 = vunpack.c.h.b16 %v1013
    %v1544 = vunpack.c.l.b16 %v1014
    %v1545 = vunpack.c.h.b16 %v1014
    %v1546 = vunpack.c.l.b16 %v1015
    %v1547 = vunpack.c.h.b16 %v1015
    %v1548 = vunpack.c.l.b16 %v1016
    %v1549 = vunpack.c.h.b16 %v1016
    %v1550 = vunpack.c.l.b16 %v1017
    %v1551 = vunpack.c.h.b16 %v1017
    %v1552 = vunpack.c.l.b16 %v1018
    %v1553 = vunpack.c.h.b16 %v1018
    %v1554 = vunpack.c.l.b16 %v1019
    %v1555 = vunpack.c.h.b16 %v1019
    %v1556 = vunpack.c.l.b16 %v1020
    %v1557 = vunpack.c.h.b16 %v1020
    %v1558 = vunpack.c.l.b16 %v1021
    %v1559 = vunpack.c.h.b16 %v1021
    %v1560 = vunpack.c.l.b16 %v1022
    %v1561 = vunpack.c.h.b16 %v1022
    %v1562 = vunpack.c.l.b16 %v1023
    %v1563 = vunpack.c.h.b16 %v1023
    %v1564 = vunpack.c.l.b16 %v1024
    %v1565 = vunpack.c.h.b16 %v1024
    %v1566 = vunpack.c.l.b16 %v1025
    %v1567 = vunpack.c.h.b16 %v1025
    %v1568 = vunpack.c.l.b16 %v1026
    %v1569 = vunpack.c.h.b16 %v1026
    %v1570 = vunpack.c.l.b16 %v1027
    %v1571 = vunpack.c.h.b16 %v1027
    %v1572 = vunpack.c.l.b16 %v1028
    %v1573 = vunpack.c.h.b16 %v1028
    %v1574 = vunpack.c.l.b16 %v1029
    %v1575 = vunpack.c.h.b16 %v1029
    %v1576 = vunpack.c.l.b16 %v1030
    %v1577 = vunpack.c.h.b16 %v1030
    %v1578 = vunpack.c.l.b16 %v1031
    %v1579 = vunpack.c.h.b16 %v1031
    %v1580 = vunpack.c.l.b16 %v1032
    %v1581 = vunpack.c.h.b16 %v1032
    %v1582 = vunpack.c.l.b16 %v1033
    %v1583 = vunpack.c.h.b16 %v1033
    %v1584 = vunpack.c.l.b16 %v1034
    %v1585 = vunpack.c.h.b16 %v1034
    %v1586 = vunpack.c.l.b16 %v1035
    %v1587 = vunpack.c.h.b16 %v1035
    %v1588 = vunpack.c.l.b16 %v1036
    %v1589 = vunpack.c.h.b16 %v1036
    %v1590 = vunpack.c.l.b16 %v1037
    %v1591 = vunpack.c.h.b16 %v1037
    %v1592 = vunpack.c.l.b16 %v1038
    %v1593 = vunpack.c.h.b16 %v1038
    %v1594 = vunpack.c.l.b16 %v1039
    %v1595 = vunpack.c.h.b16 %v1039
    %v1596 = vunpack.c.l.b16 %v1040
    %v1597 = vunpack.c.h.b16 %v1040
    %v1598 = vunpack.c.l.b16 %v1041
    %v1599 = vunpack.c.h.b16 %v1041
    %v1600 = vunpack.c.l.b16 %v1042
    %v1601 = vunpack.c.h.b16 %v1042
    %v1602 = vunpack.c.l.b16 %v1043
    %v1603 = vunpack.c.h.b16 %v1043
    %v1604 = vunpack.c.l.b16 %v1044
    %v1605 = vunpack.c.h.b16 %v1044
    %v1606 = vunpack.c.l.b16 %v1045
    %v1607 = vunpack.c.h.b16 %v1045
    %v1608 = vunpack.c.l.b16 %v1046
    %v1609 = vunpack.c.h.b16 %v1046
    %v1610 = vunpack.c.l.b16 %v1047
    %v1611 = vunpack.c.h.b16 %v1047
    %v1612 = vunpack.c.l.b16 %v1048
    %v1613 = vunpack.c.h.b16 %v1048
    %v1614 = vunpack.c.l.b16 %v1049
    %v1615 = vunpack.c.h.b16 %v1049
    %v1616 = vunpack.c.l.b16 %v1050
    %v1617 = vunpack.c.h.b16 %v1050
    %v1618 = vunpack.c.l.b16 %v1051
    %v1619 = vunpack.c.h.b16 %v1051
    %v1620 = vunpack.c.l.b16 %v1052
    %v1621 = vunpack.c.h.b16 %v1052
    %v1622 = vunpack.c.l.b16 %v1053
    %v1623 = vunpack.c.h.b16 %v1053
    %v1624 = vunpack.c.l.b16 %v1054
    %v1625 = vunpack.c.h.b16 %v1054
    %v1626 = vunpack.c.l.b16 %v1055
    %v1627 = vunpack.c.h.b16 %v1055
    %v1628 = vunpack.c.l.b16 %v1056
    %v1629 = vunpack.c.h.b16 %v1056
    %v1630 = vunpack.c.l.b16 %v1057
    %v1631 = vunpack.c.h.b16 %v1057
    %v1632 = vunpack.c.l.b16 %v1058
    %v1633 = vunpack.c.h.b16 %v1058
    %v1634 = vunpack.c.l.b16 %v1059
    %v1635 = vunpack.c.h.b16 %v1059
    %v1636 = vunpack.c.l.b16 %v1060
    %v1637 = vunpack.c.h.b16 %v1060
    %v1638 = vunpack.c.l.b16 %v1061
    %v1639 = vunpack.c.h.b16 %v1061
    %v1640 = vunpack.c.l.b16 %v1062
    %v1641 = vunpack.c.h.b16 %v1062
    %v1642 = vunpack.c.l.b16 %v1063
    %v1643 = vunpack.c.h.b16 %v1063
    %v1644 = vunpack.c.l.b16 %v1064
    %v1645 = vunpack.c.h.b16 %v1064
    %v1646 = vunpack.c.l.b16 %v1065
    %v1647 = vunpack.c.h.b16 %v1065
    %v1648 = vunpack.c.l.b16 %v1066
    %v1649 = vunpack.c.h.b16 %v1066
    %v1650 = vunpack.c.l.b16 %v1067
    %v1651 = vunpack.c.h.b16 %v1067
    %v1652 = vunpack.c.l.b16 %v1068
    %v1653 = vunpack.c.h.b16 %v1068
    %v1654 = vunpack.c.l.b16 %v1069
    %v1655 = vunpack.c.h.b16 %v1069
    %v1656 = vunpack.c.l.b16 %v1070
    %v1657 = vunpack.c.h.b16 %v1070
    %v1658 = vunpack.c.l.b16 %v1071
    %v1659 = vunpack.c.h.b16 %v1071
    %v1660 = vunpack.c.l.b16 %v1072
    %v1661 = vunpack.c.h.b16 %v1072
    %v1662 = vunpack.c.l.b16 %v1073
    %v1663 = vunpack.c.h.b16 %v1073
    %v1664 = vunpack.c.l.b16 %v1074
    %v1665 = vunpack.c.h.b16 %v1074
    %v1666 = vunpack.c.l.b16 %v1075
    %v1667 = vunpack.c.h.b16 %v1075
    %v1668 = vunpack.c.l.b16 %v1076
    %v1669 = vunpack.c.h.b16 %v1076
    %v1670 = vunpack.c.l.b16 %v1077
    %v1671 = vunpack.c.h.b16 %v1077
    %v1672 = vunpack.c.l.b16 %v1078
    %v1673 = vunpack.c.h.b16 %v1078
    %v1674 = vunpack.c.l.b16 %v1079
    %v1675 = vunpack.c.h.b16 %v1079
    %v1676 = vunpack.c.l.b16 %v1080
    %v1677 = vunpack.c.h.b16 %v1080
    %v1678 = vunpack.c.l.b16 %v1081
    %v1679 = vunpack.c.h.b16 %v1081
    %v1680 = vunpack.c.l.b16 %v1082
    %v1681 = vunpack.c.h.b16 %v1082
    %v1682 = vunpack.c.l.b16 %v1083
    %v1683 = vunpack.c.h.b16 %v1083
    %v1684 = vunpack.c.l.b16 %v1084
    %v1685 = vunpack.c.h.b16 %v1084
    %v1686 = vunpack.c.l.b16 %v1085
    %v1687 = vunpack.c.h.b16 %v1085
    %v1688 = vunpack.c.l.b16 %v1086
    %v1689 = vunpack.c.h.b16 %v1086
    %v1690 = vunpack.c.l.b16 %v1087
    %v1691 = vunpack.c.h.b16 %v1087
    %v1692 = vunpack.c.l.b16 %v1088
    %v1693 = vunpack.c.h.b16 %v1088
    %v1694 = vunpack.c.l.b16 %v1089
    %v1695 = vunpack.c.h.b16 %v1089
    %v1696 = vunpack.c.l.b16 %v1090
    %v1697 = vunpack.c.h.b16 %v1090
    %v1698 = vunpack.c.l.b16 %v1091
    %v1699 = vunpack.c.h.b16 %v1091
    %v1700 = vunpack.c.l.b16 %v1092
    %v1701 = vunpack.c.h.b16 %v1092
    %v1702 = vunpack.c.l.b16 %v1093
    %v1703 = vunpack.c.h.b16 %v1093
    %v1704 = vunpack.c.l.b16 %v1094
    %v1705 = vunpack.c.h.b16 %v1094
    %v1706 = vunpack.c.l.b16 %v1095
    %v1707 = vunpack.c.h.b16 %v1095
    %v1708 = vunpack.c.l.b16 %v1096
    %v1709 = vunpack.c.h.b16 %v1096
    %v1710 = vunpack.c.l.b16 %v1097
    %v1711 = vunpack.c.h.b16 %v1097
    %v1712 = vunpack.c.l.b16 %v1098
    %v1713 = vunpack.c.h.b16 %v1098
    %v1714 = vunpack.c.l.b16 %v1099
    %v1715 = vunpack.c.h.b16 %v1099
    %v1716 = vunpack.c.l.b16 %v1100
    %v1717 = vunpack.c.h.b16 %v1100
    %v1718 = vunpack.c.l.b16 %v1101
    %v1719 = vunpack.c.h.b16 %v1101
    %v1720 = vunpack.c.l.b16 %v1102
    %v1721 = vunpack.c.h.b16 %v1102
    %v1722 = vunpack.c.l.b16 %v1103
    %v1723 = vunpack.c.h.b16 %v1103
    %v1724 = vunpack.c.l.b16 %v1104
    %v1725 = vunpack.c.h.b16 %v1104
    %v1726 = vunpack.c.l.b16 %v1105
    %v1727 = vunpack.c.h.b16 %v1105
    %v1728 = vunpack.c.l.b16 %v1106
    %v1729 = vunpack.c.h.b16 %v1106
    %v1730 = vunpack.c.l.b16 %v1107
    %v1731 = vunpack.c.h.b16 %v1107
    %v1732 = vunpack.c.l.b16 %v1108
    %v1733 = vunpack.c.h.b16 %v1108
    %v1734 = vunpack.c.l.b16 %v1109
    %v1735 = vunpack.c.h.b16 %v1109
    %v1736 = vunpack.c.l.b16 %v1110
    %v1737 = vunpack.c.h.b16 %v1110
    %v1738 = vunpack.c.l.b16 %v1111
    %v1739 = vunpack.c.h.b16 %v1111
    %v1740 = vunpack.c.l.b16 %v1112
    %v1741 = vunpack.c.h.b16 %v1112
    %v1742 = vunpack.c.l.b16 %v1113
    %v1743 = vunpack.c.h.b16 %v1113
    %v1744 = vunpack.c.l.b16 %v1114
    %v1745 = vunpack.c.h.b16 %v1114
    %v1746 = vunpack.c.l.b16 %v1115
    %v1747 = vunpack.c.h.b16 %v1115
    %v1748 = vunpack.c.l.b16 %v1116
    %v1749 = vunpack.c.h.b16 %v1116
    %v1750 = vunpack.c.l.b16 %v1117
    %v1751 = vunpack.c.h.b16 %v1117
    %v1752 = vunpack.c.l.b16 %v1118
    %v1753 = vunpack.c.h.b16 %v1118
    %v1754 = vunpack.c.l.b16 %v1119
    %v1755 = vunpack.c.h.b16 %v1119
    %v1756 = vunpack.c.l.b16 %v1120
    %v1757 = vunpack.c.h.b16 %v1120
    %v1758 = vunpack.c.l.b16 %v1121
    %v1759 = vunpack.c.h.b16 %v1121
    %v1760 = vunpack.c.l.b16 %v1122
    %v1761 = vunpack.c.h.b16 %v1122
    %v1762 = vunpack.c.l.b16 %v1123
    %v1763 = vunpack.c.h.b16 %v1123
    %v1764 = vunpack.c.l.b16 %v1124
    %v1765 = vunpack.c.h.b16 %v1124
    %v1766 = vunpack.c.l.b16 %v1125
    %v1767 = vunpack.c.h.b16 %v1125
    %v1768 = vunpack.c.l.b16 %v1126
    %v1769 = vunpack.c.h.b16 %v1126
    %v1770 = vunpack.c.l.b16 %v1127
    %v1771 = vunpack.c.h.b16 %v1127
    %v1772 = vunpack.c.l.b16 %v1128
    %v1773 = vunpack.c.h.b16 %v1128
    %v1774 = vunpack.c.l.b16 %v1129
    %v1775 = vunpack.c.h.b16 %v1129
    %v1776 = vunpack.c.l.b16 %v1130
    %v1777 = vunpack.c.h.b16 %v1130
    %v1778 = vunpack.c.l.b16 %v1131
    %v1779 = vunpack.c.h.b16 %v1131
    %v1780 = vunpack.c.l.b16 %v1132
    %v1781 = vunpack.c.h.b16 %v1132
    %v1782 = vunpack.c.l.b16 %v1133
    %v1783 = vunpack.c.h.b16 %v1133
    %v1784 = vunpack.c.l.b16 %v1134
    %v1785 = vunpack.c.h.b16 %v1134
    %v1786 = vunpack.c.l.b16 %v1135
    %v1787 = vunpack.c.h.b16 %v1135
    %v1788 = vunpack.c.l.b16 %v1136
    %v1789 = vunpack.c.h.b16 %v1136
    %v1790 = vunpack.c.l.b16 %v1137
    %v1791 = vunpack.c.h.b16 %v1137
    %v1792 = vunpack.c.l.b16 %v1138
    %v1793 = vunpack.c.h.b16 %v1138
    %v1794 = vunpack.c.l.b16 %v1139
    %v1795 = vunpack.c.h.b16 %v1139
    %v1796 = vunpack.c.l.b16 %v1140
    %v1797 = vunpack.c.h.b16 %v1140
    %v1798 = vunpack.c.l.b16 %v1141
    %v1799 = vunpack.c.h.b16 %v1141
    %v1800 = vunpack.c.l.b16 %v1142
    %v1801 = vunpack.c.h.b16 %v1142
    %v1802 = vunpack.c.l.b16 %v1143
    %v1803 = vunpack.c.h.b16 %v1143
    %v1804 = vunpack.c.l.b16 %v1144
    %v1805 = vunpack.c.h.b16 %v1144
    %v1806 = vunpack.c.l.b16 %v1145
    %v1807 = vunpack.c.h.b16 %v1145
    %v1808 = vunpack.c.l.b16 %v1146
    %v1809 = vunpack.c.h.b16 %v1146
    %v1810 = vunpack.c.l.b16 %v1147
    %v1811 = vunpack.c.h.b16 %v1147
    %v1812 = vunpack.c.l.b16 %v1148
    %v1813 = vunpack.c.h.b16 %v1148
    %v1814 = vunpack.c.l.b16 %v1149
    %v1815 = vunpack.c.h.b16 %v1149
    %v1816 = vunpack.c.l.b16 %v1150
    %v1817 = vunpack.c.h.b16 %v1150
    %v1818 = vunpack.c.l.b16 %v1151
    %v1819 = vunpack.c.h.b16 %v1151
    %v1820 = vunpack.c.l.b16 %v1152
    %v1821 = vunpack.c.h.b16 %v1152
    %v1822 = vunpack.c.l.b16 %v1153
    %v1823 = vunpack.c.h.b16 %v1153
    %v1824 = vunpack.c.l.b16 %v1154
    %v1825 = vunpack.c.h.b16 %v1154
    %v1826 = vunpack.c.l.b16 %v1155
    %v1827 = vunpack.c.h.b16 %v1155
    %v1828 = vunpack.c.l.b16 %v1156
    %v1829 = vunpack.c.h.b16 %v1156
    %v1830 = vunpack.c.l.b16 %v1157
    %v1831 = vunpack.c.h.b16 %v1157
    %v1832 = vunpack.c.l.b16 %v1158
    %v1833 = vunpack.c.h.b16 %v1158
    %v1834 = vunpack.c.l.b16 %v1159
    %v1835 = vunpack.c.h.b16 %v1159
    %v1836 = vunpack.c.l.b16 %v1160
    %v1837 = vunpack.c.h.b16 %v1160
    %v1838 = vunpack.c.l.b16 %v1161
    %v1839 = vunpack.c.h.b16 %v1161
    %v1840 = vunpack.c.l.b16 %v1162
    %v1841 = vunpack.c.h.b16 %v1162
    %v1842 = vunpack.c.l.b16 %v1163
    %v1843 = vunpack.c.h.b16 %v1163
    %v1844 = vunpack.c.l.b16 %v1164
    %v1845 = vunpack.c.h.b16 %v1164
    %v1846 = vunpack.c.l.b16 %v1165
    %v1847 = vunpack.c.h.b16 %v1165
    %v1848 = vunpack.c.l.b16 %v1166
    %v1849 = vunpack.c.h.b16 %v1166
    %v1850 = vunpack.c.l.b16 %v1167
    %v1851 = vunpack.c.h.b16 %v1167
    %v1852 = vunpack.c.l.b16 %v1168
    %v1853 = vunpack.c.h.b16 %v1168
    %v1854 = vunpack.c.l.b16 %v1169
    %v1855 = vunpack.c.h.b16 %v1169
    %v1856 = vunpack.c.l.b16 %v1170
    %v1857 = vunpack.c.h.b16 %v1170
    %v1858 = vunpack.c.l.b16 %v1171
    %v1859 = vunpack.c.h.b16 %v1171
    %v1860 = vunpack.c.l.b16 %v1172
    %v1861 = vunpack.c.h.b16 %v1172
    %v1862 = vunpack.c.l.b16 %v1173
    %v1863 = vunpack.c.h.b16 %v1173
    %v1864 = vunpack.c.l.b16 %v1174
    %v1865 = vunpack.c.h.b16 %v1174
    %v1866 = vunpack.c.l.b16 %v1175
    %v1867 = vunpack.c.h.b16 %v1175
    %v1868 = vunpack.c.l.b16 %v1176
    %v1869 = vunpack.c.h.b16 %v1176
    %v1870 = vunpack.c.l.b16 %v1177
    %v1871 = vunpack.c.h.b16 %v1177
    %v1872 = vunpack.c.l.b16 %v1178
    %v1873 = vunpack.c.h.b16 %v1178
    %v1874 = vunpack.c.l.b16 %v1179
    %v1875 = vunpack.c.h.b16 %v1179
    %v1876 = vunpack.c.l.b16 %v1180
    %v1877 = vunpack.c.h.b16 %v1180
    %v1878 = vunpack.c.l.b16 %v1181
    %v1879 = vunpack.c.h.b16 %v1181
    %v1880 = vunpack.c.l.b16 %v1182
    %v1881 = vunpack.c.h.b16 %v1182
    %v1882 = vunpack.c.l.b16 %v1183
    %v1883 = vunpack.c.h.b16 %v1183
    %v1884 = vunpack.c.l.b16 %v1184
    %v1885 = vunpack.c.h.b16 %v1184
    %v1886 = vunpack.c.l.b16 %v1185
    %v1887 = vunpack.c.h.b16 %v1185
    %v1888 = vunpack.c.l.b16 %v1186
    %v1889 = vunpack.c.h.b16 %v1186
    %v1890 = vunpack.c.l.b16 %v1187
    %v1891 = vunpack.c.h.b16 %v1187
    %v1892 = vunpack.c.l.b16 %v1188
    %v1893 = vunpack.c.h.b16 %v1188
    %v1894 = vunpack.c.l.b16 %v1189
    %v1895 = vunpack.c.h.b16 %v1189
    %v1896 = vunpack.c.l.b16 %v1190
    %v1897 = vunpack.c.h.b16 %v1190
    %v1898 = vunpack.c.l.b16 %v1191
    %v1899 = vunpack.c.h.b16 %v1191
    %v1900 = vunpack.c.l.b16 %v1192
    %v1901 = vunpack.c.h.b16 %v1192
    %v1902 = vunpack.c.l.b16 %v1193
    %v1903 = vunpack.c.h.b16 %v1193
    %v1904 = vunpack.c.l.b16 %v1194
    %v1905 = vunpack.c.h.b16 %v1194
    %v1906 = vunpack.c.l.b16 %v1195
    %v1907 = vunpack.c.h.b16 %v1195
    %v1908 = vunpack.c.l.b16 %v1196
    %v1909 = vunpack.c.h.b16 %v1196
    %v1910 = vunpack.c.l.b16 %v1197
    %v1911 = vunpack.c.h.b16 %v1197
    %v1912 = vunpack.c.l.b16 %v1198
    %v1913 = vunpack.c.h.b16 %v1198
    %v1914 = vunpack.c.l.b16 %v1199
    %v1915 = vunpack.c.h.b16 %v1199
    %v1916 = vunpack.c.l.b16 %v1200
    %v1917 = vunpack.c.h.b16 %v1200
    %v1918 = vunpack.c.l.b16 %v1201
    %v1919 = vunpack.c.h.b16 %v1201
    %v1920 = vunpack.c.l.b16 %v1202
    %v1921 = vunpack.c.h.b16 %v1202
    %v1922 = vunpack.c.l.b16 %v1203
    %v1923 = vunpack.c.h.b16 %v1203
    %v1924 = vunpack.c.l.b16 %v1204
    %v1925 = vunpack.c.h.b16 %v1204
    %v1926 = vunpack.c.l.b16 %v1205
    %v1927 = vunpack.c.h.b16 %v1205
    %v1928 = vunpack.c.l.b16 %v1206
    %v1929 = vunpack.c.h.b16 %v1206
    %v1930 = vunpack.c.l.b16 %v1207
    %v1931 = vunpack.c.h.b16 %v1207
    %v1932 = vunpack.c.l.b16 %v1208
    %v1933 = vunpack.c.h.b16 %v1208
    %v1934 = vunpack.c.l.b16 %v1209
    %v1935 = vunpack.c.h.b16 %v1209
    %v1936 = vunpack.c.l.b16 %v1210
    %v1937 = vunpack.c.h.b16 %v1210
    %v1938 = vunpack.c.l.b16 %v1211
    %v1939 = vunpack.c.h.b16 %v1211
    %v1940 = vunpack.c.l.b16 %v1212
    %v1941 = vunpack.c.h.b16 %v1212
    %v1942 = vunpack.c.l.b16 %v1213
    %v1943 = vunpack.c.h.b16 %v1213
    %v1944 = vunpack.c.l.b16 %v1214
    %v1945 = vunpack.c.h.b16 %v1214
    %v1946 = vunpack.c.l.b16 %v1215
    %v1947 = vunpack.c.h.b16 %v1215
    %v1948 = vunpack.c.l.b16 %v1216
    %v1949 = vunpack.c.h.b16 %v1216
    %v1950 = vunpack.c.l.b16 %v1217
    %v1951 = vunpack.c.h.b16 %v1217
    %v1952 = vunpack.c.l.b16 %v1218
    %v1953 = vunpack.c.h.b16 %v1218
    %v1954 = vunpack.c.l.b16 %v1219
    %v1955 = vunpack.c.h.b16 %v1219
    %v1956 = vunpack.c.l.b16 %v1220
    %v1957 = vunpack.c.h.b16 %v1220
    %v1958 = vunpack.c.l.b16 %v1221
    %v1959 = vunpack.c.h.b16 %v1221
    %v1960 = vunpack.c.l.b16 %v1222
    %v1961 = vunpack.c.h.b16 %v1222
    %v1962 = vunpack.c.l.b16 %v1223
    %v1963 = vunpack.c.h.b16 %v1223
    %v1964 = vunpack.c.l.b16 %v1224
    %v1965 = vunpack.c.h.b16 %v1224
    %v1966 = vunpack.c.l.b16 %v1225
    %v1967 = vunpack.c.h.b16 %v1225
    %v1968 = vunpack.c.l.b16 %v1226
    %v1969 = vunpack.c.h.b16 %v1226
    %v1970 = vunpack.c.l.b16 %v1227
    %v1971 = vunpack.c.h.b16 %v1227
    %v1972 = vunpack.c.l.b16 %v1228
    %v1973 = vunpack.c.h.b16 %v1228
    %v1974 = vunpack.c.l.b16 %v1229
    %v1975 = vunpack.c.h.b16 %v1229
    %v1976 = vunpack.c.l.b16 %v1230
    %v1977 = vunpack.c.h.b16 %v1230
    %v1978 = vunpack.c.l.b16 %v1231
    %v1979 = vunpack.c.h.b16 %v1231
    %v1980 = vunpack.c.l.b16 %v1232
    %v1981 = vunpack.c.h.b16 %v1232
    %v1982 = vunpack.c.l.b16 %v1233
    %v1983 = vunpack.c.h.b16 %v1233
    %v1984 = vunpack.c.l.b16 %v1234
    %v1985 = vunpack.c.h.b16 %v1234
    %v1986 = vunpack.c.l.b16 %v1235
    %v1987 = vunpack.c.h.b16 %v1235
    %v1988 = vunpack.c.l.b16 %v1236
    %v1989 = vunpack.c.h.b16 %v1236
    %v1990 = vunpack.c.l.b16 %v1237
    %v1991 = vunpack.c.h.b16 %v1237
    %v1992 = vunpack.c.l.b16 %v1238
    %v1993 = vunpack.c.h.b16 %v1238
    %v1994 = vunpack.c.l.b16 %v1239
    %v1995 = vunpack.c.h.b16 %v1239
    %v1996 = vunpack.c.l.b16 %v1240
    %v1997 = vunpack.c.h.b16 %v1240
    %v1998 = vunpack.c.l.b16 %v1241
    %v1999 = vunpack.c.h.b16 %v1241
    %v2000 = vunpack.c.l.b16 %v1242
    %v2001 = vunpack.c.h.b16 %v1242
    %v2002 = vunpack.c.l.b16 %v1243
    %v2003 = vunpack.c.h.b16 %v1243
    %v2004 = vunpack.c.l.b16 %v1244
    %v2005 = vunpack.c.h.b16 %v1244
    %v2006 = vunpack.c.l.b16 %v1245
    %v2007 = vunpack.c.h.b16 %v1245
    %v2008 = vunpack.c.l.b16 %v1246
    %v2009 = vunpack.c.h.b16 %v1246
    %v2010 = vunpack.c.l.b16 %v1247
    %v2011 = vunpack.c.h.b16 %v1247
    %v2012 = vunpack.c.l.b16 %v1248
    %v2013 = vunpack.c.h.b16 %v1248
    %v2014 = vunpack.c.l.b16 %v1249
    %v2015 = vunpack.c.h.b16 %v1249
    %v2016 = vunpack.c.l.b16 %v1250
    %v2017 = vunpack.c.h.b16 %v1250
    %v2018 = vunpack.c.l.b16 %v1251
    %v2019 = vunpack.c.h.b16 %v1251
    %v2020 = vpack.c.b16 %v1516, %v1508
    %v2021 = vpack.c.b16 %v1517, %v1509
    %v2022 = vpack.c.b16 %v1518, %v1510
    %v2023 = vpack.c.b16 %v1519, %v1511
    %v2024 = vpack.c.b16 %v1520, %v1512
    %v2025 = vpack.c.b16 %v1521, %v1513
    %v2026 = vpack.c.b16 %v1522, %v1514
    %v2027 = vpack.c.b16 %v1523, %v1515
    %v2028 = vpack.c.b16 %v1532, %v1524
    %v2029 = vpack.c.b16 %v1533, %v1525
    %v2030 = vpack.c.b16 %v1534, %v1526
    %v2031 = vpack.c.b16 %v1535, %v1527
    %v2032 = vpack.c.b16 %v1536, %v1528
    %v2033 = vpack.c.b16 %v1537, %v1529
    %v2034 = vpack.c.b16 %v1538, %v1530
    %v2035 = vpack.c.b16 %v1539, %v1531
    %v2036 = vpack.c.b16 %v1548, %v1540
    %v2037 = vpack.c.b16 %v1549, %v1541
    %v2038 = vpack.c.b16 %v1550, %v1542
    %v2039 = vpack.c.b16 %v1551, %v1543
    %v2040 = vpack.c.b16 %v1552, %v1544
    %v2041 = vpack.c.b16 %v1553, %v1545
    %v2042 = vpack.c.b16 %v1554, %v1546
    %v2043 = vpack.c.b16 %v1555, %v1547
    %v2044 = vpack.c.b16 %v1564, %v1556
    %v2045 = vpack.c.b16 %v1565, %v1557
    %v2046 = vpack.c.b16 %v1566, %v1558
    %v2047 = vpack.c.b16 %v1567, %v1559
    %v2048 = vpack.c.b16 %v1568, %v1560
    %v2049 = vpack.c.b16 %v1569, %v1561
    %v2050 = vpack.c.b16 %v1570, %v1562
    %v2051 = vpack.c.b16 %v1571, %v1563
    %v2052 = vpack.c.b16 %v1580, %v1572
    %v2053 = vpack.c.b16 %v1581, %v1573
    %v2054 = vpack.c.b16 %v1582, %v1574
    %v2055 = vpack.c.b16 %v1583, %v1575
    %v2056 = vpack.c.b16 %v1584, %v1576
    %v2057 = vpack.c.b16 %v1585, %v1577
    %v2058 = vpack.c.b16 %v1586, %v1578
    %v2059 = vpack.c.b16 %v1587, %v1579
    %v2060 = vpack.c.b16 %v1596, %v1588
    %v2061 = vpack.c.b16 %v1597, %v1589
    %v2062 = vpack.c.b16 %v1598, %v1590
    %v2063 = vpack.c.b16 %v1599, %v1591
    %v2064 = vpack.c.b16 %v1600, %v1592
    %v2065 = vpack.c.b16 %v1601, %v1593
    %v2066 = vpack.c.b16 %v1602, %v1594
    %v2067 = vpack.c.b16 %v1603, %v1595
    %v2068 = vpack.c.b16 %v1612, %v1604
    %v2069 = vpack.c.b16 %v1613, %v1605
    %v2070 = vpack.c.b16 %v1614, %v1606
    %v2071 = vpack.c.b16 %v1615, %v1607
    %v2072 = vpack.c.b16 %v1616, %v1608
    %v2073 = vpack.c.b16 %v1617, %v1609
    %v2074 = vpack.c.b16 %v1618, %v1610
    %v2075 = vpack.c.b16 %v1619, %v1611
    %v2076 = vpack.c.b16 %v1628, %v1620
    %v2077 = vpack.c.b16 %v1629, %v1621
    %v2078 = vpack.c.b16 %v1630, %v1622
    %v2079 = vpack.c.b16 %v1631, %v1623
    %v2080 = vpack.c.b16 %v1632, %v1624
    %v2081 = vpack.c.b16 %v1633, %v1625
    %v2082 = vpack.c.b16 %v1634, %v1626
    %v2083 = vpack.c.b16 %v1635, %v1627
    %v2084 = vpack.c.b16 %v1644, %v1636
    %v2085 = vpack.c.b16 %v1645, %v1637
    %v2086 = vpack.c.b16 %v1646, %v1638
    %v2087 = vpack.c.b16 %v1647, %v1639
    %v2088 = vpack.c.b16 %v1648, %v1640
    %v2089 = vpack.c.b16 %v1649, %v1641
    %v2090 = vpack.c.b16 %v1650, %v1642
    %v2091 = vpack.c.b16 %v1651, %v1643
    %v2092 = vpack.c.b16 %v1660, %v1652
    %v2093 = vpack.c.b16 %v1661, %v1653
    %v2094 = vpack.c.b16 %v1662, %v1654
    %v2095 = vpack.c.b16 %v1663, %v1655
    %v2096 = vpack.c.b16 %v1664, %v1656
    %v2097 = vpack.c.b16 %v1665, %v1657
    %v2098 = vpack.c.b16 %v1666, %v1658
    %v2099 = vpack.c.b16 %v1667, %v1659
    %v2100 = vpack.c.b16 %v1676, %v1668
    %v2101 = vpack.c.b16 %v1677, %v1669
    %v2102 = vpack.c.b16 %v1678, %v1670
    %v2103 = vpack.c.b16 %v1679, %v1671
    %v2104 = vpack.c.b16 %v1680, %v1672
    %v2105 = vpack.c.b16 %v1681, %v1673
    %v2106 = vpack.c.b16 %v1682, %v1674
    %v2107 = vpack.c.b16 %v1683, %v1675
    %v2108 = vpack.c.b16 %v1692, %v1684
    %v2109 = vpack.c.b16 %v1693, %v1685
    %v2110 = vpack.c.b16 %v1694, %v1686
    %v2111 = vpack.c.b16 %v1695, %v1687
    %v2112 = vpack.c.b16 %v1696, %v1688
    %v2113 = vpack.c.b16 %v1697, %v1689
    %v2114 = vpack.c.b16 %v1698, %v1690
    %v2115 = vpack.c.b16 %v1699, %v1691
    %v2116 = vpack.c.b16 %v1708, %v1700
    %v2117 = vpack.c.b16 %v1709, %v1701
    %v2118 = vpack.c.b16 %v1710, %v1702
    %v2119 = vpack.c.b16 %v1711, %v1703
    %v2120 = vpack.c.b16 %v1712, %v1704
    %v2121 = vpack.c.b16 %v1713, %v1705
    %v2122 = vpack.c.b16 %v1714, %v1706
    %v2123 = vpack.c.b16 %v1715, %v1707
    %v2124 = vpack.c.b16 %v1724, %v1716
    %v2125 = vpack.c.b16 %v1725, %v1717
    %v2126 = vpack.c.b16 %v1726, %v1718
    %v2127 = vpack.c.b16 %v1727, %v1719
    %v2128 = vpack.c.b16 %v1728, %v1720
    %v2129 = vpack.c.b16 %v1729, %v1721
    %v2130 = vpack.c.b16 %v1730, %v1722
    %v2131 = vpack.c.b16 %v1731, %v1723
    %v2132 = vpack.c.b16 %v1740, %v1732
    %v2133 = vpack.c.b16 %v1741, %v1733
    %v2134 = vpack.c.b16 %v1742, %v1734
    %v2135 = vpack.c.b16 %v1743, %v1735
    %v2136 = vpack.c.b16 %v1744, %v1736
    %v2137 = vpack.c.b16 %v1745, %v1737
    %v2138 = vpack.c.b16 %v1746, %v1738
    %v2139 = vpack.c.b16 %v1747, %v1739
    %v2140 = vpack.c.b16 %v1756, %v1748
    %v2141 = vpack.c.b16 %v1757, %v1749
    %v2142 = vpack.c.b16 %v1758, %v1750
    %v2143 = vpack.c.b16 %v1759, %v1751
    %v2144 = vpack.c.b16 %v1760, %v1752
    %v2145 = vpack.c.b16 %v1761, %v1753
    %v2146 = vpack.c.b16 %v1762, %v1754
    %v2147 = vpack.c.b16 %v1763, %v1755
    %v2148 = vpack.c.b16 %v1772, %v1764
    %v2149 = vpack.c.b16 %v1773, %v1765
    %v2150 = vpack.c.b16 %v1774, %v1766
    %v2151 = vpack.c.b16 %v1775, %v1767
    %v2152 = vpack.c.b16 %v1776, %v1768
    %v2153 = vpack.c.b16 %v1777, %v1769
    %v2154 = vpack.c.b16 %v1778, %v1770
    %v2155 = vpack.c.b16 %v1779, %v1771
    %v2156 = vpack.c.b16 %v1788, %v1780
    %v2157 = vpack.c.b16 %v1789, %v1781
    %v2158 = vpack.c.b16 %v1790, %v1782
    %v2159 = vpack.c.b16 %v1791, %v1783
    %v2160 = vpack.c.b16 %v1792, %v1784
    %v2161 = vpack.c.b16 %v1793, %v1785
    %v2162 = vpack.c.b16 %v1794, %v1786
    %v2163 = vpack.c.b16 %v1795, %v1787
    %v2164 = vpack.c.b16 %v1804, %v1796
    %v2165 = vpack.c.b16 %v1805, %v1797
    %v2166 = vpack.c.b16 %v1806, %v1798
    %v2167 = vpack.c.b16 %v1807, %v1799
    %v2168 = vpack.c.b16 %v1808, %v1800
    %v2169 = vpack.c.b16 %v1809, %v1801
    %v2170 = vpack.c.b16 %v1810, %v1802
    %v2171 = vpack.c.b16 %v1811, %v1803
    %v2172 = vpack.c.b16 %v1820, %v1812
    %v2173 = vpack.c.b16 %v1821, %v1813
    %v2174 = vpack.c.b16 %v1822, %v1814
    %v2175 = vpack.c.b16 %v1823, %v1815
    %v2176 = vpack.c.b16 %v1824, %v1816
    %v2177 = vpack.c.b16 %v1825, %v1817
    %v2178 = vpack.c.b16 %v1826, %v1818
    %v2179 = vpack.c.b16 %v1827, %v1819
    %v2180 = vpack.c.b16 %v1836, %v1828
    %v2181 = vpack.c.b16 %v1837, %v1829
    %v2182 = vpack.c.b16 %v1838, %v1830
    %v2183 = vpack.c.b16 %v1839, %v1831
    %v2184 = vpack.c.b16 %v1840, %v1832
    %v2185 = vpack.c.b16 %v1841, %v1833
    %v2186 = vpack.c.b16 %v1842, %v1834
    %v2187 = vpack.c.b16 %v1843, %v1835
    %v2188 = vpack.c.b16 %v1852, %v1844
    %v2189 = vpack.c.b16 %v1853, %v1845
    %v2190 = vpack.c.b16 %v1854, %v1846
    %v2191 = vpack.c.b16 %v1855, %v1847
    %v2192 = vpack.c.b16 %v1856, %v1848
    %v2193 = vpack.c.b16 %v1857, %v1849
    %v2194 = vpack.c.b16 %v1858, %v1850
    %v2195 = vpack.c.b16 %v1859, %v1851
    %v2196 = vpack.c.b16 %v1868, %v1860
    %v2197 = vpack.c.b16 %v1869, %v1861
    %v2198 = vpack.c.b16 %v1870, %v1862
    %v2199 = vpack.c.b16 %v1871, %v1863
    %v2200 = vpack.c.b16 %v1872, %v1864
    %v2201 = vpack.c.b16 %v1873, %v1865
    %v2202 = vpack.c.b16 %v1874, %v1866
    %v2203 = vpack.c.b16 %v1875, %v1867
    %v2204 = vpack.c.b16 %v1884, %v1876
    %v2205 = vpack.c.b16 %v1885, %v1877
    %v2206 = vpack.c.b16 %v1886, %v1878
    %v2207 = vpack.c.b16 %v1887, %v1879
    %v2208 = vpack.c.b16 %v1888, %v1880
    %v2209 = vpack.c.b16 %v1889, %v1881
    %v2210 = vpack.c.b16 %v1890, %v1882
    %v2211 = vpack.c.b16 %v1891, %v1883
    %v2212 = vpack.c.b16 %v1900, %v1892
    %v2213 = vpack.c.b16 %v1901, %v1893
    %v2214 = vpack.c.b16 %v1902, %v1894
    %v2215 = vpack.c.b16 %v1903, %v1895
    %v2216 = vpack.c.b16 %v1904, %v1896
    %v2217 = vpack.c.b16 %v1905, %v1897
    %v2218 = vpack.c.b16 %v1906, %v1898
    %v2219 = vpack.c.b16 %v1907, %v1899
    %v2220 = vpack.c.b16 %v1916, %v1908
    %v2221 = vpack.c.b16 %v1917, %v1909
    %v2222 = vpack.c.b16 %v1918, %v1910
    %v2223 = vpack.c.b16 %v1919, %v1911
    %v2224 = vpack.c.b16 %v1920, %v1912
    %v2225 = vpack.c.b16 %v1921, %v1913
    %v2226 = vpack.c.b16 %v1922, %v1914
    %v2227 = vpack.c.b16 %v1923, %v1915
    %v2228 = vpack.c.b16 %v1932, %v1924
    %v2229 = vpack.c.b16 %v1933, %v1925
    %v2230 = vpack.c.b16 %v1934, %v1926
    %v2231 = vpack.c.b16 %v1935, %v1927
    %v2232 = vpack.c.b16 %v1936, %v1928
    %v2233 = vpack.c.b16 %v1937, %v1929
    %v2234 = vpack.c.b16 %v1938, %v1930
    %v2235 = vpack.c.b16 %v1939, %v1931
    %v2236 = vpack.c.b16 %v1948, %v1940
    %v2237 = vpack.c.b16 %v1949, %v1941
    %v2238 = vpack.c.b16 %v1950, %v1942
    %v2239 = vpack.c.b16 %v1951, %v1943
    %v2240 = vpack.c.b16 %v1952, %v1944
    %v2241 = vpack.c.b16 %v1953, %v1945
    %v2242 = vpack.c.b16 %v1954, %v1946
    %v2243 = vpack.c.b16 %v1955, %v1947
    %v2244 = vpack.c.b16 %v1964, %v1956
    %v2245 = vpack.c.b16 %v1965, %v1957
    %v2246 = vpack.c.b16 %v1966, %v1958
    %v2247 = vpack.c.b16 %v1967, %v1959
    %v2248 = vpack.c.b16 %v1968, %v1960
    %v2249 = vpack.c.b16 %v1969, %v1961
    %v2250 = vpack.c.b16 %v1970, %v1962
    %v2251 = vpack.c.b16 %v1971, %v1963
    %v2252 = vpack.c.b16 %v1980, %v1972
    %v2253 = vpack.c.b16 %v1981, %v1973
    %v2254 = vpack.c.b16 %v1982, %v1974
    %v2255 = vpack.c.b16 %v1983, %v1975
    %v2256 = vpack.c.b16 %v1984, %v1976
    %v2257 = vpack.c.b16 %v1985, %v1977
    %v2258 = vpack.c.b16 %v1986, %v1978
    %v2259 = vpack.c.b16 %v1987, %v1979
    %v2260 = vpack.c.b16 %v1996, %v1988
    %v2261 = vpack.c.b16 %v1997, %v1989
    %v2262 = vpack.c.b16 %v1998, %v1990
    %v2263 = vpack.c.b16 %v1999, %v1991
    %v2264 = vpack.c.b16 %v2000, %v1992
    %v2265 = vpack.c.b16 %v2001, %v1993
    %v2266 = vpack.c.b16 %v2002, %v1994
    %v2267 = vpack.c.b16 %v2003, %v1995
    %v2268 = vpack.c.b16 %v2012, %v2004
    %v2269 = vpack.c.b16 %v2013, %v2005
    %v2270 = vpack.c.b16 %v2014, %v2006
    %v2271 = vpack.c.b16 %v2015, %v2007
    %v2272 = vpack.c.b16 %v2016, %v2008
    %v2273 = vpack.c.b16 %v2017, %v2009
    %v2274 = vpack.c.b16 %v2018, %v2010
    %v2275 = vpack.c.b16 %v2019, %v2011
    %2532 = vmatprep.subr.bf16.mxu0 %v2021
    %2533 = vmatpush1.bf16.msra.mxu0 %v2020
    %2534 = vmatprep.subr.bf16.mxu0 %v2029
    %2535 = vmatpush1.bf16.msra.mxu0 %v2028
    %2536 = vmatprep.subr.bf16.mxu0 %v2037
    %2537 = vmatpush1.bf16.msra.mxu0 %v2036
    %2538 = vmatprep.subr.bf16.mxu0 %v2045
    %2539 = vmatpush1.bf16.msra.mxu0 %v2044
    %2540 = vmatprep.subr.bf16.mxu0 %v2053
    %2541 = vmatpush1.bf16.msra.mxu0 %v2052
    %2542 = vmatprep.subr.bf16.mxu0 %v2061
    %2543 = vmatpush1.bf16.msra.mxu0 %v2060
    %2544 = vmatprep.subr.bf16.mxu0 %v2069
    %2545 = vmatpush1.bf16.msra.mxu0 %v2068
    %2546 = vmatprep.subr.bf16.mxu0 %v2077
    %2547 = vmatpush1.bf16.msra.mxu0 %v2076
    %2548 = vmatprep.subr.bf16.mxu0 %v2085
    %2549 = vmatpush1.bf16.msra.mxu0 %v2084
    %2550 = vmatprep.subr.bf16.mxu0 %v2093
    %2551 = vmatpush1.bf16.msra.mxu0 %v2092
    %2552 = vmatprep.subr.bf16.mxu0 %v2101
    %2553 = vmatpush1.bf16.msra.mxu0 %v2100
    %2554 = vmatprep.subr.bf16.mxu0 %v2109
    %2555 = vmatpush1.bf16.msra.mxu0 %v2108
    %2556 = vmatprep.subr.bf16.mxu0 %v2117
    %2557 = vmatpush1.bf16.msra.mxu0 %v2116
    %2558 = vmatprep.subr.bf16.mxu0 %v2125
    %2559 = vmatpush1.bf16.msra.mxu0 %v2124
    %2560 = vmatprep.subr.bf16.mxu0 %v2133
    %2561 = vmatpush1.bf16.msra.mxu0 %v2132
    %2562 = vmatprep.subr.bf16.mxu0 %v2141
    %2563 = vmatpush1.bf16.msra.mxu0 %v2140
    %2564 = vmatprep.mubr.bf16.mxu0 %v993
    %2565 = vmatmul.mubr.bf16.gmra.mrb[0].mxu0 %v992
    %v2566 = vpop.f32.mrb[0].mxu0
    %v2567 = vadd.f32 0.0, %v2566
    %v2568 = vpop.f32.mrb[0].mxu0
    %v2569 = vadd.f32 0.0, %v2568
    %v2570 = vpop.f32.mrb[0].mxu0
    %v2571 = vpop.f32.mrb[0].mxu0
    %2572 = vdwg.mxu0
    %2573 = vmatprep.subr.bf16.mxu0 %v2149
    %2574 = vmatpush1.bf16.msra.mxu0 %v2148
    %2575 = vmatprep.subr.bf16.mxu0 %v2157
    %2576 = vmatpush1.bf16.msra.mxu0 %v2156
    %2577 = vmatprep.subr.bf16.mxu0 %v2165
    %2578 = vmatpush1.bf16.msra.mxu0 %v2164
    %2579 = vmatprep.subr.bf16.mxu0 %v2173
    %2580 = vmatpush1.bf16.msra.mxu0 %v2172
    %2581 = vmatprep.subr.bf16.mxu0 %v2181
    %2582 = vmatpush1.bf16.msra.mxu0 %v2180
    %2583 = vmatprep.subr.bf16.mxu0 %v2189
    %2584 = vmatpush1.bf16.msra.mxu0 %v2188
    %2585 = vmatprep.subr.bf16.mxu0 %v2197
    %2586 = vmatpush1.bf16.msra.mxu0 %v2196
    %2587 = vmatprep.subr.bf16.mxu0 %v2205
    %2588 = vmatpush1.bf16.msra.mxu0 %v2204
    %2589 = vmatprep.subr.bf16.mxu0 %v2213
    %2590 = vmatpush1.bf16.msra.mxu0 %v2212
    %2591 = vmatprep.subr.bf16.mxu0 %v2221
    %2592 = vmatpush1.bf16.msra.mxu0 %v2220
    %2593 = vmatprep.subr.bf16.mxu0 %v2229
    %2594 = vmatpush1.bf16.msra.mxu0 %v2228
    %2595 = vmatprep.subr.bf16.mxu0 %v2237
    %2596 = vmatpush1.bf16.msra.mxu0 %v2236
    %2597 = vmatprep.subr.bf16.mxu0 %v2245
    %2598 = vmatpush1.bf16.msra.mxu0 %v2244
    %2599 = vmatprep.subr.bf16.mxu0 %v2253
    %2600 = vmatpush1.bf16.msra.mxu0 %v2252
    %2601 = vmatprep.subr.bf16.mxu0 %v2261
    %2602 = vmatpush1.bf16.msra.mxu0 %v2260
    %2603 = vmatprep.subr.bf16.mxu0 %v2269
    %2604 = vmatpush1.bf16.msra.mxu0 %v2268
    %2605 = vmatprep.mubr.bf16.mxu0 %v995
    %2606 = vmatmul.mubr.bf16.gmra.mrb[0].mxu0 %v994
    %v2607 = vpop.f32.mrb[0].mxu0
    %v2608 = vadd.f32 %v2567, %v2607
    %v2609 = vpop.f32.mrb[0].mxu0
    %v2610 = vadd.f32 %v2569, %v2609
    %v2611 = vpop.f32.mrb[0].mxu0
    %v2612 = vpop.f32.mrb[0].mxu0
    %2613 = vdwg.mxu0
    %2614 = vmatprep.subr.bf16.mxu0 %v2023
    %2615 = vmatpush1.bf16.msra.mxu0 %v2022
    %2616 = vmatprep.subr.bf16.mxu0 %v2031
    %2617 = vmatpush1.bf16.msra.mxu0 %v2030
    %2618 = vmatprep.subr.bf16.mxu0 %v2039
    %2619 = vmatpush1.bf16.msra.mxu0 %v2038
    %2620 = vmatprep.subr.bf16.mxu0 %v2047
    %2621 = vmatpush1.bf16.msra.mxu0 %v2046
    %2622 = vmatprep.subr.bf16.mxu0 %v2055
    %2623 = vmatpush1.bf16.msra.mxu0 %v2054
    %2624 = vmatprep.subr.bf16.mxu0 %v2063
    %2625 = vmatpush1.bf16.msra.mxu0 %v2062
    %2626 = vmatprep.subr.bf16.mxu0 %v2071
    %2627 = vmatpush1.bf16.msra.mxu0 %v2070
    %2628 = vmatprep.subr.bf16.mxu0 %v2079
    %2629 = vmatpush1.bf16.msra.mxu0 %v2078
    %2630 = vmatprep.subr.bf16.mxu0 %v2087
    %2631 = vmatpush1.bf16.msra.mxu0 %v2086
    %2632 = vmatprep.subr.bf16.mxu0 %v2095
    %2633 = vmatpush1.bf16.msra.mxu0 %v2094
    %2634 = vmatprep.subr.bf16.mxu0 %v2103
    %2635 = vmatpush1.bf16.msra.mxu0 %v2102
    %2636 = vmatprep.subr.bf16.mxu0 %v2111
    %2637 = vmatpush1.bf16.msra.mxu0 %v2110
    %2638 = vmatprep.subr.bf16.mxu0 %v2119
    %2639 = vmatpush1.bf16.msra.mxu0 %v2118
    %2640 = vmatprep.subr.bf16.mxu0 %v2127
    %2641 = vmatpush1.bf16.msra.mxu0 %v2126
    %2642 = vmatprep.subr.bf16.mxu0 %v2135
    %2643 = vmatpush1.bf16.msra.mxu0 %v2134
    %2644 = vmatprep.subr.bf16.mxu0 %v2143
    %2645 = vmatpush1.bf16.msra.mxu0 %v2142
    %2646 = vmatprep.mubr.bf16.mxu0 %v993
    %2647 = vmatmul.mubr.bf16.gmra.mrb[0].mxu0 %v992
    %v2648 = vpop.f32.mrb[0].mxu0
    %v2649 = vadd.f32 0.0, %v2648
    %v2650 = vpop.f32.mrb[0].mxu0
    %v2651 = vadd.f32 0.0, %v2650
    %v2652 = vpop.f32.mrb[0].mxu0
    %v2653 = vpop.f32.mrb[0].mxu0
    %2654 = vdwg.mxu0
    %2655 = vmatprep.subr.bf16.mxu0 %v2151
    %2656 = vmatpush1.bf16.msra.mxu0 %v2150
    %2657 = vmatprep.subr.bf16.mxu0 %v2159
    %2658 = vmatpush1.bf16.msra.mxu0 %v2158
    %2659 = vmatprep.subr.bf16.mxu0 %v2167
    %2660 = vmatpush1.bf16.msra.mxu0 %v2166
    %2661 = vmatprep.subr.bf16.mxu0 %v2175
    %2662 = vmatpush1.bf16.msra.mxu0 %v2174
    %2663 = vmatprep.subr.bf16.mxu0 %v2183
    %2664 = vmatpush1.bf16.msra.mxu0 %v2182
    %2665 = vmatprep.subr.bf16.mxu0 %v2191
    %2666 = vmatpush1.bf16.msra.mxu0 %v2190
    %2667 = vmatprep.subr.bf16.mxu0 %v2199
    %2668 = vmatpush1.bf16.msra.mxu0 %v2198
    %2669 = vmatprep.subr.bf16.mxu0 %v2207
    %2670 = vmatpush1.bf16.msra.mxu0 %v2206
    %2671 = vmatprep.subr.bf16.mxu0 %v2215
    %2672 = vmatpush1.bf16.msra.mxu0 %v2214
    %2673 = vmatprep.subr.bf16.mxu0 %v2223
    %2674 = vmatpush1.bf16.msra.mxu0 %v2222
    %2675 = vmatprep.subr.bf16.mxu0 %v2231
    %2676 = vmatpush1.bf16.msra.mxu0 %v2230
    %2677 = vmatprep.subr.bf16.mxu0 %v2239
    %2678 = vmatpush1.bf16.msra.mxu0 %v2238
    %2679 = vmatprep.subr.bf16.mxu0 %v2247
    %2680 = vmatpush1.bf16.msra.mxu0 %v2246
    %2681 = vmatprep.subr.bf16.mxu0 %v2255
    %2682 = vmatpush1.bf16.msra.mxu0 %v2254
    %2683 = vmatprep.subr.bf16.mxu0 %v2263
    %2684 = vmatpush1.bf16.msra.mxu0 %v2262
    %2685 = vmatprep.subr.bf16.mxu0 %v2271
    %2686 = vmatpush1.bf16.msra.mxu0 %v2270
    %2687 = vmatprep.mubr.bf16.mxu0 %v995
    %2688 = vmatmul.mubr.bf16.gmra.mrb[0].mxu0 %v994
    %v2689 = vpop.f32.mrb[0].mxu0
    %v2690 = vadd.f32 %v2649, %v2689
    %v2691 = vpop.f32.mrb[0].mxu0
    %v2692 = vadd.f32 %v2651, %v2691
    %v2693 = vpop.f32.mrb[0].mxu0
    %v2694 = vpop.f32.mrb[0].mxu0
    %2695 = vdwg.mxu0
    %2696 = vmatprep.subr.bf16.mxu0 %v2025
    %2697 = vmatpush1.bf16.msra.mxu0 %v2024
    %2698 = vmatprep.subr.bf16.mxu0 %v2033
    %2699 = vmatpush1.bf16.msra.mxu0 %v2032
    %2700 = vmatprep.subr.bf16.mxu0 %v2041
    %2701 = vmatpush1.bf16.msra.mxu0 %v2040
    %2702 = vmatprep.subr.bf16.mxu0 %v2049
    %2703 = vmatpush1.bf16.msra.mxu0 %v2048
    %2704 = vmatprep.subr.bf16.mxu0 %v2057
    %2705 = vmatpush1.bf16.msra.mxu0 %v2056
    %2706 = vmatprep.subr.bf16.mxu0 %v2065
    %2707 = vmatpush1.bf16.msra.mxu0 %v2064
    %2708 = vmatprep.subr.bf16.mxu0 %v2073
    %2709 = vmatpush1.bf16.msra.mxu0 %v2072
    %2710 = vmatprep.subr.bf16.mxu0 %v2081
    %2711 = vmatpush1.bf16.msra.mxu0 %v2080
    %2712 = vmatprep.subr.bf16.mxu0 %v2089
    %2713 = vmatpush1.bf16.msra.mxu0 %v2088
    %2714 = vmatprep.subr.bf16.mxu0 %v2097
    %2715 = vmatpush1.bf16.msra.mxu0 %v2096
    %2716 = vmatprep.subr.bf16.mxu0 %v2105
    %2717 = vmatpush1.bf16.msra.mxu0 %v2104
    %2718 = vmatprep.subr.bf16.mxu0 %v2113
    %2719 = vmatpush1.bf16.msra.mxu0 %v2112
    %2720 = vmatprep.subr.bf16.mxu0 %v2121
    %2721 = vmatpush1.bf16.msra.mxu0 %v2120
    %2722 = vmatprep.subr.bf16.mxu0 %v2129
    %2723 = vmatpush1.bf16.msra.mxu0 %v2128
    %2724 = vmatprep.subr.bf16.mxu0 %v2137
    %2725 = vmatpush1.bf16.msra.mxu0 %v2136
    %2726 = vmatprep.subr.bf16.mxu0 %v2145
    %2727 = vmatpush1.bf16.msra.mxu0 %v2144
    %2728 = vmatprep.mubr.bf16.mxu0 %v993
    %2729 = vmatmul.mubr.bf16.gmra.mrb[0].mxu0 %v992
    %v2730 = vpop.f32.mrb[0].mxu0
    %v2731 = vadd.f32 0.0, %v2730
    %v2732 = vpop.f32.mrb[0].mxu0
    %v2733 = vadd.f32 0.0, %v2732
    %v2734 = vpop.f32.mrb[0].mxu0
    %v2735 = vpop.f32.mrb[0].mxu0
    %2736 = vdwg.mxu0
    %2737 = vmatprep.subr.bf16.mxu0 %v2153
    %2738 = vmatpush1.bf16.msra.mxu0 %v2152
    %2739 = vmatprep.subr.bf16.mxu0 %v2161
    %2740 = vmatpush1.bf16.msra.mxu0 %v2160
    %2741 = vmatprep.subr.bf16.mxu0 %v2169
    %2742 = vmatpush1.bf16.msra.mxu0 %v2168
    %2743 = vmatprep.subr.bf16.mxu0 %v2177
    %2744 = vmatpush1.bf16.msra.mxu0 %v2176
    %2745 = vmatprep.subr.bf16.mxu0 %v2185
    %2746 = vmatpush1.bf16.msra.mxu0 %v2184
    %2747 = vmatprep.subr.bf16.mxu0 %v2193
    %2748 = vmatpush1.bf16.msra.mxu0 %v2192
    %2749 = vmatprep.subr.bf16.mxu0 %v2201
    %2750 = vmatpush1.bf16.msra.mxu0 %v2200
    %2751 = vmatprep.subr.bf16.mxu0 %v2209
    %2752 = vmatpush1.bf16.msra.mxu0 %v2208
    %2753 = vmatprep.subr.bf16.mxu0 %v2217
    %2754 = vmatpush1.bf16.msra.mxu0 %v2216
    %2755 = vmatprep.subr.bf16.mxu0 %v2225
    %2756 = vmatpush1.bf16.msra.mxu0 %v2224
    %2757 = vmatprep.subr.bf16.mxu0 %v2233
    %2758 = vmatpush1.bf16.msra.mxu0 %v2232
    %2759 = vmatprep.subr.bf16.mxu0 %v2241
    %2760 = vmatpush1.bf16.msra.mxu0 %v2240
    %2761 = vmatprep.subr.bf16.mxu0 %v2249
    %2762 = vmatpush1.bf16.msra.mxu0 %v2248
    %2763 = vmatprep.subr.bf16.mxu0 %v2257
    %2764 = vmatpush1.bf16.msra.mxu0 %v2256
    %2765 = vmatprep.subr.bf16.mxu0 %v2265
    %2766 = vmatpush1.bf16.msra.mxu0 %v2264
    %2767 = vmatprep.subr.bf16.mxu0 %v2273
    %2768 = vmatpush1.bf16.msra.mxu0 %v2272
    %2769 = vmatprep.mubr.bf16.mxu0 %v995
    %2770 = vmatmul.mubr.bf16.gmra.mrb[0].mxu0 %v994
    %v2771 = vpop.f32.mrb[0].mxu0
    %v2772 = vadd.f32 %v2731, %v2771
    %v2773 = vpop.f32.mrb[0].mxu0
    %v2774 = vadd.f32 %v2733, %v2773
    %v2775 = vpop.f32.mrb[0].mxu0
    %v2776 = vpop.f32.mrb[0].mxu0
    %2777 = vdwg.mxu0
    %2778 = vmatprep.subr.bf16.mxu0 %v2027
    %2779 = vmatpush1.bf16.msra.mxu0 %v2026
    %2780 = vmatprep.subr.bf16.mxu0 %v2035
    %2781 = vmatpush1.bf16.msra.mxu0 %v2034
    %2782 = vmatprep.subr.bf16.mxu0 %v2043
    %2783 = vmatpush1.bf16.msra.mxu0 %v2042
    %2784 = vmatprep.subr.bf16.mxu0 %v2051
    %2785 = vmatpush1.bf16.msra.mxu0 %v2050
    %2786 = vmatprep.subr.bf16.mxu0 %v2059
    %2787 = vmatpush1.bf16.msra.mxu0 %v2058
    %2788 = vmatprep.subr.bf16.mxu0 %v2067
    %2789 = vmatpush1.bf16.msra.mxu0 %v2066
    %2790 = vmatprep.subr.bf16.mxu0 %v2075
    %2791 = vmatpush1.bf16.msra.mxu0 %v2074
    %2792 = vmatprep.subr.bf16.mxu0 %v2083
    %2793 = vmatpush1.bf16.msra.mxu0 %v2082
    %2794 = vmatprep.subr.bf16.mxu0 %v2091
    %2795 = vmatpush1.bf16.msra.mxu0 %v2090
    %2796 = vmatprep.subr.bf16.mxu0 %v2099
    %2797 = vmatpush1.bf16.msra.mxu0 %v2098
    %2798 = vmatprep.subr.bf16.mxu0 %v2107
    %2799 = vmatpush1.bf16.msra.mxu0 %v2106
    %2800 = vmatprep.subr.bf16.mxu0 %v2115
    %2801 = vmatpush1.bf16.msra.mxu0 %v2114
    %2802 = vmatprep.subr.bf16.mxu0 %v2123
    %2803 = vmatpush1.bf16.msra.mxu0 %v2122
    %2804 = vmatprep.subr.bf16.mxu0 %v2131
    %2805 = vmatpush1.bf16.msra.mxu0 %v2130
    %2806 = vmatprep.subr.bf16.mxu0 %v2139
    %2807 = vmatpush1.bf16.msra.mxu0 %v2138
    %2808 = vmatprep.subr.bf16.mxu0 %v2147
    %2809 = vmatpush1.bf16.msra.mxu0 %v2146
    %2810 = vmatprep.mubr.bf16.mxu0 %v993
    %2811 = vmatmul.mubr.bf16.gmra.mrb[0].mxu0 %v992
    %v2812 = vpop.f32.mrb[0].mxu0
    %v2813 = vadd.f32 0.0, %v2812
    %v2814 = vpop.f32.mrb[0].mxu0
    %v2815 = vadd.f32 0.0, %v2814
    %v2816 = vpop.f32.mrb[0].mxu0
    %v2817 = vpop.f32.mrb[0].mxu0
    %2818 = vdwg.mxu0
    %2819 = vmatprep.subr.bf16.mxu0 %v2155
    %2820 = vmatpush1.bf16.msra.mxu0 %v2154
    %2821 = vmatprep.subr.bf16.mxu0 %v2163
    %2822 = vmatpush1.bf16.msra.mxu0 %v2162
    %2823 = vmatprep.subr.bf16.mxu0 %v2171
    %2824 = vmatpush1.bf16.msra.mxu0 %v2170
    %2825 = vmatprep.subr.bf16.mxu0 %v2179
    %2826 = vmatpush1.bf16.msra.mxu0 %v2178
    %2827 = vmatprep.subr.bf16.mxu0 %v2187
    %2828 = vmatpush1.bf16.msra.mxu0 %v2186
    %2829 = vmatprep.subr.bf16.mxu0 %v2195
    %2830 = vmatpush1.bf16.msra.mxu0 %v2194
    %2831 = vmatprep.subr.bf16.mxu0 %v2203
    %2832 = vmatpush1.bf16.msra.mxu0 %v2202
    %2833 = vmatprep.subr.bf16.mxu0 %v2211
    %2834 = vmatpush1.bf16.msra.mxu0 %v2210
    %2835 = vmatprep.subr.bf16.mxu0 %v2219
    %2836 = vmatpush1.bf16.msra.mxu0 %v2218
    %2837 = vmatprep.subr.bf16.mxu0 %v2227
    %2838 = vmatpush1.bf16.msra.mxu0 %v2226
    %2839 = vmatprep.subr.bf16.mxu0 %v2235
    %2840 = vmatpush1.bf16.msra.mxu0 %v2234
    %2841 = vmatprep.subr.bf16.mxu0 %v2243
    %2842 = vmatpush1.bf16.msra.mxu0 %v2242
    %2843 = vmatprep.subr.bf16.mxu0 %v2251
    %2844 = vmatpush1.bf16.msra.mxu0 %v2250
    %2845 = vmatprep.subr.bf16.mxu0 %v2259
    %2846 = vmatpush1.bf16.msra.mxu0 %v2258
    %2847 = vmatprep.subr.bf16.mxu0 %v2267
    %2848 = vmatpush1.bf16.msra.mxu0 %v2266
    %2849 = vmatprep.subr.bf16.mxu0 %v2275
    %2850 = vmatpush1.bf16.msra.mxu0 %v2274
    %2851 = vmatprep.mubr.bf16.mxu0 %v995
    %2852 = vmatmul.mubr.bf16.gmra.mrb[0].mxu0 %v994
    %v2853 = vpop.f32.mrb[0].mxu0
    %v2854 = vadd.f32 %v2813, %v2853
    %v2855 = vpop.f32.mrb[0].mxu0
    %v2856 = vadd.f32 %v2815, %v2855
    %v2857 = vpop.f32.mrb[0].mxu0
    %v2858 = vpop.f32.mrb[0].mxu0
    %2859 = vdwg.mxu0
    %v2860 = vrot.slane %v2608, 4
    %v2861 = vadd.f32 %v2608, %v2860
    %v2862 = vrot.slane %v2861, 2
    %v2863 = vadd.f32 %v2861, %v2862
    %v2864 = vrot.slane %v2863, 1
    %v2865 = vadd.f32 %v2863, %v2864
    %v2866 = vrot.slane %v2610, 4
    %v2867 = vadd.f32 %v2610, %v2866
    %v2868 = vrot.slane %v2867, 2
    %v2869 = vadd.f32 %v2867, %v2868
    %v2870 = vrot.slane %v2869, 1
    %v2871 = vadd.f32 %v2869, %v2870
    %v2872 = vrot.slane %v2690, 4
    %v2873 = vadd.f32 %v2690, %v2872
    %v2874 = vrot.slane %v2873, 2
    %v2875 = vadd.f32 %v2873, %v2874
    %v2876 = vrot.slane %v2875, 1
    %v2877 = vadd.f32 %v2875, %v2876
    %v2878 = vrot.slane %v2692, 4
    %v2879 = vadd.f32 %v2692, %v2878
    %v2880 = vrot.slane %v2879, 2
    %v2881 = vadd.f32 %v2879, %v2880
    %v2882 = vrot.slane %v2881, 1
    %v2883 = vadd.f32 %v2881, %v2882
    %v2884 = vrot.slane %v2772, 4
    %v2885 = vadd.f32 %v2772, %v2884
    %v2886 = vrot.slane %v2885, 2
    %v2887 = vadd.f32 %v2885, %v2886
    %v2888 = vrot.slane %v2887, 1
    %v2889 = vadd.f32 %v2887, %v2888
    %v2890 = vrot.slane %v2774, 4
    %v2891 = vadd.f32 %v2774, %v2890
    %v2892 = vrot.slane %v2891, 2
    %v2893 = vadd.f32 %v2891, %v2892
    %v2894 = vrot.slane %v2893, 1
    %v2895 = vadd.f32 %v2893, %v2894
    %v2896 = vrot.slane %v2854, 4
    %v2897 = vadd.f32 %v2854, %v2896
    %v2898 = vrot.slane %v2897, 2
    %v2899 = vadd.f32 %v2897, %v2898
    %v2900 = vrot.slane %v2899, 1
    %v2901 = vadd.f32 %v2899, %v2900
    %v2902 = vrot.slane %v2856, 4
    %v2903 = vadd.f32 %v2856, %v2902
    %v2904 = vrot.slane %v2903, 2
    %v2905 = vadd.f32 %v2903, %v2904
    %v2906 = vrot.slane %v2905, 1
    %v2907 = vadd.f32 %v2905, %v2906
    %v2908 = vmul.f32 %v2865, %v811
    %v2909 = vmul.f32 %v2871, %v811
    %v2910 = vmul.f32 %v2877, %v811
    %v2911 = vmul.f32 %v2883, %v811
    %v2912 = vmul.f32 %v2889, %v811
    %v2913 = vmul.f32 %v2895, %v811
    %v2914 = vmul.f32 %v2901, %v811
    %v2915 = vmul.f32 %v2907, %v811
    %v2916 = vmul.f32 %v2608, %v2608
    %v2917 = vmul.f32 %v2610, %v2610
    %v2918 = vmul.f32 %v2690, %v2690
    %v2919 = vmul.f32 %v2692, %v2692
    %v2920 = vmul.f32 %v2772, %v2772
    %v2921 = vmul.f32 %v2774, %v2774
    %v2922 = vmul.f32 %v2854, %v2854
    %v2923 = vmul.f32 %v2856, %v2856
    %v2924 = vrot.slane %v2916, 4
    %v2925 = vadd.f32 %v2916, %v2924
    %v2926 = vrot.slane %v2925, 2
    %v2927 = vadd.f32 %v2925, %v2926
    %v2928 = vrot.slane %v2927, 1
    %v2929 = vadd.f32 %v2927, %v2928
    %v2930 = vrot.slane %v2917, 4
    %v2931 = vadd.f32 %v2917, %v2930
    %v2932 = vrot.slane %v2931, 2
    %v2933 = vadd.f32 %v2931, %v2932
    %v2934 = vrot.slane %v2933, 1
    %v2935 = vadd.f32 %v2933, %v2934
    %v2936 = vrot.slane %v2918, 4
    %v2937 = vadd.f32 %v2918, %v2936
    %v2938 = vrot.slane %v2937, 2
    %v2939 = vadd.f32 %v2937, %v2938
    %v2940 = vrot.slane %v2939, 1
    %v2941 = vadd.f32 %v2939, %v2940
    %v2942 = vrot.slane %v2919, 4
    %v2943 = vadd.f32 %v2919, %v2942
    %v2944 = vrot.slane %v2943, 2
    %v2945 = vadd.f32 %v2943, %v2944
    %v2946 = vrot.slane %v2945, 1
    %v2947 = vadd.f32 %v2945, %v2946
    %v2948 = vrot.slane %v2920, 4
    %v2949 = vadd.f32 %v2920, %v2948
    %v2950 = vrot.slane %v2949, 2
    %v2951 = vadd.f32 %v2949, %v2950
    %v2952 = vrot.slane %v2951, 1
    %v2953 = vadd.f32 %v2951, %v2952
    %v2954 = vrot.slane %v2921, 4
    %v2955 = vadd.f32 %v2921, %v2954
    %v2956 = vrot.slane %v2955, 2
    %v2957 = vadd.f32 %v2955, %v2956
    %v2958 = vrot.slane %v2957, 1
    %v2959 = vadd.f32 %v2957, %v2958
    %v2960 = vrot.slane %v2922, 4
    %v2961 = vadd.f32 %v2922, %v2960
    %v2962 = vrot.slane %v2961, 2
    %v2963 = vadd.f32 %v2961, %v2962
    %v2964 = vrot.slane %v2963, 1
    %v2965 = vadd.f32 %v2963, %v2964
    %v2966 = vrot.slane %v2923, 4
    %v2967 = vadd.f32 %v2923, %v2966
    %v2968 = vrot.slane %v2967, 2
    %v2969 = vadd.f32 %v2967, %v2968
    %v2970 = vrot.slane %v2969, 1
    %v2971 = vadd.f32 %v2969, %v2970
    %v2972 = vmul.f32 %v2929, %v811
    %v2973 = vmul.f32 %v2935, %v811
    %v2974 = vmul.f32 %v2941, %v811
    %v2975 = vmul.f32 %v2947, %v811
    %v2976 = vmul.f32 %v2953, %v811
    %v2977 = vmul.f32 %v2959, %v811
    %v2978 = vmul.f32 %v2965, %v811
    %v2979 = vmul.f32 %v2971, %v811
    %v2980 = vmul.f32 %v2908, %v2908
    %v2981 = vmul.f32 %v2909, %v2909
    %v2982 = vmul.f32 %v2910, %v2910
    %v2983 = vmul.f32 %v2911, %v2911
    %v2984 = vmul.f32 %v2912, %v2912
    %v2985 = vmul.f32 %v2913, %v2913
    %v2986 = vmul.f32 %v2914, %v2914
    %v2987 = vmul.f32 %v2915, %v2915
    %v2988 = vsub.f32 %v2972, %v2980
    %v2989 = vsub.f32 %v2973, %v2981
    %v2990 = vsub.f32 %v2974, %v2982
    %v2991 = vsub.f32 %v2975, %v2983
    %v2992 = vsub.f32 %v2976, %v2984
    %v2993 = vsub.f32 %v2977, %v2985
    %v2994 = vsub.f32 %v2978, %v2986
    %v2995 = vsub.f32 %v2979, %v2987
    %v2996 = vld [vmem:[#allocation12] sm:$0xff]
    %v2997 = vadd.f32 %v2988, 1e-05
    %v2998 = vadd.f32 %v2989, 1e-05
    %v2999 = vadd.f32 %v2990, 1e-05
    %v3000 = vadd.f32 %v2991, 1e-05
    %v3001 = vadd.f32 %v2992, 1e-05
    %v3002 = vadd.f32 %v2993, 1e-05
    %v3003 = vadd.f32 %v2994, 1e-05
    %v3004 = vadd.f32 %v2995, 1e-05
    %v3005 = vrsqrt.pop %v2997
    %v3006 = vrsqrt.pop %v2998
    %v3007 = vrsqrt.pop %v2999
    %v3008 = vrsqrt.pop %v3000
    %v3009 = vrsqrt.pop %v3001
    %v3010 = vrsqrt.pop %v3002
    %v3011 = vrsqrt.pop %v3003
    %v3012 = vrsqrt.pop %v3004
    %v3021 = vcombine.low %v3005, %v3006
    %v3022 = vcombine.low %v3007, %v3008
    %v3023 = vcombine.low %v3009, %v3010
    %v3024 = vcombine.low %v3011, %v3012
    %v3026 = vunpack.c.l.s4 1966171168
    %v3027 = vunpack.c.0.s8 %v3026
    %v3028 = vlaneseq
    %v3029 = vshrl.u32 %v3028, 7
    %v3030 = vsub.s32 %v3027, %v3029
    %v3031 = vrot.slane %v3021, %v3030
    %v3033 = vunpack.c.l.s4 1966171168
    %v3034 = vunpack.c.0.s8 %v3033
    %v3035 = vlaneseq
    %v3036 = vshrl.u32 %v3035, 7
    %v3037 = vsub.s32 %v3034, %v3036
    %v3038 = vrot.slane %v3022, %v3037
    %v3040 = vunpack.c.l.s4 1966171168
    %v3041 = vunpack.c.0.s8 %v3040
    %v3042 = vlaneseq
    %v3043 = vshrl.u32 %v3042, 7
    %v3044 = vsub.s32 %v3041, %v3043
    %v3045 = vrot.slane %v3023, %v3044
    %v3047 = vunpack.c.l.s4 1966171168
    %v3048 = vunpack.c.0.s8 %v3047
    %v3049 = vlaneseq
    %v3050 = vshrl.u32 %v3049, 7
    %v3051 = vsub.s32 %v3048, %v3050
    %v3052 = vrot.slane %v3024, %v3051
    %v3053 = vcombine.low %v3031, %v3038
    %v3054 = vcombine.low %v3045, %v3052
    %v3056 = vunpack.c.l.s4 1966171168
    %v3057 = vunpack.c.0.s8 %v3056
    %v3058 = vlaneseq
    %v3059 = vshrl.u32 %v3058, 7
    %v3060 = vsub.s32 %v3057, %v3059
    %v3061 = vrot.slane %v3053, %v3060
    %v3063 = vunpack.c.l.s4 1966171168
    %v3064 = vunpack.c.0.s8 %v3063
    %v3065 = vlaneseq
    %v3066 = vshrl.u32 %v3065, 7
    %v3067 = vsub.s32 %v3064, %v3066
    %v3068 = vrot.slane %v3054, %v3067
    %v3069 = vcombine.low %v3061, %v3068
    %v3071 = vmul.f32 %v2996, %v3069
    %v3073 = vlaneseq
    %v3074 = vshrl.u32 %v3073, 7
    %v3075 = vsub.s32 0, %v3074
    %v3076 = vrot.slane %v3071, %v3075
    %v3077 = vlaneseq
    %v3078 = vshrl.u32 %v3077, 7
    %v3079 = vsub.s32 1, %v3078
    %v3080 = vrot.slane %v3071, %v3079
    %v3081 = vlaneseq
    %v3082 = vshrl.u32 %v3081, 7
    %v3083 = vsub.s32 2, %v3082
    %v3084 = vrot.slane %v3071, %v3083
    %v3085 = vlaneseq
    %v3086 = vshrl.u32 %v3085, 7
    %v3087 = vsub.s32 3, %v3086
    %v3088 = vrot.slane %v3071, %v3087
    %v3089 = vlaneseq
    %v3090 = vshrl.u32 %v3089, 7
    %v3091 = vsub.s32 4, %v3090
    %v3092 = vrot.slane %v3071, %v3091
    %v3093 = vlaneseq
    %v3094 = vshrl.u32 %v3093, 7
    %v3095 = vsub.s32 5, %v3094
    %v3096 = vrot.slane %v3071, %v3095
    %v3097 = vlaneseq
    %v3098 = vshrl.u32 %v3097, 7
    %v3099 = vsub.s32 6, %v3098
    %v3100 = vrot.slane %v3071, %v3099
    %v3101 = vlaneseq
    %v3102 = vshrl.u32 %v3101, 7
    %v3103 = vsub.s32 7, %v3102
    %v3104 = vrot.slane %v3071, %v3103
    %v3113 = vmul.f32 %v2608, %v3076
    %v3114 = vmul.f32 %v2610, %v3080
    %v3115 = vmul.f32 %v2690, %v3084
    %v3116 = vmul.f32 %v2692, %v3088
    %v3117 = vmul.f32 %v2772, %v3092
    %v3118 = vmul.f32 %v2774, %v3096
    %v3119 = vmul.f32 %v2854, %v3100
    %v3120 = vmul.f32 %v2856, %v3104
    %v3121 = vld [vmem:[#allocation13] sm:$0xff]
    %v3122 = vmul.f32 %v2908, %v3076
    %v3123 = vmul.f32 %v2909, %v3080
    %v3124 = vmul.f32 %v2910, %v3084
    %v3125 = vmul.f32 %v2911, %v3088
    %v3126 = vmul.f32 %v2912, %v3092
    %v3127 = vmul.f32 %v2913, %v3096
    %v3128 = vmul.f32 %v2914, %v3100
    %v3129 = vmul.f32 %v2915, %v3104
    %v3138 = vcombine.low %v3122, %v3123
    %v3139 = vcombine.low %v3124, %v3125
    %v3140 = vcombine.low %v3126, %v3127
    %v3141 = vcombine.low %v3128, %v3129
    %v3143 = vunpack.c.l.s4 1966171168
    %v3144 = vunpack.c.0.s8 %v3143
    %v3145 = vlaneseq
    %v3146 = vshrl.u32 %v3145, 7
    %v3147 = vsub.s32 %v3144, %v3146
    %v3148 = vrot.slane %v3138, %v3147
    %v3150 = vunpack.c.l.s4 1966171168
    %v3151 = vunpack.c.0.s8 %v3150
    %v3152 = vlaneseq
    %v3153 = vshrl.u32 %v3152, 7
    %v3154 = vsub.s32 %v3151, %v3153
    %v3155 = vrot.slane %v3139, %v3154
    %v3157 = vunpack.c.l.s4 1966171168
    %v3158 = vunpack.c.0.s8 %v3157
    %v3159 = vlaneseq
    %v3160 = vshrl.u32 %v3159, 7
    %v3161 = vsub.s32 %v3158, %v3160
    %v3162 = vrot.slane %v3140, %v3161
    %v3164 = vunpack.c.l.s4 1966171168
    %v3165 = vunpack.c.0.s8 %v3164
    %v3166 = vlaneseq
    %v3167 = vshrl.u32 %v3166, 7
    %v3168 = vsub.s32 %v3165, %v3167
    %v3169 = vrot.slane %v3141, %v3168
    %v3170 = vcombine.low %v3148, %v3155
    %v3171 = vcombine.low %v3162, %v3169
    %v3173 = vunpack.c.l.s4 1966171168
    %v3174 = vunpack.c.0.s8 %v3173
    %v3175 = vlaneseq
    %v3176 = vshrl.u32 %v3175, 7
    %v3177 = vsub.s32 %v3174, %v3176
    %v3178 = vrot.slane %v3170, %v3177
    %v3180 = vunpack.c.l.s4 1966171168
    %v3181 = vunpack.c.0.s8 %v3180
    %v3182 = vlaneseq
    %v3183 = vshrl.u32 %v3182, 7
    %v3184 = vsub.s32 %v3181, %v3183
    %v3185 = vrot.slane %v3171, %v3184
    %v3186 = vcombine.low %v3178, %v3185
    %v3188 = vsub.f32 %v3121, %v3186
    %v3190 = vlaneseq
    %v3191 = vshrl.u32 %v3190, 7
    %v3192 = vsub.s32 0, %v3191
    %v3193 = vrot.slane %v3188, %v3192
    %v3194 = vlaneseq
    %v3195 = vshrl.u32 %v3194, 7
    %v3196 = vsub.s32 1, %v3195
    %v3197 = vrot.slane %v3188, %v3196
    %v3198 = vlaneseq
    %v3199 = vshrl.u32 %v3198, 7
    %v3200 = vsub.s32 2, %v3199
    %v3201 = vrot.slane %v3188, %v3200
    %v3202 = vlaneseq
    %v3203 = vshrl.u32 %v3202, 7
    %v3204 = vsub.s32 3, %v3203
    %v3205 = vrot.slane %v3188, %v3204
    %v3206 = vlaneseq
    %v3207 = vshrl.u32 %v3206, 7
    %v3208 = vsub.s32 4, %v3207
    %v3209 = vrot.slane %v3188, %v3208
    %v3210 = vlaneseq
    %v3211 = vshrl.u32 %v3210, 7
    %v3212 = vsub.s32 5, %v3211
    %v3213 = vrot.slane %v3188, %v3212
    %v3214 = vlaneseq
    %v3215 = vshrl.u32 %v3214, 7
    %v3216 = vsub.s32 6, %v3215
    %v3217 = vrot.slane %v3188, %v3216
    %v3218 = vlaneseq
    %v3219 = vshrl.u32 %v3218, 7
    %v3220 = vsub.s32 7, %v3219
    %v3221 = vrot.slane %v3188, %v3220
    %v3230 = vadd.f32 %v3113, %v3193
    %v3231 = vadd.f32 %v3114, %v3197
    %v3232 = vadd.f32 %v3115, %v3201
    %v3233 = vadd.f32 %v3116, %v3205
    %v3234 = vadd.f32 %v3117, %v3209
    %v3235 = vadd.f32 %v3118, %v3213
    %v3236 = vadd.f32 %v3119, %v3217
    %v3237 = vadd.f32 %v3120, %v3221
    %vm3238 = vcmp.ge.f32.partialorder %v3230, 0.0
    %vm3239 = vcmp.ge.f32.partialorder %v3231, 0.0
    %vm3240 = vcmp.ge.f32.partialorder %v3232, 0.0
    %vm3241 = vcmp.ge.f32.partialorder %v3233, 0.0
    %vm3242 = vcmp.ge.f32.partialorder %v3234, 0.0
    %vm3243 = vcmp.ge.f32.partialorder %v3235, 0.0
    %vm3244 = vcmp.ge.f32.partialorder %v3236, 0.0
    %vm3245 = vcmp.ge.f32.partialorder %v3237, 0.0
    %v3246 = vmul.f32 %v3230, 0.2
    %v3247 = vmul.f32 %v3231, 0.2
    %v3248 = vmul.f32 %v3232, 0.2
    %v3249 = vmul.f32 %v3233, 0.2
    %v3250 = vmul.f32 %v3234, 0.2
    %v3251 = vmul.f32 %v3235, 0.2
    %v3252 = vmul.f32 %v3236, 0.2
    %v3253 = vmul.f32 %v3237, 0.2
    %v3254 = vsel %vm3238, %v3230, %v3246
    %v3255 = vsel %vm3239, %v3231, %v3247
    %v3256 = vsel %vm3240, %v3232, %v3248
    %v3257 = vsel %vm3241, %v3233, %v3249
    %v3258 = vsel %vm3242, %v3234, %v3250
    %v3259 = vsel %vm3243, %v3235, %v3251
    %v3260 = vsel %vm3244, %v3236, %v3252
    %v3261 = vsel %vm3245, %v3237, %v3253
    %v3262 = vpack.c.bf16 %v3254, %v3254
    %v3263 = vpack.c.bf16 %v3255, %v3255
    %v3264 = vpack.c.bf16 %v3256, %v3256
    %v3265 = vpack.c.bf16 %v3257, %v3257
    %v3266 = vpack.c.bf16 %v3258, %v3258
    %v3267 = vpack.c.bf16 %v3259, %v3259
    %v3268 = vpack.c.bf16 %v3260, %v3260
    %v3269 = vpack.c.bf16 %v3261, %v3261
    %v3270 = vld [vmem:[#allocation15] sm:$0xff]
    %v3271 = vld [vmem:[#allocation15 + $0x8] sm:$0xff]
    %v3272 = vld [vmem:[#allocation15 + $0x10] sm:$0xff]
    %v3273 = vld [vmem:[#allocation15 + $0x18] sm:$0xf]
    %v3274 = vld [vmem:[#allocation15 + $0x1c] sm:$0xff]
    %v3275 = vld [vmem:[#allocation15 + $0x24] sm:$0xff]
    %v3276 = vld [vmem:[#allocation15 + $0x2c] sm:$0xff]
    %v3277 = vld [vmem:[#allocation15 + $0x34] sm:$0xf]
    %v3278 = vld [vmem:[#allocation15 + $0x38] sm:$0xff]
    %v3279 = vld [vmem:[#allocation15 + $0x40] sm:$0xff]
    %v3280 = vld [vmem:[#allocation15 + $0x48] sm:$0xff]
    %v3281 = vld [vmem:[#allocation15 + $0x50] sm:$0xf]
    %v3282 = vld [vmem:[#allocation15 + $0x54] sm:$0xff]
    %v3283 = vld [vmem:[#allocation15 + $0x5c] sm:$0xff]
    %v3284 = vld [vmem:[#allocation15 + $0x64] sm:$0xff]
    %v3285 = vld [vmem:[#allocation15 + $0x6c] sm:$0xf]
    %v3286 = vld [vmem:[#allocation15 + $0x70] sm:$0xff]
    %v3287 = vld [vmem:[#allocation15 + $0x78] sm:$0xff]
    %v3288 = vld [vmem:[#allocation15 + $0x80] sm:$0xff]
    %v3289 = vld [vmem:[#allocation15 + $0x88] sm:$0xf]
    %v3290 = vld [vmem:[#allocation15 + $0x8c] sm:$0xff]
    %v3291 = vld [vmem:[#allocation15 + $0x94] sm:$0xff]
    %v3292 = vld [vmem:[#allocation15 + $0x9c] sm:$0xff]
    %v3293 = vld [vmem:[#allocation15 + $0xa4] sm:$0xf]
    %v3294 = vld [vmem:[#allocation15 + $0xa8] sm:$0xff]
    %v3295 = vld [vmem:[#allocation15 + $0xb0] sm:$0xff]
    %v3296 = vld [vmem:[#allocation15 + $0xb8] sm:$0xff]
    %v3297 = vld [vmem:[#allocation15 + $0xc0] sm:$0xf]
    %v3298 = vld [vmem:[#allocation15 + $0xc4] sm:$0xff]
    %v3299 = vld [vmem:[#allocation15 + $0xcc] sm:$0xff]
    %v3300 = vld [vmem:[#allocation15 + $0xd4] sm:$0xff]
    %v3301 = vld [vmem:[#allocation15 + $0xdc] sm:$0xf]
    %v3302 = vld [vmem:[#allocation15 + $0xe0] sm:$0xff]
    %v3303 = vld [vmem:[#allocation15 + $0xe8] sm:$0xff]
    %v3304 = vld [vmem:[#allocation15 + $0xf0] sm:$0xff]
    %v3305 = vld [vmem:[#allocation15 + $0xf8] sm:$0xf]
    %v3306 = vld [vmem:[#allocation15 + $0xfc] sm:$0xff]
    %v3307 = vld [vmem:[#allocation15 + $0x104] sm:$0xff]
    %v3308 = vld [vmem:[#allocation15 + $0x10c] sm:$0xff]
    %v3309 = vld [vmem:[#allocation15 + $0x114] sm:$0xf]
    %v3310 = vld [vmem:[#allocation15 + $0x118] sm:$0xff]
    %v3311 = vld [vmem:[#allocation15 + $0x120] sm:$0xff]
    %v3312 = vld [vmem:[#allocation15 + $0x128] sm:$0xff]
    %v3313 = vld [vmem:[#allocation15 + $0x130] sm:$0xf]
    %v3314 = vld [vmem:[#allocation15 + $0x134] sm:$0xff]
    %v3315 = vld [vmem:[#allocation15 + $0x13c] sm:$0xff]
    %v3316 = vld [vmem:[#allocation15 + $0x144] sm:$0xff]
    %v3317 = vld [vmem:[#allocation15 + $0x14c] sm:$0xf]
    %v3318 = vld [vmem:[#allocation15 + $0x150] sm:$0xff]
    %v3319 = vld [vmem:[#allocation15 + $0x158] sm:$0xff]
    %v3320 = vld [vmem:[#allocation15 + $0x160] sm:$0xff]
    %v3321 = vld [vmem:[#allocation15 + $0x168] sm:$0xf]
    %v3322 = vld [vmem:[#allocation15 + $0x16c] sm:$0xff]
    %v3323 = vld [vmem:[#allocation15 + $0x174] sm:$0xff]
    %v3324 = vld [vmem:[#allocation15 + $0x17c] sm:$0xff]
    %v3325 = vld [vmem:[#allocation15 + $0x184] sm:$0xf]
    %v3326 = vld [vmem:[#allocation15 + $0x188] sm:$0xff]
    %v3327 = vld [vmem:[#allocation15 + $0x190] sm:$0xff]
    %v3328 = vld [vmem:[#allocation15 + $0x198] sm:$0xff]
    %v3329 = vld [vmem:[#allocation15 + $0x1a0] sm:$0xf]
    %v3330 = vld [vmem:[#allocation15 + $0x1a4] sm:$0xff]
    %v3331 = vld [vmem:[#allocation15 + $0x1ac] sm:$0xff]
    %v3332 = vld [vmem:[#allocation15 + $0x1b4] sm:$0xff]
    %v3333 = vld [vmem:[#allocation15 + $0x1bc] sm:$0xf]
    %v3334 = vld [vmem:[#allocation15 + $0x1c0] sm:$0xff]
    %v3335 = vld [vmem:[#allocation15 + $0x1c8] sm:$0xff]
    %v3336 = vld [vmem:[#allocation15 + $0x1d0] sm:$0xff]
    %v3337 = vld [vmem:[#allocation15 + $0x1d8] sm:$0xf]
    %v3338 = vld [vmem:[#allocation15 + $0x1dc] sm:$0xff]
    %v3339 = vld [vmem:[#allocation15 + $0x1e4] sm:$0xff]
    %v3340 = vld [vmem:[#allocation15 + $0x1ec] sm:$0xff]
    %v3341 = vld [vmem:[#allocation15 + $0x1f4] sm:$0xf]
    %v3342 = vld [vmem:[#allocation15 + $0x1f8] sm:$0xff]
    %v3343 = vld [vmem:[#allocation15 + $0x200] sm:$0xff]
    %v3344 = vld [vmem:[#allocation15 + $0x208] sm:$0xff]
    %v3345 = vld [vmem:[#allocation15 + $0x210] sm:$0xf]
    %v3346 = vld [vmem:[#allocation15 + $0x214] sm:$0xff]
    %v3347 = vld [vmem:[#allocation15 + $0x21c] sm:$0xff]
    %v3348 = vld [vmem:[#allocation15 + $0x224] sm:$0xff]
    %v3349 = vld [vmem:[#allocation15 + $0x22c] sm:$0xf]
    %v3350 = vld [vmem:[#allocation15 + $0x230] sm:$0xff]
    %v3351 = vld [vmem:[#allocation15 + $0x238] sm:$0xff]
    %v3352 = vld [vmem:[#allocation15 + $0x240] sm:$0xff]
    %v3353 = vld [vmem:[#allocation15 + $0x248] sm:$0xf]
    %v3354 = vld [vmem:[#allocation15 + $0x24c] sm:$0xff]
    %v3355 = vld [vmem:[#allocation15 + $0x254] sm:$0xff]
    %v3356 = vld [vmem:[#allocation15 + $0x25c] sm:$0xff]
    %v3357 = vld [vmem:[#allocation15 + $0x264] sm:$0xf]
    %v3358 = vld [vmem:[#allocation15 + $0x268] sm:$0xff]
    %v3359 = vld [vmem:[#allocation15 + $0x270] sm:$0xff]
    %v3360 = vld [vmem:[#allocation15 + $0x278] sm:$0xff]
    %v3361 = vld [vmem:[#allocation15 + $0x280] sm:$0xf]
    %v3362 = vld [vmem:[#allocation15 + $0x284] sm:$0xff]
    %v3363 = vld [vmem:[#allocation15 + $0x28c] sm:$0xff]
    %v3364 = vld [vmem:[#allocation15 + $0x294] sm:$0xff]
    %v3365 = vld [vmem:[#allocation15 + $0x29c] sm:$0xf]
    %v3366 = vld [vmem:[#allocation15 + $0x2a0] sm:$0xff]
    %v3367 = vld [vmem:[#allocation15 + $0x2a8] sm:$0xff]
    %v3368 = vld [vmem:[#allocation15 + $0x2b0] sm:$0xff]
    %v3369 = vld [vmem:[#allocation15 + $0x2b8] sm:$0xf]
    %v3370 = vld [vmem:[#allocation15 + $0x2bc] sm:$0xff]
    %v3371 = vld [vmem:[#allocation15 + $0x2c4] sm:$0xff]
    %v3372 = vld [vmem:[#allocation15 + $0x2cc] sm:$0xff]
    %v3373 = vld [vmem:[#allocation15 + $0x2d4] sm:$0xf]
    %v3374 = vld [vmem:[#allocation15 + $0x2d8] sm:$0xff]
    %v3375 = vld [vmem:[#allocation15 + $0x2e0] sm:$0xff]
    %v3376 = vld [vmem:[#allocation15 + $0x2e8] sm:$0xff]
    %v3377 = vld [vmem:[#allocation15 + $0x2f0] sm:$0xf]
    %v3378 = vld [vmem:[#allocation15 + $0x2f4] sm:$0xff]
    %v3379 = vld [vmem:[#allocation15 + $0x2fc] sm:$0xff]
    %v3380 = vld [vmem:[#allocation15 + $0x304] sm:$0xff]
    %v3381 = vld [vmem:[#allocation15 + $0x30c] sm:$0xf]
    %v3382 = vld [vmem:[#allocation15 + $0x310] sm:$0xff]
    %v3383 = vld [vmem:[#allocation15 + $0x318] sm:$0xff]
    %v3384 = vld [vmem:[#allocation15 + $0x320] sm:$0xff]
    %v3385 = vld [vmem:[#allocation15 + $0x328] sm:$0xf]
    %v3386 = vld [vmem:[#allocation15 + $0x32c] sm:$0xff]
    %v3387 = vld [vmem:[#allocation15 + $0x334] sm:$0xff]
    %v3388 = vld [vmem:[#allocation15 + $0x33c] sm:$0xff]
    %v3389 = vld [vmem:[#allocation15 + $0x344] sm:$0xf]
    %v3390 = vld [vmem:[#allocation15 + $0x348] sm:$0xff]
    %v3391 = vld [vmem:[#allocation15 + $0x350] sm:$0xff]
    %v3392 = vld [vmem:[#allocation15 + $0x358] sm:$0xff]
    %v3393 = vld [vmem:[#allocation15 + $0x360] sm:$0xf]
    %v3394 = vld [vmem:[#allocation15 + $0x364] sm:$0xff]
    %v3395 = vld [vmem:[#allocation15 + $0x36c] sm:$0xff]
    %v3396 = vld [vmem:[#allocation15 + $0x374] sm:$0xff]
    %v3397 = vld [vmem:[#allocation15 + $0x37c] sm:$0xf]
    %v3398 = vld [vmem:[#allocation15 + $0x380] sm:$0xff]
    %v3399 = vld [vmem:[#allocation15 + $0x388] sm:$0xff]
    %v3400 = vld [vmem:[#allocation15 + $0x390] sm:$0xff]
    %v3401 = vld [vmem:[#allocation15 + $0x398] sm:$0xf]
    %v3402 = vld [vmem:[#allocation15 + $0x39c] sm:$0xff]
    %v3403 = vld [vmem:[#allocation15 + $0x3a4] sm:$0xff]
    %v3404 = vld [vmem:[#allocation15 + $0x3ac] sm:$0xff]
    %v3405 = vld [vmem:[#allocation15 + $0x3b4] sm:$0xf]
    %v3406 = vld [vmem:[#allocation15 + $0x3b8] sm:$0xff]
    %v3407 = vld [vmem:[#allocation15 + $0x3c0] sm:$0xff]
    %v3408 = vld [vmem:[#allocation15 + $0x3c8] sm:$0xff]
    %v3409 = vld [vmem:[#allocation15 + $0x3d0] sm:$0xf]
    %v3410 = vld [vmem:[#allocation15 + $0x3d4] sm:$0xff]
    %v3411 = vld [vmem:[#allocation15 + $0x3dc] sm:$0xff]
    %v3412 = vld [vmem:[#allocation15 + $0x3e4] sm:$0xff]
    %v3413 = vld [vmem:[#allocation15 + $0x3ec] sm:$0xf]
    %v3414 = vld [vmem:[#allocation15 + $0x3f0] sm:$0xff]
    %v3415 = vld [vmem:[#allocation15 + $0x3f8] sm:$0xff]
    %v3416 = vld [vmem:[#allocation15 + $0x400] sm:$0xff]
    %v3417 = vld [vmem:[#allocation15 + $0x408] sm:$0xf]
    %v3418 = vld [vmem:[#allocation15 + $0x40c] sm:$0xff]
    %v3419 = vld [vmem:[#allocation15 + $0x414] sm:$0xff]
    %v3420 = vld [vmem:[#allocation15 + $0x41c] sm:$0xff]
    %v3421 = vld [vmem:[#allocation15 + $0x424] sm:$0xf]
    %v3422 = vld [vmem:[#allocation15 + $0x428] sm:$0xff]
    %v3423 = vld [vmem:[#allocation15 + $0x430] sm:$0xff]
    %v3424 = vld [vmem:[#allocation15 + $0x438] sm:$0xff]
    %v3425 = vld [vmem:[#allocation15 + $0x440] sm:$0xf]
    %v3426 = vld [vmem:[#allocation15 + $0x444] sm:$0xff]
    %v3427 = vld [vmem:[#allocation15 + $0x44c] sm:$0xff]
    %v3428 = vld [vmem:[#allocation15 + $0x454] sm:$0xff]
    %v3429 = vld [vmem:[#allocation15 + $0x45c] sm:$0xf]
    %v3430 = vld [vmem:[#allocation15 + $0x460] sm:$0xff]
    %v3431 = vld [vmem:[#allocation15 + $0x468] sm:$0xff]
    %v3432 = vld [vmem:[#allocation15 + $0x470] sm:$0xff]
    %v3433 = vld [vmem:[#allocation15 + $0x478] sm:$0xf]
    %v3434 = vld [vmem:[#allocation15 + $0x47c] sm:$0xff]
    %v3435 = vld [vmem:[#allocation15 + $0x484] sm:$0xff]
    %v3436 = vld [vmem:[#allocation15 + $0x48c] sm:$0xff]
    %v3437 = vld [vmem:[#allocation15 + $0x494] sm:$0xf]
    %v3438 = vld [vmem:[#allocation15 + $0x498] sm:$0xff]
    %v3439 = vld [vmem:[#allocation15 + $0x4a0] sm:$0xff]
    %v3440 = vld [vmem:[#allocation15 + $0x4a8] sm:$0xff]
    %v3441 = vld [vmem:[#allocation15 + $0x4b0] sm:$0xf]
    %v3442 = vld [vmem:[#allocation15 + $0x4b4] sm:$0xff]
    %v3443 = vld [vmem:[#allocation15 + $0x4bc] sm:$0xff]
    %v3444 = vld [vmem:[#allocation15 + $0x4c4] sm:$0xff]
    %v3445 = vld [vmem:[#allocation15 + $0x4cc] sm:$0xf]
    %v3446 = vld [vmem:[#allocation15 + $0x4d0] sm:$0xff]
    %v3447 = vld [vmem:[#allocation15 + $0x4d8] sm:$0xff]
    %v3448 = vld [vmem:[#allocation15 + $0x4e0] sm:$0xff]
    %v3449 = vld [vmem:[#allocation15 + $0x4e8] sm:$0xf]
    %v3450 = vld [vmem:[#allocation15 + $0x4ec] sm:$0xff]
    %v3451 = vld [vmem:[#allocation15 + $0x4f4] sm:$0xff]
    %v3452 = vld [vmem:[#allocation15 + $0x4fc] sm:$0xff]
    %v3453 = vld [vmem:[#allocation15 + $0x504] sm:$0xf]
    %v3454 = vld [vmem:[#allocation15 + $0x508] sm:$0xff]
    %v3455 = vld [vmem:[#allocation15 + $0x510] sm:$0xff]
    %v3456 = vld [vmem:[#allocation15 + $0x518] sm:$0xff]
    %v3457 = vld [vmem:[#allocation15 + $0x520] sm:$0xf]
    %v3458 = vld [vmem:[#allocation15 + $0x524] sm:$0xff]
    %v3459 = vld [vmem:[#allocation15 + $0x52c] sm:$0xff]
    %v3460 = vld [vmem:[#allocation15 + $0x534] sm:$0xff]
    %v3461 = vld [vmem:[#allocation15 + $0x53c] sm:$0xf]
    %v3462 = vld [vmem:[#allocation15 + $0x540] sm:$0xff]
    %v3463 = vld [vmem:[#allocation15 + $0x548] sm:$0xff]
    %v3464 = vld [vmem:[#allocation15 + $0x550] sm:$0xff]
    %v3465 = vld [vmem:[#allocation15 + $0x558] sm:$0xf]
    %v3466 = vld [vmem:[#allocation15 + $0x55c] sm:$0xff]
    %v3467 = vld [vmem:[#allocation15 + $0x564] sm:$0xff]
    %v3468 = vld [vmem:[#allocation15 + $0x56c] sm:$0xff]
    %v3469 = vld [vmem:[#allocation15 + $0x574] sm:$0xf]
    %v3470 = vld [vmem:[#allocation15 + $0x578] sm:$0xff]
    %v3471 = vld [vmem:[#allocation15 + $0x580] sm:$0xff]
    %v3472 = vld [vmem:[#allocation15 + $0x588] sm:$0xff]
    %v3473 = vld [vmem:[#allocation15 + $0x590] sm:$0xf]
    %v3474 = vld [vmem:[#allocation15 + $0x594] sm:$0xff]
    %v3475 = vld [vmem:[#allocation15 + $0x59c] sm:$0xff]
    %v3476 = vld [vmem:[#allocation15 + $0x5a4] sm:$0xff]
    %v3477 = vld [vmem:[#allocation15 + $0x5ac] sm:$0xf]
    %v3478 = vld [vmem:[#allocation15 + $0x5b0] sm:$0xff]
    %v3479 = vld [vmem:[#allocation15 + $0x5b8] sm:$0xff]
    %v3480 = vld [vmem:[#allocation15 + $0x5c0] sm:$0xff]
    %v3481 = vld [vmem:[#allocation15 + $0x5c8] sm:$0xf]
    %v3482 = vld [vmem:[#allocation15 + $0x5cc] sm:$0xff]
    %v3483 = vld [vmem:[#allocation15 + $0x5d4] sm:$0xff]
    %v3484 = vld [vmem:[#allocation15 + $0x5dc] sm:$0xff]
    %v3485 = vld [vmem:[#allocation15 + $0x5e4] sm:$0xf]
    %v3486 = vld [vmem:[#allocation15 + $0x5e8] sm:$0xff]
    %v3487 = vld [vmem:[#allocation15 + $0x5f0] sm:$0xff]
    %v3488 = vld [vmem:[#allocation15 + $0x5f8] sm:$0xff]
    %v3489 = vld [vmem:[#allocation15 + $0x600] sm:$0xf]
    %v3490 = vld [vmem:[#allocation15 + $0x604] sm:$0xff]
    %v3491 = vld [vmem:[#allocation15 + $0x60c] sm:$0xff]
    %v3492 = vld [vmem:[#allocation15 + $0x614] sm:$0xff]
    %v3493 = vld [vmem:[#allocation15 + $0x61c] sm:$0xf]
    %v3494 = vld [vmem:[#allocation15 + $0x620] sm:$0xff]
    %v3495 = vld [vmem:[#allocation15 + $0x628] sm:$0xff]
    %v3496 = vld [vmem:[#allocation15 + $0x630] sm:$0xff]
    %v3497 = vld [vmem:[#allocation15 + $0x638] sm:$0xf]
    %v3498 = vld [vmem:[#allocation15 + $0x63c] sm:$0xff]
    %v3499 = vld [vmem:[#allocation15 + $0x644] sm:$0xff]
    %v3500 = vld [vmem:[#allocation15 + $0x64c] sm:$0xff]
    %v3501 = vld [vmem:[#allocation15 + $0x654] sm:$0xf]
    %v3502 = vld [vmem:[#allocation15 + $0x658] sm:$0xff]
    %v3503 = vld [vmem:[#allocation15 + $0x660] sm:$0xff]
    %v3504 = vld [vmem:[#allocation15 + $0x668] sm:$0xff]
    %v3505 = vld [vmem:[#allocation15 + $0x670] sm:$0xf]
    %v3506 = vld [vmem:[#allocation15 + $0x674] sm:$0xff]
    %v3507 = vld [vmem:[#allocation15 + $0x67c] sm:$0xff]
    %v3508 = vld [vmem:[#allocation15 + $0x684] sm:$0xff]
    %v3509 = vld [vmem:[#allocation15 + $0x68c] sm:$0xf]
    %v3510 = vld [vmem:[#allocation15 + $0x690] sm:$0xff]
    %v3511 = vld [vmem:[#allocation15 + $0x698] sm:$0xff]
    %v3512 = vld [vmem:[#allocation15 + $0x6a0] sm:$0xff]
    %v3513 = vld [vmem:[#allocation15 + $0x6a8] sm:$0xf]
    %v3514 = vld [vmem:[#allocation15 + $0x6ac] sm:$0xff]
    %v3515 = vld [vmem:[#allocation15 + $0x6b4] sm:$0xff]
    %v3516 = vld [vmem:[#allocation15 + $0x6bc] sm:$0xff]
    %v3517 = vld [vmem:[#allocation15 + $0x6c4] sm:$0xf]
    %v3518 = vld [vmem:[#allocation15 + $0x6c8] sm:$0xff]
    %v3519 = vld [vmem:[#allocation15 + $0x6d0] sm:$0xff]
    %v3520 = vld [vmem:[#allocation15 + $0x6d8] sm:$0xff]
    %v3521 = vld [vmem:[#allocation15 + $0x6e0] sm:$0xf]
    %v3522 = vld [vmem:[#allocation15 + $0x6e4] sm:$0xff]
    %v3523 = vld [vmem:[#allocation15 + $0x6ec] sm:$0xff]
    %v3524 = vld [vmem:[#allocation15 + $0x6f4] sm:$0xff]
    %v3525 = vld [vmem:[#allocation15 + $0x6fc] sm:$0xf]
    %v3526 = vld [vmem:[#allocation15 + $0x700] sm:$0xff]
    %v3527 = vld [vmem:[#allocation15 + $0x708] sm:$0xff]
    %v3528 = vld [vmem:[#allocation15 + $0x710] sm:$0xff]
    %v3529 = vld [vmem:[#allocation15 + $0x718] sm:$0xf]
    %v3530 = vld [vmem:[#allocation15 + $0x71c] sm:$0xff]
    %v3531 = vld [vmem:[#allocation15 + $0x724] sm:$0xff]
    %v3532 = vld [vmem:[#allocation15 + $0x72c] sm:$0xff]
    %v3533 = vld [vmem:[#allocation15 + $0x734] sm:$0xf]
    %v3534 = vld [vmem:[#allocation15 + $0x738] sm:$0xff]
    %v3535 = vld [vmem:[#allocation15 + $0x740] sm:$0xff]
    %v3536 = vld [vmem:[#allocation15 + $0x748] sm:$0xff]
    %v3537 = vld [vmem:[#allocation15 + $0x750] sm:$0xf]
    %v3538 = vld [vmem:[#allocation15 + $0x754] sm:$0xff]
    %v3539 = vld [vmem:[#allocation15 + $0x75c] sm:$0xff]
    %v3540 = vld [vmem:[#allocation15 + $0x764] sm:$0xff]
    %v3541 = vld [vmem:[#allocation15 + $0x76c] sm:$0xf]
    %v3542 = vld [vmem:[#allocation15 + $0x770] sm:$0xff]
    %v3543 = vld [vmem:[#allocation15 + $0x778] sm:$0xff]
    %v3544 = vld [vmem:[#allocation15 + $0x780] sm:$0xff]
    %v3545 = vld [vmem:[#allocation15 + $0x788] sm:$0xf]
    %v3546 = vld [vmem:[#allocation15 + $0x78c] sm:$0xff]
    %v3547 = vld [vmem:[#allocation15 + $0x794] sm:$0xff]
    %v3548 = vld [vmem:[#allocation15 + $0x79c] sm:$0xff]
    %v3549 = vld [vmem:[#allocation15 + $0x7a4] sm:$0xf]
    %v3550 = vld [vmem:[#allocation15 + $0x7a8] sm:$0xff]
    %v3551 = vld [vmem:[#allocation15 + $0x7b0] sm:$0xff]
    %v3552 = vld [vmem:[#allocation15 + $0x7b8] sm:$0xff]
    %v3553 = vld [vmem:[#allocation15 + $0x7c0] sm:$0xf]
    %v3554 = vld [vmem:[#allocation15 + $0x7c4] sm:$0xff]
    %v3555 = vld [vmem:[#allocation15 + $0x7cc] sm:$0xff]
    %v3556 = vld [vmem:[#allocation15 + $0x7d4] sm:$0xff]
    %v3557 = vld [vmem:[#allocation15 + $0x7dc] sm:$0xf]
    %v3558 = vld [vmem:[#allocation15 + $0x7e0] sm:$0xff]
    %v3559 = vld [vmem:[#allocation15 + $0x7e8] sm:$0xff]
    %v3560 = vld [vmem:[#allocation15 + $0x7f0] sm:$0xff]
    %v3561 = vld [vmem:[#allocation15 + $0x7f8] sm:$0xf]
    %v3562 = vld [vmem:[#allocation15 + $0x7fc] sm:$0xff]
    %v3563 = vld [vmem:[#allocation15 + $0x804] sm:$0xff]
    %v3564 = vld [vmem:[#allocation15 + $0x80c] sm:$0xff]
    %v3565 = vld [vmem:[#allocation15 + $0x814] sm:$0xf]
    %v3566 = vld [vmem:[#allocation15 + $0x818] sm:$0xff]
    %v3567 = vld [vmem:[#allocation15 + $0x820] sm:$0xff]
    %v3568 = vld [vmem:[#allocation15 + $0x828] sm:$0xff]
    %v3569 = vld [vmem:[#allocation15 + $0x830] sm:$0xf]
    %v3570 = vld [vmem:[#allocation15 + $0x834] sm:$0xff]
    %v3571 = vld [vmem:[#allocation15 + $0x83c] sm:$0xff]
    %v3572 = vld [vmem:[#allocation15 + $0x844] sm:$0xff]
    %v3573 = vld [vmem:[#allocation15 + $0x84c] sm:$0xf]
    %v3574 = vld [vmem:[#allocation15 + $0x850] sm:$0xff]
    %v3575 = vld [vmem:[#allocation15 + $0x858] sm:$0xff]
    %v3576 = vld [vmem:[#allocation15 + $0x860] sm:$0xff]
    %v3577 = vld [vmem:[#allocation15 + $0x868] sm:$0xf]
    %v3578 = vld [vmem:[#allocation15 + $0x86c] sm:$0xff]
    %v3579 = vld [vmem:[#allocation15 + $0x874] sm:$0xff]
    %v3580 = vld [vmem:[#allocation15 + $0x87c] sm:$0xff]
    %v3581 = vld [vmem:[#allocation15 + $0x884] sm:$0xf]
    %v3582 = vld [vmem:[#allocation15 + $0x888] sm:$0xff]
    %v3583 = vld [vmem:[#allocation15 + $0x890] sm:$0xff]
    %v3584 = vld [vmem:[#allocation15 + $0x898] sm:$0xff]
    %v3585 = vld [vmem:[#allocation15 + $0x8a0] sm:$0xf]
    %v3586 = vld [vmem:[#allocation15 + $0x8a4] sm:$0xff]
    %v3587 = vld [vmem:[#allocation15 + $0x8ac] sm:$0xff]
    %v3588 = vld [vmem:[#allocation15 + $0x8b4] sm:$0xff]
    %v3589 = vld [vmem:[#allocation15 + $0x8bc] sm:$0xf]
    %v3590 = vld [vmem:[#allocation15 + $0x8c0] sm:$0xff]
    %v3591 = vld [vmem:[#allocation15 + $0x8c8] sm:$0xff]
    %v3592 = vld [vmem:[#allocation15 + $0x8d0] sm:$0xff]
    %v3593 = vld [vmem:[#allocation15 + $0x8d8] sm:$0xf]
    %v3594 = vld [vmem:[#allocation15 + $0x8dc] sm:$0xff]
    %v3595 = vld [vmem:[#allocation15 + $0x8e4] sm:$0xff]
    %v3596 = vld [vmem:[#allocation15 + $0x8ec] sm:$0xff]
    %v3597 = vld [vmem:[#allocation15 + $0x8f4] sm:$0xf]
    %v3598 = vld [vmem:[#allocation15 + $0x8f8] sm:$0xff]
    %v3599 = vld [vmem:[#allocation15 + $0x900] sm:$0xff]
    %v3600 = vld [vmem:[#allocation15 + $0x908] sm:$0xff]
    %v3601 = vld [vmem:[#allocation15 + $0x910] sm:$0xf]
    %v3602 = vld [vmem:[#allocation15 + $0x914] sm:$0xff]
    %v3603 = vld [vmem:[#allocation15 + $0x91c] sm:$0xff]
    %v3604 = vld [vmem:[#allocation15 + $0x924] sm:$0xff]
    %v3605 = vld [vmem:[#allocation15 + $0x92c] sm:$0xf]
    %v3606 = vld [vmem:[#allocation15 + $0x930] sm:$0xff]
    %v3607 = vld [vmem:[#allocation15 + $0x938] sm:$0xff]
    %v3608 = vld [vmem:[#allocation15 + $0x940] sm:$0xff]
    %v3609 = vld [vmem:[#allocation15 + $0x948] sm:$0xf]
    %v3610 = vld [vmem:[#allocation15 + $0x94c] sm:$0xff]
    %v3611 = vld [vmem:[#allocation15 + $0x954] sm:$0xff]
    %v3612 = vld [vmem:[#allocation15 + $0x95c] sm:$0xff]
    %v3613 = vld [vmem:[#allocation15 + $0x964] sm:$0xf]
    %v3614 = vld [vmem:[#allocation15 + $0x968] sm:$0xff]
    %v3615 = vld [vmem:[#allocation15 + $0x970] sm:$0xff]
    %v3616 = vld [vmem:[#allocation15 + $0x978] sm:$0xff]
    %v3617 = vld [vmem:[#allocation15 + $0x980] sm:$0xf]
    %v3618 = vld [vmem:[#allocation15 + $0x984] sm:$0xff]
    %v3619 = vld [vmem:[#allocation15 + $0x98c] sm:$0xff]
    %v3620 = vld [vmem:[#allocation15 + $0x994] sm:$0xff]
    %v3621 = vld [vmem:[#allocation15 + $0x99c] sm:$0xf]
    %v3622 = vld [vmem:[#allocation15 + $0x9a0] sm:$0xff]
    %v3623 = vld [vmem:[#allocation15 + $0x9a8] sm:$0xff]
    %v3624 = vld [vmem:[#allocation15 + $0x9b0] sm:$0xff]
    %v3625 = vld [vmem:[#allocation15 + $0x9b8] sm:$0xf]
    %v3626 = vld [vmem:[#allocation15 + $0x9bc] sm:$0xff]
    %v3627 = vld [vmem:[#allocation15 + $0x9c4] sm:$0xff]
    %v3628 = vld [vmem:[#allocation15 + $0x9cc] sm:$0xff]
    %v3629 = vld [vmem:[#allocation15 + $0x9d4] sm:$0xf]
    %v3630 = vld [vmem:[#allocation15 + $0x9d8] sm:$0xff]
    %v3631 = vld [vmem:[#allocation15 + $0x9e0] sm:$0xff]
    %v3632 = vld [vmem:[#allocation15 + $0x9e8] sm:$0xff]
    %v3633 = vld [vmem:[#allocation15 + $0x9f0] sm:$0xf]
    %v3634 = vld [vmem:[#allocation15 + $0x9f4] sm:$0xff]
    %v3635 = vld [vmem:[#allocation15 + $0x9fc] sm:$0xff]
    %v3636 = vld [vmem:[#allocation15 + $0xa04] sm:$0xff]
    %v3637 = vld [vmem:[#allocation15 + $0xa0c] sm:$0xf]
    %v3638 = vld [vmem:[#allocation15 + $0xa10] sm:$0xff]
    %v3639 = vld [vmem:[#allocation15 + $0xa18] sm:$0xff]
    %v3640 = vld [vmem:[#allocation15 + $0xa20] sm:$0xff]
    %v3641 = vld [vmem:[#allocation15 + $0xa28] sm:$0xf]
    %v3642 = vld [vmem:[#allocation15 + $0xa2c] sm:$0xff]
    %v3643 = vld [vmem:[#allocation15 + $0xa34] sm:$0xff]
    %v3644 = vld [vmem:[#allocation15 + $0xa3c] sm:$0xff]
    %v3645 = vld [vmem:[#allocation15 + $0xa44] sm:$0xf]
    %v3646 = vld [vmem:[#allocation15 + $0xa48] sm:$0xff]
    %v3647 = vld [vmem:[#allocation15 + $0xa50] sm:$0xff]
    %v3648 = vld [vmem:[#allocation15 + $0xa58] sm:$0xff]
    %v3649 = vld [vmem:[#allocation15 + $0xa60] sm:$0xf]
    %v3650 = vld [vmem:[#allocation15 + $0xa64] sm:$0xff]
    %v3651 = vld [vmem:[#allocation15 + $0xa6c] sm:$0xff]
    %v3652 = vld [vmem:[#allocation15 + $0xa74] sm:$0xff]
    %v3653 = vld [vmem:[#allocation15 + $0xa7c] sm:$0xf]
    %v3654 = vld [vmem:[#allocation15 + $0xa80] sm:$0xff]
    %v3655 = vld [vmem:[#allocation15 + $0xa88] sm:$0xff]
    %v3656 = vld [vmem:[#allocation15 + $0xa90] sm:$0xff]
    %v3657 = vld [vmem:[#allocation15 + $0xa98] sm:$0xf]
    %v3658 = vld [vmem:[#allocation15 + $0xa9c] sm:$0xff]
    %v3659 = vld [vmem:[#allocation15 + $0xaa4] sm:$0xff]
    %v3660 = vld [vmem:[#allocation15 + $0xaac] sm:$0xff]
    %v3661 = vld [vmem:[#allocation15 + $0xab4] sm:$0xf]
    %v3662 = vld [vmem:[#allocation15 + $0xab8] sm:$0xff]
    %v3663 = vld [vmem:[#allocation15 + $0xac0] sm:$0xff]
    %v3664 = vld [vmem:[#allocation15 + $0xac8] sm:$0xff]
    %v3665 = vld [vmem:[#allocation15 + $0xad0] sm:$0xf]
    %v3666 = vld [vmem:[#allocation15 + $0xad4] sm:$0xff]
    %v3667 = vld [vmem:[#allocation15 + $0xadc] sm:$0xff]
    %v3668 = vld [vmem:[#allocation15 + $0xae4] sm:$0xff]
    %v3669 = vld [vmem:[#allocation15 + $0xaec] sm:$0xf]
    %v3670 = vld [vmem:[#allocation15 + $0xaf0] sm:$0xff]
    %v3671 = vld [vmem:[#allocation15 + $0xaf8] sm:$0xff]
    %v3672 = vld [vmem:[#allocation15 + $0xb00] sm:$0xff]
    %v3673 = vld [vmem:[#allocation15 + $0xb08] sm:$0xf]
    %v3674 = vld [vmem:[#allocation15 + $0xb0c] sm:$0xff]
    %v3675 = vld [vmem:[#allocation15 + $0xb14] sm:$0xff]
    %v3676 = vld [vmem:[#allocation15 + $0xb1c] sm:$0xff]
    %v3677 = vld [vmem:[#allocation15 + $0xb24] sm:$0xf]
    %v3678 = vld [vmem:[#allocation15 + $0xb28] sm:$0xff]
    %v3679 = vld [vmem:[#allocation15 + $0xb30] sm:$0xff]
    %v3680 = vld [vmem:[#allocation15 + $0xb38] sm:$0xff]
    %v3681 = vld [vmem:[#allocation15 + $0xb40] sm:$0xf]
    %v3682 = vld [vmem:[#allocation15 + $0xb44] sm:$0xff]
    %v3683 = vld [vmem:[#allocation15 + $0xb4c] sm:$0xff]
    %v3684 = vld [vmem:[#allocation15 + $0xb54] sm:$0xff]
    %v3685 = vld [vmem:[#allocation15 + $0xb5c] sm:$0xf]
    %v3686 = vld [vmem:[#allocation15 + $0xb60] sm:$0xff]
    %v3687 = vld [vmem:[#allocation15 + $0xb68] sm:$0xff]
    %v3688 = vld [vmem:[#allocation15 + $0xb70] sm:$0xff]
    %v3689 = vld [vmem:[#allocation15 + $0xb78] sm:$0xf]
    %v3690 = vld [vmem:[#allocation15 + $0xb7c] sm:$0xff]
    %v3691 = vld [vmem:[#allocation15 + $0xb84] sm:$0xff]
    %v3692 = vld [vmem:[#allocation15 + $0xb8c] sm:$0xff]
    %v3693 = vld [vmem:[#allocation15 + $0xb94] sm:$0xf]
    %v3694 = vld [vmem:[#allocation15 + $0xb98] sm:$0xff]
    %v3695 = vld [vmem:[#allocation15 + $0xba0] sm:$0xff]
    %v3696 = vld [vmem:[#allocation15 + $0xba8] sm:$0xff]
    %v3697 = vld [vmem:[#allocation15 + $0xbb0] sm:$0xf]
    %v3698 = vld [vmem:[#allocation15 + $0xbb4] sm:$0xff]
    %v3699 = vld [vmem:[#allocation15 + $0xbbc] sm:$0xff]
    %v3700 = vld [vmem:[#allocation15 + $0xbc4] sm:$0xff]
    %v3701 = vld [vmem:[#allocation15 + $0xbcc] sm:$0xf]
    %v3702 = vld [vmem:[#allocation15 + $0xbd0] sm:$0xff]
    %v3703 = vld [vmem:[#allocation15 + $0xbd8] sm:$0xff]
    %v3704 = vld [vmem:[#allocation15 + $0xbe0] sm:$0xff]
    %v3705 = vld [vmem:[#allocation15 + $0xbe8] sm:$0xf]
    %v3706 = vld [vmem:[#allocation15 + $0xbec] sm:$0xff]
    %v3707 = vld [vmem:[#allocation15 + $0xbf4] sm:$0xff]
    %v3708 = vld [vmem:[#allocation15 + $0xbfc] sm:$0xff]
    %v3709 = vld [vmem:[#allocation15 + $0xc04] sm:$0xf]
    %v3710 = vld [vmem:[#allocation15 + $0xc08] sm:$0xff]
    %v3711 = vld [vmem:[#allocation15 + $0xc10] sm:$0xff]
    %v3712 = vld [vmem:[#allocation15 + $0xc18] sm:$0xff]
    %v3713 = vld [vmem:[#allocation15 + $0xc20] sm:$0xf]
    %v3714 = vld [vmem:[#allocation15 + $0xc24] sm:$0xff]
    %v3715 = vld [vmem:[#allocation15 + $0xc2c] sm:$0xff]
    %v3716 = vld [vmem:[#allocation15 + $0xc34] sm:$0xff]
    %v3717 = vld [vmem:[#allocation15 + $0xc3c] sm:$0xf]
    %v3718 = vld [vmem:[#allocation15 + $0xc40] sm:$0xff]
    %v3719 = vld [vmem:[#allocation15 + $0xc48] sm:$0xff]
    %v3720 = vld [vmem:[#allocation15 + $0xc50] sm:$0xff]
    %v3721 = vld [vmem:[#allocation15 + $0xc58] sm:$0xf]
    %v3722 = vld [vmem:[#allocation15 + $0xc5c] sm:$0xff]
    %v3723 = vld [vmem:[#allocation15 + $0xc64] sm:$0xff]
    %v3724 = vld [vmem:[#allocation15 + $0xc6c] sm:$0xff]
    %v3725 = vld [vmem:[#allocation15 + $0xc74] sm:$0xf]
    %v3726 = vld [vmem:[#allocation15 + $0xc78] sm:$0xff]
    %v3727 = vld [vmem:[#allocation15 + $0xc80] sm:$0xff]
    %v3728 = vld [vmem:[#allocation15 + $0xc88] sm:$0xff]
    %v3729 = vld [vmem:[#allocation15 + $0xc90] sm:$0xf]
    %v3730 = vld [vmem:[#allocation15 + $0xc94] sm:$0xff]
    %v3731 = vld [vmem:[#allocation15 + $0xc9c] sm:$0xff]
    %v3732 = vld [vmem:[#allocation15 + $0xca4] sm:$0xff]
    %v3733 = vld [vmem:[#allocation15 + $0xcac] sm:$0xf]
    %v3734 = vld [vmem:[#allocation15 + $0xcb0] sm:$0xff]
    %v3735 = vld [vmem:[#allocation15 + $0xcb8] sm:$0xff]
    %v3736 = vld [vmem:[#allocation15 + $0xcc0] sm:$0xff]
    %v3737 = vld [vmem:[#allocation15 + $0xcc8] sm:$0xf]
    %v3738 = vld [vmem:[#allocation15 + $0xccc] sm:$0xff]
    %v3739 = vld [vmem:[#allocation15 + $0xcd4] sm:$0xff]
    %v3740 = vld [vmem:[#allocation15 + $0xcdc] sm:$0xff]
    %v3741 = vld [vmem:[#allocation15 + $0xce4] sm:$0xf]
    %v3742 = vld [vmem:[#allocation15 + $0xce8] sm:$0xff]
    %v3743 = vld [vmem:[#allocation15 + $0xcf0] sm:$0xff]
    %v3744 = vld [vmem:[#allocation15 + $0xcf8] sm:$0xff]
    %v3745 = vld [vmem:[#allocation15 + $0xd00] sm:$0xf]
    %v3746 = vld [vmem:[#allocation15 + $0xd04] sm:$0xff]
    %v3747 = vld [vmem:[#allocation15 + $0xd0c] sm:$0xff]
    %v3748 = vld [vmem:[#allocation15 + $0xd14] sm:$0xff]
    %v3749 = vld [vmem:[#allocation15 + $0xd1c] sm:$0xf]
    %v3750 = vld [vmem:[#allocation15 + $0xd20] sm:$0xff]
    %v3751 = vld [vmem:[#allocation15 + $0xd28] sm:$0xff]
    %v3752 = vld [vmem:[#allocation15 + $0xd30] sm:$0xff]
    %v3753 = vld [vmem:[#allocation15 + $0xd38] sm:$0xf]
    %v3754 = vld [vmem:[#allocation15 + $0xd3c] sm:$0xff]
    %v3755 = vld [vmem:[#allocation15 + $0xd44] sm:$0xff]
    %v3756 = vld [vmem:[#allocation15 + $0xd4c] sm:$0xff]
    %v3757 = vld [vmem:[#allocation15 + $0xd54] sm:$0xf]
    %v3758 = vld [vmem:[#allocation15 + $0xd58] sm:$0xff]
    %v3759 = vld [vmem:[#allocation15 + $0xd60] sm:$0xff]
    %v3760 = vld [vmem:[#allocation15 + $0xd68] sm:$0xff]
    %v3761 = vld [vmem:[#allocation15 + $0xd70] sm:$0xf]
    %v3762 = vld [vmem:[#allocation15 + $0xd74] sm:$0xff]
    %v3763 = vld [vmem:[#allocation15 + $0xd7c] sm:$0xff]
    %v3764 = vld [vmem:[#allocation15 + $0xd84] sm:$0xff]
    %v3765 = vld [vmem:[#allocation15 + $0xd8c] sm:$0xf]
    %v3766 = vld [vmem:[#allocation15 + $0xd90] sm:$0xff]
    %v3767 = vld [vmem:[#allocation15 + $0xd98] sm:$0xff]
    %v3768 = vld [vmem:[#allocation15 + $0xda0] sm:$0xff]
    %v3769 = vld [vmem:[#allocation15 + $0xda8] sm:$0xf]
    %v3770 = vld [vmem:[#allocation15 + $0xdac] sm:$0xff]
    %v3771 = vld [vmem:[#allocation15 + $0xdb4] sm:$0xff]
    %v3772 = vld [vmem:[#allocation15 + $0xdbc] sm:$0xff]
    %v3773 = vld [vmem:[#allocation15 + $0xdc4] sm:$0xf]
    %v3774 = vld [vmem:[#allocation15 + $0xdc8] sm:$0xff]
    %v3775 = vld [vmem:[#allocation15 + $0xdd0] sm:$0xff]
    %v3776 = vld [vmem:[#allocation15 + $0xdd8] sm:$0xff]
    %v3777 = vld [vmem:[#allocation15 + $0xde0] sm:$0xf]
    %v3778 = vld [vmem:[#allocation15 + $0xde4] sm:$0xff]
    %v3779 = vld [vmem:[#allocation15 + $0xdec] sm:$0xff]
    %v3780 = vld [vmem:[#allocation15 + $0xdf4] sm:$0xff]
    %v3781 = vld [vmem:[#allocation15 + $0xdfc] sm:$0xf]
    %v3782 = vld [vmem:[#allocation16] sm:$0xff]
    %v3784 = vlaneseq
    %v3785 = vshrl.u32 %v3784, 7
    %v3786 = vsub.s32 0, %v3785
    %v3787 = vrot.slane %v3782, %v3786
    %v3788 = vlaneseq
    %v3789 = vshrl.u32 %v3788, 7
    %v3790 = vsub.s32 1, %v3789
    %v3791 = vrot.slane %v3782, %v3790
    %v3792 = vlaneseq
    %v3793 = vshrl.u32 %v3792, 7
    %v3794 = vsub.s32 2, %v3793
    %v3795 = vrot.slane %v3782, %v3794
    %v3796 = vlaneseq
    %v3797 = vshrl.u32 %v3796, 7
    %v3798 = vsub.s32 3, %v3797
    %v3799 = vrot.slane %v3782, %v3798
    %v3800 = vlaneseq
    %v3801 = vshrl.u32 %v3800, 7
    %v3802 = vsub.s32 4, %v3801
    %v3803 = vrot.slane %v3782, %v3802
    %v3804 = vlaneseq
    %v3805 = vshrl.u32 %v3804, 7
    %v3806 = vsub.s32 5, %v3805
    %v3807 = vrot.slane %v3782, %v3806
    %v3808 = vlaneseq
    %v3809 = vshrl.u32 %v3808, 7
    %v3810 = vsub.s32 6, %v3809
    %v3811 = vrot.slane %v3782, %v3810
    %v4331 = vunpack.c.l.b16 %v3270
    %v4332 = vunpack.c.h.b16 %v3270
    %v4333 = vunpack.c.l.b16 %v3271
    %v4334 = vunpack.c.h.b16 %v3271
    %v4335 = vunpack.c.l.b16 %v3272
    %v4336 = vunpack.c.h.b16 %v3272
    %v4337 = vunpack.c.l.b16 %v3273
    %v4338 = vunpack.c.l.b16 %v3274
    %v4339 = vunpack.c.h.b16 %v3274
    %v4340 = vunpack.c.l.b16 %v3275
    %v4341 = vunpack.c.h.b16 %v3275
    %v4342 = vunpack.c.l.b16 %v3276
    %v4343 = vunpack.c.h.b16 %v3276
    %v4344 = vunpack.c.l.b16 %v3277
    %v4345 = vunpack.c.l.b16 %v3278
    %v4346 = vunpack.c.h.b16 %v3278
    %v4347 = vunpack.c.l.b16 %v3279
    %v4348 = vunpack.c.h.b16 %v3279
    %v4349 = vunpack.c.l.b16 %v3280
    %v4350 = vunpack.c.h.b16 %v3280
    %v4351 = vunpack.c.l.b16 %v3281
    %v4352 = vunpack.c.l.b16 %v3282
    %v4353 = vunpack.c.h.b16 %v3282
    %v4354 = vunpack.c.l.b16 %v3283
    %v4355 = vunpack.c.h.b16 %v3283
    %v4356 = vunpack.c.l.b16 %v3284
    %v4357 = vunpack.c.h.b16 %v3284
    %v4358 = vunpack.c.l.b16 %v3285
    %v4359 = vunpack.c.l.b16 %v3286
    %v4360 = vunpack.c.h.b16 %v3286
    %v4361 = vunpack.c.l.b16 %v3287
    %v4362 = vunpack.c.h.b16 %v3287
    %v4363 = vunpack.c.l.b16 %v3288
    %v4364 = vunpack.c.h.b16 %v3288
    %v4365 = vunpack.c.l.b16 %v3289
    %v4366 = vunpack.c.l.b16 %v3290
    %v4367 = vunpack.c.h.b16 %v3290
    %v4368 = vunpack.c.l.b16 %v3291
    %v4369 = vunpack.c.h.b16 %v3291
    %v4370 = vunpack.c.l.b16 %v3292
    %v4371 = vunpack.c.h.b16 %v3292
    %v4372 = vunpack.c.l.b16 %v3293
    %v4373 = vunpack.c.l.b16 %v3294
    %v4374 = vunpack.c.h.b16 %v3294
    %v4375 = vunpack.c.l.b16 %v3295
    %v4376 = vunpack.c.h.b16 %v3295
    %v4377 = vunpack.c.l.b16 %v3296
    %v4378 = vunpack.c.h.b16 %v3296
    %v4379 = vunpack.c.l.b16 %v3297
    %v4380 = vunpack.c.l.b16 %v3298
    %v4381 = vunpack.c.h.b16 %v3298
    %v4382 = vunpack.c.l.b16 %v3299
    %v4383 = vunpack.c.h.b16 %v3299
    %v4384 = vunpack.c.l.b16 %v3300
    %v4385 = vunpack.c.h.b16 %v3300
    %v4386 = vunpack.c.l.b16 %v3301
    %v4387 = vunpack.c.l.b16 %v3302
    %v4388 = vunpack.c.h.b16 %v3302
    %v4389 = vunpack.c.l.b16 %v3303
    %v4390 = vunpack.c.h.b16 %v3303
    %v4391 = vunpack.c.l.b16 %v3304
    %v4392 = vunpack.c.h.b16 %v3304
    %v4393 = vunpack.c.l.b16 %v3305
    %v4394 = vunpack.c.l.b16 %v3306
    %v4395 = vunpack.c.h.b16 %v3306
    %v4396 = vunpack.c.l.b16 %v3307
    %v4397 = vunpack.c.h.b16 %v3307
    %v4398 = vunpack.c.l.b16 %v3308
    %v4399 = vunpack.c.h.b16 %v3308
    %v4400 = vunpack.c.l.b16 %v3309
    %v4401 = vunpack.c.l.b16 %v3310
    %v4402 = vunpack.c.h.b16 %v3310
    %v4403 = vunpack.c.l.b16 %v3311
    %v4404 = vunpack.c.h.b16 %v3311
    %v4405 = vunpack.c.l.b16 %v3312
    %v4406 = vunpack.c.h.b16 %v3312
    %v4407 = vunpack.c.l.b16 %v3313
    %v4408 = vunpack.c.l.b16 %v3314
    %v4409 = vunpack.c.h.b16 %v3314
    %v4410 = vunpack.c.l.b16 %v3315
    %v4411 = vunpack.c.h.b16 %v3315
    %v4412 = vunpack.c.l.b16 %v3316
    %v4413 = vunpack.c.h.b16 %v3316
    %v4414 = vunpack.c.l.b16 %v3317
    %v4415 = vunpack.c.l.b16 %v3318
    %v4416 = vunpack.c.h.b16 %v3318
    %v4417 = vunpack.c.l.b16 %v3319
    %v4418 = vunpack.c.h.b16 %v3319
    %v4419 = vunpack.c.l.b16 %v3320
    %v4420 = vunpack.c.h.b16 %v3320
    %v4421 = vunpack.c.l.b16 %v3321
    %v4422 = vunpack.c.l.b16 %v3322
    %v4423 = vunpack.c.h.b16 %v3322
    %v4424 = vunpack.c.l.b16 %v3323
    %v4425 = vunpack.c.h.b16 %v3323
    %v4426 = vunpack.c.l.b16 %v3324
    %v4427 = vunpack.c.h.b16 %v3324
    %v4428 = vunpack.c.l.b16 %v3325
    %v4429 = vunpack.c.l.b16 %v3326
    %v4430 = vunpack.c.h.b16 %v3326
    %v4431 = vunpack.c.l.b16 %v3327
    %v4432 = vunpack.c.h.b16 %v3327
    %v4433 = vunpack.c.l.b16 %v3328
    %v4434 = vunpack.c.h.b16 %v3328
    %v4435 = vunpack.c.l.b16 %v3329
    %v4436 = vunpack.c.l.b16 %v3330
    %v4437 = vunpack.c.h.b16 %v3330
    %v4438 = vunpack.c.l.b16 %v3331
    %v4439 = vunpack.c.h.b16 %v3331
    %v4440 = vunpack.c.l.b16 %v3332
    %v4441 = vunpack.c.h.b16 %v3332
    %v4442 = vunpack.c.l.b16 %v3333
    %v4443 = vunpack.c.l.b16 %v3334
    %v4444 = vunpack.c.h.b16 %v3334
    %v4445 = vunpack.c.l.b16 %v3335
    %v4446 = vunpack.c.h.b16 %v3335
    %v4447 = vunpack.c.l.b16 %v3336
    %v4448 = vunpack.c.h.b16 %v3336
    %v4449 = vunpack.c.l.b16 %v3337
    %v4450 = vunpack.c.l.b16 %v3338
    %v4451 = vunpack.c.h.b16 %v3338
    %v4452 = vunpack.c.l.b16 %v3339
    %v4453 = vunpack.c.h.b16 %v3339
    %v4454 = vunpack.c.l.b16 %v3340
    %v4455 = vunpack.c.h.b16 %v3340
    %v4456 = vunpack.c.l.b16 %v3341
    %v4457 = vunpack.c.l.b16 %v3342
    %v4458 = vunpack.c.h.b16 %v3342
    %v4459 = vunpack.c.l.b16 %v3343
    %v4460 = vunpack.c.h.b16 %v3343
    %v4461 = vunpack.c.l.b16 %v3344
    %v4462 = vunpack.c.h.b16 %v3344
    %v4463 = vunpack.c.l.b16 %v3345
    %v4464 = vunpack.c.l.b16 %v3346
    %v4465 = vunpack.c.h.b16 %v3346
    %v4466 = vunpack.c.l.b16 %v3347
    %v4467 = vunpack.c.h.b16 %v3347
    %v4468 = vunpack.c.l.b16 %v3348
    %v4469 = vunpack.c.h.b16 %v3348
    %v4470 = vunpack.c.l.b16 %v3349
    %v4471 = vunpack.c.l.b16 %v3350
    %v4472 = vunpack.c.h.b16 %v3350
    %v4473 = vunpack.c.l.b16 %v3351
    %v4474 = vunpack.c.h.b16 %v3351
    %v4475 = vunpack.c.l.b16 %v3352
    %v4476 = vunpack.c.h.b16 %v3352
    %v4477 = vunpack.c.l.b16 %v3353
    %v4478 = vunpack.c.l.b16 %v3354
    %v4479 = vunpack.c.h.b16 %v3354
    %v4480 = vunpack.c.l.b16 %v3355
    %v4481 = vunpack.c.h.b16 %v3355
    %v4482 = vunpack.c.l.b16 %v3356
    %v4483 = vunpack.c.h.b16 %v3356
    %v4484 = vunpack.c.l.b16 %v3357
    %v4485 = vunpack.c.l.b16 %v3358
    %v4486 = vunpack.c.h.b16 %v3358
    %v4487 = vunpack.c.l.b16 %v3359
    %v4488 = vunpack.c.h.b16 %v3359
    %v4489 = vunpack.c.l.b16 %v3360
    %v4490 = vunpack.c.h.b16 %v3360
    %v4491 = vunpack.c.l.b16 %v3361
    %v4492 = vunpack.c.l.b16 %v3362
    %v4493 = vunpack.c.h.b16 %v3362
    %v4494 = vunpack.c.l.b16 %v3363
    %v4495 = vunpack.c.h.b16 %v3363
    %v4496 = vunpack.c.l.b16 %v3364
    %v4497 = vunpack.c.h.b16 %v3364
    %v4498 = vunpack.c.l.b16 %v3365
    %v4499 = vunpack.c.l.b16 %v3366
    %v4500 = vunpack.c.h.b16 %v3366
    %v4501 = vunpack.c.l.b16 %v3367
    %v4502 = vunpack.c.h.b16 %v3367
    %v4503 = vunpack.c.l.b16 %v3368
    %v4504 = vunpack.c.h.b16 %v3368
    %v4505 = vunpack.c.l.b16 %v3369
    %v4506 = vunpack.c.l.b16 %v3370
    %v4507 = vunpack.c.h.b16 %v3370
    %v4508 = vunpack.c.l.b16 %v3371
    %v4509 = vunpack.c.h.b16 %v3371
    %v4510 = vunpack.c.l.b16 %v3372
    %v4511 = vunpack.c.h.b16 %v3372
    %v4512 = vunpack.c.l.b16 %v3373
    %v4513 = vunpack.c.l.b16 %v3374
    %v4514 = vunpack.c.h.b16 %v3374
    %v4515 = vunpack.c.l.b16 %v3375
    %v4516 = vunpack.c.h.b16 %v3375
    %v4517 = vunpack.c.l.b16 %v3376
    %v4518 = vunpack.c.h.b16 %v3376
    %v4519 = vunpack.c.l.b16 %v3377
    %v4520 = vunpack.c.l.b16 %v3378
    %v4521 = vunpack.c.h.b16 %v3378
    %v4522 = vunpack.c.l.b16 %v3379
    %v4523 = vunpack.c.h.b16 %v3379
    %v4524 = vunpack.c.l.b16 %v3380
    %v4525 = vunpack.c.h.b16 %v3380
    %v4526 = vunpack.c.l.b16 %v3381
    %v4527 = vunpack.c.l.b16 %v3382
    %v4528 = vunpack.c.h.b16 %v3382
    %v4529 = vunpack.c.l.b16 %v3383
    %v4530 = vunpack.c.h.b16 %v3383
    %v4531 = vunpack.c.l.b16 %v3384
    %v4532 = vunpack.c.h.b16 %v3384
    %v4533 = vunpack.c.l.b16 %v3385
    %v4534 = vunpack.c.l.b16 %v3386
    %v4535 = vunpack.c.h.b16 %v3386
    %v4536 = vunpack.c.l.b16 %v3387
    %v4537 = vunpack.c.h.b16 %v3387
    %v4538 = vunpack.c.l.b16 %v3388
    %v4539 = vunpack.c.h.b16 %v3388
    %v4540 = vunpack.c.l.b16 %v3389
    %v4541 = vunpack.c.l.b16 %v3390
    %v4542 = vunpack.c.h.b16 %v3390
    %v4543 = vunpack.c.l.b16 %v3391
    %v4544 = vunpack.c.h.b16 %v3391
    %v4545 = vunpack.c.l.b16 %v3392
    %v4546 = vunpack.c.h.b16 %v3392
    %v4547 = vunpack.c.l.b16 %v3393
    %v4548 = vunpack.c.l.b16 %v3394
    %v4549 = vunpack.c.h.b16 %v3394
    %v4550 = vunpack.c.l.b16 %v3395
    %v4551 = vunpack.c.h.b16 %v3395
    %v4552 = vunpack.c.l.b16 %v3396
    %v4553 = vunpack.c.h.b16 %v3396
    %v4554 = vunpack.c.l.b16 %v3397
    %v4555 = vunpack.c.l.b16 %v3398
    %v4556 = vunpack.c.h.b16 %v3398
    %v4557 = vunpack.c.l.b16 %v3399
    %v4558 = vunpack.c.h.b16 %v3399
    %v4559 = vunpack.c.l.b16 %v3400
    %v4560 = vunpack.c.h.b16 %v3400
    %v4561 = vunpack.c.l.b16 %v3401
    %v4562 = vunpack.c.l.b16 %v3402
    %v4563 = vunpack.c.h.b16 %v3402
    %v4564 = vunpack.c.l.b16 %v3403
    %v4565 = vunpack.c.h.b16 %v3403
    %v4566 = vunpack.c.l.b16 %v3404
    %v4567 = vunpack.c.h.b16 %v3404
    %v4568 = vunpack.c.l.b16 %v3405
    %v4569 = vunpack.c.l.b16 %v3406
    %v4570 = vunpack.c.h.b16 %v3406
    %v4571 = vunpack.c.l.b16 %v3407
    %v4572 = vunpack.c.h.b16 %v3407
    %v4573 = vunpack.c.l.b16 %v3408
    %v4574 = vunpack.c.h.b16 %v3408
    %v4575 = vunpack.c.l.b16 %v3409
    %v4576 = vunpack.c.l.b16 %v3410
    %v4577 = vunpack.c.h.b16 %v3410
    %v4578 = vunpack.c.l.b16 %v3411
    %v4579 = vunpack.c.h.b16 %v3411
    %v4580 = vunpack.c.l.b16 %v3412
    %v4581 = vunpack.c.h.b16 %v3412
    %v4582 = vunpack.c.l.b16 %v3413
    %v4583 = vunpack.c.l.b16 %v3414
    %v4584 = vunpack.c.h.b16 %v3414
    %v4585 = vunpack.c.l.b16 %v3415
    %v4586 = vunpack.c.h.b16 %v3415
    %v4587 = vunpack.c.l.b16 %v3416
    %v4588 = vunpack.c.h.b16 %v3416
    %v4589 = vunpack.c.l.b16 %v3417
    %v4590 = vunpack.c.l.b16 %v3418
    %v4591 = vunpack.c.h.b16 %v3418
    %v4592 = vunpack.c.l.b16 %v3419
    %v4593 = vunpack.c.h.b16 %v3419
    %v4594 = vunpack.c.l.b16 %v3420
    %v4595 = vunpack.c.h.b16 %v3420
    %v4596 = vunpack.c.l.b16 %v3421
    %v4597 = vunpack.c.l.b16 %v3422
    %v4598 = vunpack.c.h.b16 %v3422
    %v4599 = vunpack.c.l.b16 %v3423
    %v4600 = vunpack.c.h.b16 %v3423
    %v4601 = vunpack.c.l.b16 %v3424
    %v4602 = vunpack.c.h.b16 %v3424
    %v4603 = vunpack.c.l.b16 %v3425
    %v4604 = vunpack.c.l.b16 %v3426
    %v4605 = vunpack.c.h.b16 %v3426
    %v4606 = vunpack.c.l.b16 %v3427
    %v4607 = vunpack.c.h.b16 %v3427
    %v4608 = vunpack.c.l.b16 %v3428
    %v4609 = vunpack.c.h.b16 %v3428
    %v4610 = vunpack.c.l.b16 %v3429
    %v4611 = vunpack.c.l.b16 %v3430
    %v4612 = vunpack.c.h.b16 %v3430
    %v4613 = vunpack.c.l.b16 %v3431
    %v4614 = vunpack.c.h.b16 %v3431
    %v4615 = vunpack.c.l.b16 %v3432
    %v4616 = vunpack.c.h.b16 %v3432
    %v4617 = vunpack.c.l.b16 %v3433
    %v4618 = vunpack.c.l.b16 %v3434
    %v4619 = vunpack.c.h.b16 %v3434
    %v4620 = vunpack.c.l.b16 %v3435
    %v4621 = vunpack.c.h.b16 %v3435
    %v4622 = vunpack.c.l.b16 %v3436
    %v4623 = vunpack.c.h.b16 %v3436
    %v4624 = vunpack.c.l.b16 %v3437
    %v4625 = vunpack.c.l.b16 %v3438
    %v4626 = vunpack.c.h.b16 %v3438
    %v4627 = vunpack.c.l.b16 %v3439
    %v4628 = vunpack.c.h.b16 %v3439
    %v4629 = vunpack.c.l.b16 %v3440
    %v4630 = vunpack.c.h.b16 %v3440
    %v4631 = vunpack.c.l.b16 %v3441
    %v4632 = vunpack.c.l.b16 %v3442
    %v4633 = vunpack.c.h.b16 %v3442
    %v4634 = vunpack.c.l.b16 %v3443
    %v4635 = vunpack.c.h.b16 %v3443
    %v4636 = vunpack.c.l.b16 %v3444
    %v4637 = vunpack.c.h.b16 %v3444
    %v4638 = vunpack.c.l.b16 %v3445
    %v4639 = vunpack.c.l.b16 %v3446
    %v4640 = vunpack.c.h.b16 %v3446
    %v4641 = vunpack.c.l.b16 %v3447
    %v4642 = vunpack.c.h.b16 %v3447
    %v4643 = vunpack.c.l.b16 %v3448
    %v4644 = vunpack.c.h.b16 %v3448
    %v4645 = vunpack.c.l.b16 %v3449
    %v4646 = vunpack.c.l.b16 %v3450
    %v4647 = vunpack.c.h.b16 %v3450
    %v4648 = vunpack.c.l.b16 %v3451
    %v4649 = vunpack.c.h.b16 %v3451
    %v4650 = vunpack.c.l.b16 %v3452
    %v4651 = vunpack.c.h.b16 %v3452
    %v4652 = vunpack.c.l.b16 %v3453
    %v4653 = vunpack.c.l.b16 %v3454
    %v4654 = vunpack.c.h.b16 %v3454
    %v4655 = vunpack.c.l.b16 %v3455
    %v4656 = vunpack.c.h.b16 %v3455
    %v4657 = vunpack.c.l.b16 %v3456
    %v4658 = vunpack.c.h.b16 %v3456
    %v4659 = vunpack.c.l.b16 %v3457
    %v4660 = vunpack.c.l.b16 %v3458
    %v4661 = vunpack.c.h.b16 %v3458
    %v4662 = vunpack.c.l.b16 %v3459
    %v4663 = vunpack.c.h.b16 %v3459
    %v4664 = vunpack.c.l.b16 %v3460
    %v4665 = vunpack.c.h.b16 %v3460
    %v4666 = vunpack.c.l.b16 %v3461
    %v4667 = vunpack.c.l.b16 %v3462
    %v4668 = vunpack.c.h.b16 %v3462
    %v4669 = vunpack.c.l.b16 %v3463
    %v4670 = vunpack.c.h.b16 %v3463
    %v4671 = vunpack.c.l.b16 %v3464
    %v4672 = vunpack.c.h.b16 %v3464
    %v4673 = vunpack.c.l.b16 %v3465
    %v4674 = vunpack.c.l.b16 %v3466
    %v4675 = vunpack.c.h.b16 %v3466
    %v4676 = vunpack.c.l.b16 %v3467
    %v4677 = vunpack.c.h.b16 %v3467
    %v4678 = vunpack.c.l.b16 %v3468
    %v4679 = vunpack.c.h.b16 %v3468
    %v4680 = vunpack.c.l.b16 %v3469
    %v4681 = vunpack.c.l.b16 %v3470
    %v4682 = vunpack.c.h.b16 %v3470
    %v4683 = vunpack.c.l.b16 %v3471
    %v4684 = vunpack.c.h.b16 %v3471
    %v4685 = vunpack.c.l.b16 %v3472
    %v4686 = vunpack.c.h.b16 %v3472
    %v4687 = vunpack.c.l.b16 %v3473
    %v4688 = vunpack.c.l.b16 %v3474
    %v4689 = vunpack.c.h.b16 %v3474
    %v4690 = vunpack.c.l.b16 %v3475
    %v4691 = vunpack.c.h.b16 %v3475
    %v4692 = vunpack.c.l.b16 %v3476
    %v4693 = vunpack.c.h.b16 %v3476
    %v4694 = vunpack.c.l.b16 %v3477
    %v4695 = vunpack.c.l.b16 %v3478
    %v4696 = vunpack.c.h.b16 %v3478
    %v4697 = vunpack.c.l.b16 %v3479
    %v4698 = vunpack.c.h.b16 %v3479
    %v4699 = vunpack.c.l.b16 %v3480
    %v4700 = vunpack.c.h.b16 %v3480
    %v4701 = vunpack.c.l.b16 %v3481
    %v4702 = vunpack.c.l.b16 %v3482
    %v4703 = vunpack.c.h.b16 %v3482
    %v4704 = vunpack.c.l.b16 %v3483
    %v4705 = vunpack.c.h.b16 %v3483
    %v4706 = vunpack.c.l.b16 %v3484
    %v4707 = vunpack.c.h.b16 %v3484
    %v4708 = vunpack.c.l.b16 %v3485
    %v4709 = vunpack.c.l.b16 %v3486
    %v4710 = vunpack.c.h.b16 %v3486
    %v4711 = vunpack.c.l.b16 %v3487
    %v4712 = vunpack.c.h.b16 %v3487
    %v4713 = vunpack.c.l.b16 %v3488
    %v4714 = vunpack.c.h.b16 %v3488
    %v4715 = vunpack.c.l.b16 %v3489
    %v4716 = vunpack.c.l.b16 %v3490
    %v4717 = vunpack.c.h.b16 %v3490
    %v4718 = vunpack.c.l.b16 %v3491
    %v4719 = vunpack.c.h.b16 %v3491
    %v4720 = vunpack.c.l.b16 %v3492
    %v4721 = vunpack.c.h.b16 %v3492
    %v4722 = vunpack.c.l.b16 %v3493
    %v4723 = vunpack.c.l.b16 %v3494
    %v4724 = vunpack.c.h.b16 %v3494
    %v4725 = vunpack.c.l.b16 %v3495
    %v4726 = vunpack.c.h.b16 %v3495
    %v4727 = vunpack.c.l.b16 %v3496
    %v4728 = vunpack.c.h.b16 %v3496
    %v4729 = vunpack.c.l.b16 %v3497
    %v4730 = vunpack.c.l.b16 %v3498
    %v4731 = vunpack.c.h.b16 %v3498
    %v4732 = vunpack.c.l.b16 %v3499
    %v4733 = vunpack.c.h.b16 %v3499
    %v4734 = vunpack.c.l.b16 %v3500
    %v4735 = vunpack.c.h.b16 %v3500
    %v4736 = vunpack.c.l.b16 %v3501
    %v4737 = vunpack.c.l.b16 %v3502
    %v4738 = vunpack.c.h.b16 %v3502
    %v4739 = vunpack.c.l.b16 %v3503
    %v4740 = vunpack.c.h.b16 %v3503
    %v4741 = vunpack.c.l.b16 %v3504
    %v4742 = vunpack.c.h.b16 %v3504
    %v4743 = vunpack.c.l.b16 %v3505
    %v4744 = vunpack.c.l.b16 %v3506
    %v4745 = vunpack.c.h.b16 %v3506
    %v4746 = vunpack.c.l.b16 %v3507
    %v4747 = vunpack.c.h.b16 %v3507
    %v4748 = vunpack.c.l.b16 %v3508
    %v4749 = vunpack.c.h.b16 %v3508
    %v4750 = vunpack.c.l.b16 %v3509
    %v4751 = vunpack.c.l.b16 %v3510
    %v4752 = vunpack.c.h.b16 %v3510
    %v4753 = vunpack.c.l.b16 %v3511
    %v4754 = vunpack.c.h.b16 %v3511
    %v4755 = vunpack.c.l.b16 %v3512
    %v4756 = vunpack.c.h.b16 %v3512
    %v4757 = vunpack.c.l.b16 %v3513
    %v4758 = vunpack.c.l.b16 %v3514
    %v4759 = vunpack.c.h.b16 %v3514
    %v4760 = vunpack.c.l.b16 %v3515
    %v4761 = vunpack.c.h.b16 %v3515
    %v4762 = vunpack.c.l.b16 %v3516
    %v4763 = vunpack.c.h.b16 %v3516
    %v4764 = vunpack.c.l.b16 %v3517
    %v4765 = vunpack.c.l.b16 %v3518
    %v4766 = vunpack.c.h.b16 %v3518
    %v4767 = vunpack.c.l.b16 %v3519
    %v4768 = vunpack.c.h.b16 %v3519
    %v4769 = vunpack.c.l.b16 %v3520
    %v4770 = vunpack.c.h.b16 %v3520
    %v4771 = vunpack.c.l.b16 %v3521
    %v4772 = vunpack.c.l.b16 %v3522
    %v4773 = vunpack.c.h.b16 %v3522
    %v4774 = vunpack.c.l.b16 %v3523
    %v4775 = vunpack.c.h.b16 %v3523
    %v4776 = vunpack.c.l.b16 %v3524
    %v4777 = vunpack.c.h.b16 %v3524
    %v4778 = vunpack.c.l.b16 %v3525
    %v4779 = vunpack.c.l.b16 %v3526
    %v4780 = vunpack.c.h.b16 %v3526
    %v4781 = vunpack.c.l.b16 %v3527
    %v4782 = vunpack.c.h.b16 %v3527
    %v4783 = vunpack.c.l.b16 %v3528
    %v4784 = vunpack.c.h.b16 %v3528
    %v4785 = vunpack.c.l.b16 %v3529
    %v4786 = vunpack.c.l.b16 %v3530
    %v4787 = vunpack.c.h.b16 %v3530
    %v4788 = vunpack.c.l.b16 %v3531
    %v4789 = vunpack.c.h.b16 %v3531
    %v4790 = vunpack.c.l.b16 %v3532
    %v4791 = vunpack.c.h.b16 %v3532
    %v4792 = vunpack.c.l.b16 %v3533
    %v4793 = vunpack.c.l.b16 %v3534
    %v4794 = vunpack.c.h.b16 %v3534
    %v4795 = vunpack.c.l.b16 %v3535
    %v4796 = vunpack.c.h.b16 %v3535
    %v4797 = vunpack.c.l.b16 %v3536
    %v4798 = vunpack.c.h.b16 %v3536
    %v4799 = vunpack.c.l.b16 %v3537
    %v4800 = vunpack.c.l.b16 %v3538
    %v4801 = vunpack.c.h.b16 %v3538
    %v4802 = vunpack.c.l.b16 %v3539
    %v4803 = vunpack.c.h.b16 %v3539
    %v4804 = vunpack.c.l.b16 %v3540
    %v4805 = vunpack.c.h.b16 %v3540
    %v4806 = vunpack.c.l.b16 %v3541
    %v4807 = vunpack.c.l.b16 %v3542
    %v4808 = vunpack.c.h.b16 %v3542
    %v4809 = vunpack.c.l.b16 %v3543
    %v4810 = vunpack.c.h.b16 %v3543
    %v4811 = vunpack.c.l.b16 %v3544
    %v4812 = vunpack.c.h.b16 %v3544
    %v4813 = vunpack.c.l.b16 %v3545
    %v4814 = vunpack.c.l.b16 %v3546
    %v4815 = vunpack.c.h.b16 %v3546
    %v4816 = vunpack.c.l.b16 %v3547
    %v4817 = vunpack.c.h.b16 %v3547
    %v4818 = vunpack.c.l.b16 %v3548
    %v4819 = vunpack.c.h.b16 %v3548
    %v4820 = vunpack.c.l.b16 %v3549
    %v4821 = vunpack.c.l.b16 %v3550
    %v4822 = vunpack.c.h.b16 %v3550
    %v4823 = vunpack.c.l.b16 %v3551
    %v4824 = vunpack.c.h.b16 %v3551
    %v4825 = vunpack.c.l.b16 %v3552
    %v4826 = vunpack.c.h.b16 %v3552
    %v4827 = vunpack.c.l.b16 %v3553
    %v4828 = vunpack.c.l.b16 %v3554
    %v4829 = vunpack.c.h.b16 %v3554
    %v4830 = vunpack.c.l.b16 %v3555
    %v4831 = vunpack.c.h.b16 %v3555
    %v4832 = vunpack.c.l.b16 %v3556
    %v4833 = vunpack.c.h.b16 %v3556
    %v4834 = vunpack.c.l.b16 %v3557
    %v4835 = vunpack.c.l.b16 %v3558
    %v4836 = vunpack.c.h.b16 %v3558
    %v4837 = vunpack.c.l.b16 %v3559
    %v4838 = vunpack.c.h.b16 %v3559
    %v4839 = vunpack.c.l.b16 %v3560
    %v4840 = vunpack.c.h.b16 %v3560
    %v4841 = vunpack.c.l.b16 %v3561
    %v4842 = vunpack.c.l.b16 %v3562
    %v4843 = vunpack.c.h.b16 %v3562
    %v4844 = vunpack.c.l.b16 %v3563
    %v4845 = vunpack.c.h.b16 %v3563
    %v4846 = vunpack.c.l.b16 %v3564
    %v4847 = vunpack.c.h.b16 %v3564
    %v4848 = vunpack.c.l.b16 %v3565
    %v4849 = vunpack.c.l.b16 %v3566
    %v4850 = vunpack.c.h.b16 %v3566
    %v4851 = vunpack.c.l.b16 %v3567
    %v4852 = vunpack.c.h.b16 %v3567
    %v4853 = vunpack.c.l.b16 %v3568
    %v4854 = vunpack.c.h.b16 %v3568
    %v4855 = vunpack.c.l.b16 %v3569
    %v4856 = vunpack.c.l.b16 %v3570
    %v4857 = vunpack.c.h.b16 %v3570
    %v4858 = vunpack.c.l.b16 %v3571
    %v4859 = vunpack.c.h.b16 %v3571
    %v4860 = vunpack.c.l.b16 %v3572
    %v4861 = vunpack.c.h.b16 %v3572
    %v4862 = vunpack.c.l.b16 %v3573
    %v4863 = vunpack.c.l.b16 %v3574
    %v4864 = vunpack.c.h.b16 %v3574
    %v4865 = vunpack.c.l.b16 %v3575
    %v4866 = vunpack.c.h.b16 %v3575
    %v4867 = vunpack.c.l.b16 %v3576
    %v4868 = vunpack.c.h.b16 %v3576
    %v4869 = vunpack.c.l.b16 %v3577
    %v4870 = vunpack.c.l.b16 %v3578
    %v4871 = vunpack.c.h.b16 %v3578
    %v4872 = vunpack.c.l.b16 %v3579
    %v4873 = vunpack.c.h.b16 %v3579
    %v4874 = vunpack.c.l.b16 %v3580
    %v4875 = vunpack.c.h.b16 %v3580
    %v4876 = vunpack.c.l.b16 %v3581
    %v4877 = vunpack.c.l.b16 %v3582
    %v4878 = vunpack.c.h.b16 %v3582
    %v4879 = vunpack.c.l.b16 %v3583
    %v4880 = vunpack.c.h.b16 %v3583
    %v4881 = vunpack.c.l.b16 %v3584
    %v4882 = vunpack.c.h.b16 %v3584
    %v4883 = vunpack.c.l.b16 %v3585
    %v4884 = vunpack.c.l.b16 %v3586
    %v4885 = vunpack.c.h.b16 %v3586
    %v4886 = vunpack.c.l.b16 %v3587
    %v4887 = vunpack.c.h.b16 %v3587
    %v4888 = vunpack.c.l.b16 %v3588
    %v4889 = vunpack.c.h.b16 %v3588
    %v4890 = vunpack.c.l.b16 %v3589
    %v4891 = vunpack.c.l.b16 %v3590
    %v4892 = vunpack.c.h.b16 %v3590
    %v4893 = vunpack.c.l.b16 %v3591
    %v4894 = vunpack.c.h.b16 %v3591
    %v4895 = vunpack.c.l.b16 %v3592
    %v4896 = vunpack.c.h.b16 %v3592
    %v4897 = vunpack.c.l.b16 %v3593
    %v4898 = vunpack.c.l.b16 %v3594
    %v4899 = vunpack.c.h.b16 %v3594
    %v4900 = vunpack.c.l.b16 %v3595
    %v4901 = vunpack.c.h.b16 %v3595
    %v4902 = vunpack.c.l.b16 %v3596
    %v4903 = vunpack.c.h.b16 %v3596
    %v4904 = vunpack.c.l.b16 %v3597
    %v4905 = vunpack.c.l.b16 %v3598
    %v4906 = vunpack.c.h.b16 %v3598
    %v4907 = vunpack.c.l.b16 %v3599
    %v4908 = vunpack.c.h.b16 %v3599
    %v4909 = vunpack.c.l.b16 %v3600
    %v4910 = vunpack.c.h.b16 %v3600
    %v4911 = vunpack.c.l.b16 %v3601
    %v4912 = vunpack.c.l.b16 %v3602
    %v4913 = vunpack.c.h.b16 %v3602
    %v4914 = vunpack.c.l.b16 %v3603
    %v4915 = vunpack.c.h.b16 %v3603
    %v4916 = vunpack.c.l.b16 %v3604
    %v4917 = vunpack.c.h.b16 %v3604
    %v4918 = vunpack.c.l.b16 %v3605
    %v4919 = vunpack.c.l.b16 %v3606
    %v4920 = vunpack.c.h.b16 %v3606
    %v4921 = vunpack.c.l.b16 %v3607
    %v4922 = vunpack.c.h.b16 %v3607
    %v4923 = vunpack.c.l.b16 %v3608
    %v4924 = vunpack.c.h.b16 %v3608
    %v4925 = vunpack.c.l.b16 %v3609
    %v4926 = vunpack.c.l.b16 %v3610
    %v4927 = vunpack.c.h.b16 %v3610
    %v4928 = vunpack.c.l.b16 %v3611
    %v4929 = vunpack.c.h.b16 %v3611
    %v4930 = vunpack.c.l.b16 %v3612
    %v4931 = vunpack.c.h.b16 %v3612
    %v4932 = vunpack.c.l.b16 %v3613
    %v4933 = vunpack.c.l.b16 %v3614
    %v4934 = vunpack.c.h.b16 %v3614
    %v4935 = vunpack.c.l.b16 %v3615
    %v4936 = vunpack.c.h.b16 %v3615
    %v4937 = vunpack.c.l.b16 %v3616
    %v4938 = vunpack.c.h.b16 %v3616
    %v4939 = vunpack.c.l.b16 %v3617
    %v4940 = vunpack.c.l.b16 %v3618
    %v4941 = vunpack.c.h.b16 %v3618
    %v4942 = vunpack.c.l.b16 %v3619
    %v4943 = vunpack.c.h.b16 %v3619
    %v4944 = vunpack.c.l.b16 %v3620
    %v4945 = vunpack.c.h.b16 %v3620
    %v4946 = vunpack.c.l.b16 %v3621
    %v4947 = vunpack.c.l.b16 %v3622
    %v4948 = vunpack.c.h.b16 %v3622
    %v4949 = vunpack.c.l.b16 %v3623
    %v4950 = vunpack.c.h.b16 %v3623
    %v4951 = vunpack.c.l.b16 %v3624
    %v4952 = vunpack.c.h.b16 %v3624
    %v4953 = vunpack.c.l.b16 %v3625
    %v4954 = vunpack.c.l.b16 %v3626
    %v4955 = vunpack.c.h.b16 %v3626
    %v4956 = vunpack.c.l.b16 %v3627
    %v4957 = vunpack.c.h.b16 %v3627
    %v4958 = vunpack.c.l.b16 %v3628
    %v4959 = vunpack.c.h.b16 %v3628
    %v4960 = vunpack.c.l.b16 %v3629
    %v4961 = vunpack.c.l.b16 %v3630
    %v4962 = vunpack.c.h.b16 %v3630
    %v4963 = vunpack.c.l.b16 %v3631
    %v4964 = vunpack.c.h.b16 %v3631
    %v4965 = vunpack.c.l.b16 %v3632
    %v4966 = vunpack.c.h.b16 %v3632
    %v4967 = vunpack.c.l.b16 %v3633
    %v4968 = vunpack.c.l.b16 %v3634
    %v4969 = vunpack.c.h.b16 %v3634
    %v4970 = vunpack.c.l.b16 %v3635
    %v4971 = vunpack.c.h.b16 %v3635
    %v4972 = vunpack.c.l.b16 %v3636
    %v4973 = vunpack.c.h.b16 %v3636
    %v4974 = vunpack.c.l.b16 %v3637
    %v4975 = vunpack.c.l.b16 %v3638
    %v4976 = vunpack.c.h.b16 %v3638
    %v4977 = vunpack.c.l.b16 %v3639
    %v4978 = vunpack.c.h.b16 %v3639
    %v4979 = vunpack.c.l.b16 %v3640
    %v4980 = vunpack.c.h.b16 %v3640
    %v4981 = vunpack.c.l.b16 %v3641
    %v4982 = vunpack.c.l.b16 %v3642
    %v4983 = vunpack.c.h.b16 %v3642
    %v4984 = vunpack.c.l.b16 %v3643
    %v4985 = vunpack.c.h.b16 %v3643
    %v4986 = vunpack.c.l.b16 %v3644
    %v4987 = vunpack.c.h.b16 %v3644
    %v4988 = vunpack.c.l.b16 %v3645
    %v4989 = vunpack.c.l.b16 %v3646
    %v4990 = vunpack.c.h.b16 %v3646
    %v4991 = vunpack.c.l.b16 %v3647
    %v4992 = vunpack.c.h.b16 %v3647
    %v4993 = vunpack.c.l.b16 %v3648
    %v4994 = vunpack.c.h.b16 %v3648
    %v4995 = vunpack.c.l.b16 %v3649
    %v4996 = vunpack.c.l.b16 %v3650
    %v4997 = vunpack.c.h.b16 %v3650
    %v4998 = vunpack.c.l.b16 %v3651
    %v4999 = vunpack.c.h.b16 %v3651
    %v5000 = vunpack.c.l.b16 %v3652
    %v5001 = vunpack.c.h.b16 %v3652
    %v5002 = vunpack.c.l.b16 %v3653
    %v5003 = vunpack.c.l.b16 %v3654
    %v5004 = vunpack.c.h.b16 %v3654
    %v5005 = vunpack.c.l.b16 %v3655
    %v5006 = vunpack.c.h.b16 %v3655
    %v5007 = vunpack.c.l.b16 %v3656
    %v5008 = vunpack.c.h.b16 %v3656
    %v5009 = vunpack.c.l.b16 %v3657
    %v5010 = vunpack.c.l.b16 %v3658
    %v5011 = vunpack.c.h.b16 %v3658
    %v5012 = vunpack.c.l.b16 %v3659
    %v5013 = vunpack.c.h.b16 %v3659
    %v5014 = vunpack.c.l.b16 %v3660
    %v5015 = vunpack.c.h.b16 %v3660
    %v5016 = vunpack.c.l.b16 %v3661
    %v5017 = vunpack.c.l.b16 %v3662
    %v5018 = vunpack.c.h.b16 %v3662
    %v5019 = vunpack.c.l.b16 %v3663
    %v5020 = vunpack.c.h.b16 %v3663
    %v5021 = vunpack.c.l.b16 %v3664
    %v5022 = vunpack.c.h.b16 %v3664
    %v5023 = vunpack.c.l.b16 %v3665
    %v5024 = vunpack.c.l.b16 %v3666
    %v5025 = vunpack.c.h.b16 %v3666
    %v5026 = vunpack.c.l.b16 %v3667
    %v5027 = vunpack.c.h.b16 %v3667
    %v5028 = vunpack.c.l.b16 %v3668
    %v5029 = vunpack.c.h.b16 %v3668
    %v5030 = vunpack.c.l.b16 %v3669
    %v5031 = vunpack.c.l.b16 %v3670
    %v5032 = vunpack.c.h.b16 %v3670
    %v5033 = vunpack.c.l.b16 %v3671
    %v5034 = vunpack.c.h.b16 %v3671
    %v5035 = vunpack.c.l.b16 %v3672
    %v5036 = vunpack.c.h.b16 %v3672
    %v5037 = vunpack.c.l.b16 %v3673
    %v5038 = vunpack.c.l.b16 %v3674
    %v5039 = vunpack.c.h.b16 %v3674
    %v5040 = vunpack.c.l.b16 %v3675
    %v5041 = vunpack.c.h.b16 %v3675
    %v5042 = vunpack.c.l.b16 %v3676
    %v5043 = vunpack.c.h.b16 %v3676
    %v5044 = vunpack.c.l.b16 %v3677
    %v5045 = vunpack.c.l.b16 %v3678
    %v5046 = vunpack.c.h.b16 %v3678
    %v5047 = vunpack.c.l.b16 %v3679
    %v5048 = vunpack.c.h.b16 %v3679
    %v5049 = vunpack.c.l.b16 %v3680
    %v5050 = vunpack.c.h.b16 %v3680
    %v5051 = vunpack.c.l.b16 %v3681
    %v5052 = vunpack.c.l.b16 %v3682
    %v5053 = vunpack.c.h.b16 %v3682
    %v5054 = vunpack.c.l.b16 %v3683
    %v5055 = vunpack.c.h.b16 %v3683
    %v5056 = vunpack.c.l.b16 %v3684
    %v5057 = vunpack.c.h.b16 %v3684
    %v5058 = vunpack.c.l.b16 %v3685
    %v5059 = vunpack.c.l.b16 %v3686
    %v5060 = vunpack.c.h.b16 %v3686
    %v5061 = vunpack.c.l.b16 %v3687
    %v5062 = vunpack.c.h.b16 %v3687
    %v5063 = vunpack.c.l.b16 %v3688
    %v5064 = vunpack.c.h.b16 %v3688
    %v5065 = vunpack.c.l.b16 %v3689
    %v5066 = vunpack.c.l.b16 %v3690
    %v5067 = vunpack.c.h.b16 %v3690
    %v5068 = vunpack.c.l.b16 %v3691
    %v5069 = vunpack.c.h.b16 %v3691
    %v5070 = vunpack.c.l.b16 %v3692
    %v5071 = vunpack.c.h.b16 %v3692
    %v5072 = vunpack.c.l.b16 %v3693
    %v5073 = vunpack.c.l.b16 %v3694
    %v5074 = vunpack.c.h.b16 %v3694
    %v5075 = vunpack.c.l.b16 %v3695
    %v5076 = vunpack.c.h.b16 %v3695
    %v5077 = vunpack.c.l.b16 %v3696
    %v5078 = vunpack.c.h.b16 %v3696
    %v5079 = vunpack.c.l.b16 %v3697
    %v5080 = vunpack.c.l.b16 %v3698
    %v5081 = vunpack.c.h.b16 %v3698
    %v5082 = vunpack.c.l.b16 %v3699
    %v5083 = vunpack.c.h.b16 %v3699
    %v5084 = vunpack.c.l.b16 %v3700
    %v5085 = vunpack.c.h.b16 %v3700
    %v5086 = vunpack.c.l.b16 %v3701
    %v5087 = vunpack.c.l.b16 %v3702
    %v5088 = vunpack.c.h.b16 %v3702
    %v5089 = vunpack.c.l.b16 %v3703
    %v5090 = vunpack.c.h.b16 %v3703
    %v5091 = vunpack.c.l.b16 %v3704
    %v5092 = vunpack.c.h.b16 %v3704
    %v5093 = vunpack.c.l.b16 %v3705
    %v5094 = vunpack.c.l.b16 %v3706
    %v5095 = vunpack.c.h.b16 %v3706
    %v5096 = vunpack.c.l.b16 %v3707
    %v5097 = vunpack.c.h.b16 %v3707
    %v5098 = vunpack.c.l.b16 %v3708
    %v5099 = vunpack.c.h.b16 %v3708
    %v5100 = vunpack.c.l.b16 %v3709
    %v5101 = vunpack.c.l.b16 %v3710
    %v5102 = vunpack.c.h.b16 %v3710
    %v5103 = vunpack.c.l.b16 %v3711
    %v5104 = vunpack.c.h.b16 %v3711
    %v5105 = vunpack.c.l.b16 %v3712
    %v5106 = vunpack.c.h.b16 %v3712
    %v5107 = vunpack.c.l.b16 %v3713
    %v5108 = vunpack.c.l.b16 %v3714
    %v5109 = vunpack.c.h.b16 %v3714
    %v5110 = vunpack.c.l.b16 %v3715
    %v5111 = vunpack.c.h.b16 %v3715
    %v5112 = vunpack.c.l.b16 %v3716
    %v5113 = vunpack.c.h.b16 %v3716
    %v5114 = vunpack.c.l.b16 %v3717
    %v5115 = vunpack.c.l.b16 %v3718
    %v5116 = vunpack.c.h.b16 %v3718
    %v5117 = vunpack.c.l.b16 %v3719
    %v5118 = vunpack.c.h.b16 %v3719
    %v5119 = vunpack.c.l.b16 %v3720
    %v5120 = vunpack.c.h.b16 %v3720
    %v5121 = vunpack.c.l.b16 %v3721
    %v5122 = vunpack.c.l.b16 %v3722
    %v5123 = vunpack.c.h.b16 %v3722
    %v5124 = vunpack.c.l.b16 %v3723
    %v5125 = vunpack.c.h.b16 %v3723
    %v5126 = vunpack.c.l.b16 %v3724
    %v5127 = vunpack.c.h.b16 %v3724
    %v5128 = vunpack.c.l.b16 %v3725
    %v5129 = vunpack.c.l.b16 %v3726
    %v5130 = vunpack.c.h.b16 %v3726
    %v5131 = vunpack.c.l.b16 %v3727
    %v5132 = vunpack.c.h.b16 %v3727
    %v5133 = vunpack.c.l.b16 %v3728
    %v5134 = vunpack.c.h.b16 %v3728
    %v5135 = vunpack.c.l.b16 %v3729
    %v5136 = vunpack.c.l.b16 %v3730
    %v5137 = vunpack.c.h.b16 %v3730
    %v5138 = vunpack.c.l.b16 %v3731
    %v5139 = vunpack.c.h.b16 %v3731
    %v5140 = vunpack.c.l.b16 %v3732
    %v5141 = vunpack.c.h.b16 %v3732
    %v5142 = vunpack.c.l.b16 %v3733
    %v5143 = vunpack.c.l.b16 %v3734
    %v5144 = vunpack.c.h.b16 %v3734
    %v5145 = vunpack.c.l.b16 %v3735
    %v5146 = vunpack.c.h.b16 %v3735
    %v5147 = vunpack.c.l.b16 %v3736
    %v5148 = vunpack.c.h.b16 %v3736
    %v5149 = vunpack.c.l.b16 %v3737
    %v5150 = vunpack.c.l.b16 %v3738
    %v5151 = vunpack.c.h.b16 %v3738
    %v5152 = vunpack.c.l.b16 %v3739
    %v5153 = vunpack.c.h.b16 %v3739
    %v5154 = vunpack.c.l.b16 %v3740
    %v5155 = vunpack.c.h.b16 %v3740
    %v5156 = vunpack.c.l.b16 %v3741
    %v5157 = vunpack.c.l.b16 %v3742
    %v5158 = vunpack.c.h.b16 %v3742
    %v5159 = vunpack.c.l.b16 %v3743
    %v5160 = vunpack.c.h.b16 %v3743
    %v5161 = vunpack.c.l.b16 %v3744
    %v5162 = vunpack.c.h.b16 %v3744
    %v5163 = vunpack.c.l.b16 %v3745
    %v5164 = vunpack.c.l.b16 %v3746
    %v5165 = vunpack.c.h.b16 %v3746
    %v5166 = vunpack.c.l.b16 %v3747
    %v5167 = vunpack.c.h.b16 %v3747
    %v5168 = vunpack.c.l.b16 %v3748
    %v5169 = vunpack.c.h.b16 %v3748
    %v5170 = vunpack.c.l.b16 %v3749
    %v5171 = vunpack.c.l.b16 %v3750
    %v5172 = vunpack.c.h.b16 %v3750
    %v5173 = vunpack.c.l.b16 %v3751
    %v5174 = vunpack.c.h.b16 %v3751
    %v5175 = vunpack.c.l.b16 %v3752
    %v5176 = vunpack.c.h.b16 %v3752
    %v5177 = vunpack.c.l.b16 %v3753
    %v5178 = vunpack.c.l.b16 %v3754
    %v5179 = vunpack.c.h.b16 %v3754
    %v5180 = vunpack.c.l.b16 %v3755
    %v5181 = vunpack.c.h.b16 %v3755
    %v5182 = vunpack.c.l.b16 %v3756
    %v5183 = vunpack.c.h.b16 %v3756
    %v5184 = vunpack.c.l.b16 %v3757
    %v5185 = vunpack.c.l.b16 %v3758
    %v5186 = vunpack.c.h.b16 %v3758
    %v5187 = vunpack.c.l.b16 %v3759
    %v5188 = vunpack.c.h.b16 %v3759
    %v5189 = vunpack.c.l.b16 %v3760
    %v5190 = vunpack.c.h.b16 %v3760
    %v5191 = vunpack.c.l.b16 %v3761
    %v5192 = vunpack.c.l.b16 %v3762
    %v5193 = vunpack.c.h.b16 %v3762
    %v5194 = vunpack.c.l.b16 %v3763
    %v5195 = vunpack.c.h.b16 %v3763
    %v5196 = vunpack.c.l.b16 %v3764
    %v5197 = vunpack.c.h.b16 %v3764
    %v5198 = vunpack.c.l.b16 %v3765
    %v5199 = vunpack.c.l.b16 %v3766
    %v5200 = vunpack.c.h.b16 %v3766
    %v5201 = vunpack.c.l.b16 %v3767
    %v5202 = vunpack.c.h.b16 %v3767
    %v5203 = vunpack.c.l.b16 %v3768
    %v5204 = vunpack.c.h.b16 %v3768
    %v5205 = vunpack.c.l.b16 %v3769
    %v5206 = vunpack.c.l.b16 %v3770
    %v5207 = vunpack.c.h.b16 %v3770
    %v5208 = vunpack.c.l.b16 %v3771
    %v5209 = vunpack.c.h.b16 %v3771
    %v5210 = vunpack.c.l.b16 %v3772
    %v5211 = vunpack.c.h.b16 %v3772
    %v5212 = vunpack.c.l.b16 %v3773
    %v5213 = vunpack.c.l.b16 %v3774
    %v5214 = vunpack.c.h.b16 %v3774
    %v5215 = vunpack.c.l.b16 %v3775
    %v5216 = vunpack.c.h.b16 %v3775
    %v5217 = vunpack.c.l.b16 %v3776
    %v5218 = vunpack.c.h.b16 %v3776
    %v5219 = vunpack.c.l.b16 %v3777
    %v5220 = vunpack.c.l.b16 %v3778
    %v5221 = vunpack.c.h.b16 %v3778
    %v5222 = vunpack.c.l.b16 %v3779
    %v5223 = vunpack.c.h.b16 %v3779
    %v5224 = vunpack.c.l.b16 %v3780
    %v5225 = vunpack.c.h.b16 %v3780
    %v5226 = vunpack.c.l.b16 %v3781
    %v5227 = vpack.c.b16 %v4338, %v4331
    %v5228 = vpack.c.b16 %v4339, %v4332
    %v5229 = vpack.c.b16 %v4340, %v4333
    %v5230 = vpack.c.b16 %v4341, %v4334
    %v5231 = vpack.c.b16 %v4342, %v4335
    %v5232 = vpack.c.b16 %v4343, %v4336
    %v5233 = vpack.c.b16 %v4344, %v4337
    %v5234 = vpack.c.b16 %v4352, %v4345
    %v5235 = vpack.c.b16 %v4353, %v4346
    %v5236 = vpack.c.b16 %v4354, %v4347
    %v5237 = vpack.c.b16 %v4355, %v4348
    %v5238 = vpack.c.b16 %v4356, %v4349
    %v5239 = vpack.c.b16 %v4357, %v4350
    %v5240 = vpack.c.b16 %v4358, %v4351
    %v5241 = vpack.c.b16 %v4366, %v4359
    %v5242 = vpack.c.b16 %v4367, %v4360
    %v5243 = vpack.c.b16 %v4368, %v4361
    %v5244 = vpack.c.b16 %v4369, %v4362
    %v5245 = vpack.c.b16 %v4370, %v4363
    %v5246 = vpack.c.b16 %v4371, %v4364
    %v5247 = vpack.c.b16 %v4372, %v4365
    %v5248 = vpack.c.b16 %v4380, %v4373
    %v5249 = vpack.c.b16 %v4381, %v4374
    %v5250 = vpack.c.b16 %v4382, %v4375
    %v5251 = vpack.c.b16 %v4383, %v4376
    %v5252 = vpack.c.b16 %v4384, %v4377
    %v5253 = vpack.c.b16 %v4385, %v4378
    %v5254 = vpack.c.b16 %v4386, %v4379
    %v5255 = vpack.c.b16 %v4394, %v4387
    %v5256 = vpack.c.b16 %v4395, %v4388
    %v5257 = vpack.c.b16 %v4396, %v4389
    %v5258 = vpack.c.b16 %v4397, %v4390
    %v5259 = vpack.c.b16 %v4398, %v4391
    %v5260 = vpack.c.b16 %v4399, %v4392
    %v5261 = vpack.c.b16 %v4400, %v4393
    %v5262 = vpack.c.b16 %v4408, %v4401
    %v5263 = vpack.c.b16 %v4409, %v4402
    %v5264 = vpack.c.b16 %v4410, %v4403
    %v5265 = vpack.c.b16 %v4411, %v4404
    %v5266 = vpack.c.b16 %v4412, %v4405
    %v5267 = vpack.c.b16 %v4413, %v4406
    %v5268 = vpack.c.b16 %v4414, %v4407
    %v5269 = vpack.c.b16 %v4422, %v4415
    %v5270 = vpack.c.b16 %v4423, %v4416
    %v5271 = vpack.c.b16 %v4424, %v4417
    %v5272 = vpack.c.b16 %v4425, %v4418
    %v5273 = vpack.c.b16 %v4426, %v4419
    %v5274 = vpack.c.b16 %v4427, %v4420
    %v5275 = vpack.c.b16 %v4428, %v4421
    %v5276 = vpack.c.b16 %v4436, %v4429
    %v5277 = vpack.c.b16 %v4437, %v4430
    %v5278 = vpack.c.b16 %v4438, %v4431
    %v5279 = vpack.c.b16 %v4439, %v4432
    %v5280 = vpack.c.b16 %v4440, %v4433
    %v5281 = vpack.c.b16 %v4441, %v4434
    %v5282 = vpack.c.b16 %v4442, %v4435
    %v5283 = vpack.c.b16 %v4450, %v4443
    %v5284 = vpack.c.b16 %v4451, %v4444
    %v5285 = vpack.c.b16 %v4452, %v4445
    %v5286 = vpack.c.b16 %v4453, %v4446
    %v5287 = vpack.c.b16 %v4454, %v4447
    %v5288 = vpack.c.b16 %v4455, %v4448
    %v5289 = vpack.c.b16 %v4456, %v4449
    %v5290 = vpack.c.b16 %v4464, %v4457
    %v5291 = vpack.c.b16 %v4465, %v4458
    %v5292 = vpack.c.b16 %v4466, %v4459
    %v5293 = vpack.c.b16 %v4467, %v4460
    %v5294 = vpack.c.b16 %v4468, %v4461
    %v5295 = vpack.c.b16 %v4469, %v4462
    %v5296 = vpack.c.b16 %v4470, %v4463
    %v5297 = vpack.c.b16 %v4478, %v4471
    %v5298 = vpack.c.b16 %v4479, %v4472
    %v5299 = vpack.c.b16 %v4480, %v4473
    %v5300 = vpack.c.b16 %v4481, %v4474
    %v5301 = vpack.c.b16 %v4482, %v4475
    %v5302 = vpack.c.b16 %v4483, %v4476
    %v5303 = vpack.c.b16 %v4484, %v4477
    %v5304 = vpack.c.b16 %v4492, %v4485
    %v5305 = vpack.c.b16 %v4493, %v4486
    %v5306 = vpack.c.b16 %v4494, %v4487
    %v5307 = vpack.c.b16 %v4495, %v4488
    %v5308 = vpack.c.b16 %v4496, %v4489
    %v5309 = vpack.c.b16 %v4497, %v4490
    %v5310 = vpack.c.b16 %v4498, %v4491
    %v5311 = vpack.c.b16 %v4506, %v4499
    %v5312 = vpack.c.b16 %v4507, %v4500
    %v5313 = vpack.c.b16 %v4508, %v4501
    %v5314 = vpack.c.b16 %v4509, %v4502
    %v5315 = vpack.c.b16 %v4510, %v4503
    %v5316 = vpack.c.b16 %v4511, %v4504
    %v5317 = vpack.c.b16 %v4512, %v4505
    %v5318 = vpack.c.b16 %v4520, %v4513
    %v5319 = vpack.c.b16 %v4521, %v4514
    %v5320 = vpack.c.b16 %v4522, %v4515
    %v5321 = vpack.c.b16 %v4523, %v4516
    %v5322 = vpack.c.b16 %v4524, %v4517
    %v5323 = vpack.c.b16 %v4525, %v4518
    %v5324 = vpack.c.b16 %v4526, %v4519
    %v5325 = vpack.c.b16 %v4534, %v4527
    %v5326 = vpack.c.b16 %v4535, %v4528
    %v5327 = vpack.c.b16 %v4536, %v4529
    %v5328 = vpack.c.b16 %v4537, %v4530
    %v5329 = vpack.c.b16 %v4538, %v4531
    %v5330 = vpack.c.b16 %v4539, %v4532
    %v5331 = vpack.c.b16 %v4540, %v4533
    %v5332 = vpack.c.b16 %v4548, %v4541
    %v5333 = vpack.c.b16 %v4549, %v4542
    %v5334 = vpack.c.b16 %v4550, %v4543
    %v5335 = vpack.c.b16 %v4551, %v4544
    %v5336 = vpack.c.b16 %v4552, %v4545
    %v5337 = vpack.c.b16 %v4553, %v4546
    %v5338 = vpack.c.b16 %v4554, %v4547
    %v5339 = vpack.c.b16 %v4562, %v4555
    %v5340 = vpack.c.b16 %v4563, %v4556
    %v5341 = vpack.c.b16 %v4564, %v4557
    %v5342 = vpack.c.b16 %v4565, %v4558
    %v5343 = vpack.c.b16 %v4566, %v4559
    %v5344 = vpack.c.b16 %v4567, %v4560
    %v5345 = vpack.c.b16 %v4568, %v4561
    %v5346 = vpack.c.b16 %v4576, %v4569
    %v5347 = vpack.c.b16 %v4577, %v4570
    %v5348 = vpack.c.b16 %v4578, %v4571
    %v5349 = vpack.c.b16 %v4579, %v4572
    %v5350 = vpack.c.b16 %v4580, %v4573
    %v5351 = vpack.c.b16 %v4581, %v4574
    %v5352 = vpack.c.b16 %v4582, %v4575
    %v5353 = vpack.c.b16 %v4590, %v4583
    %v5354 = vpack.c.b16 %v4591, %v4584
    %v5355 = vpack.c.b16 %v4592, %v4585
    %v5356 = vpack.c.b16 %v4593, %v4586
    %v5357 = vpack.c.b16 %v4594, %v4587
    %v5358 = vpack.c.b16 %v4595, %v4588
    %v5359 = vpack.c.b16 %v4596, %v4589
    %v5360 = vpack.c.b16 %v4604, %v4597
    %v5361 = vpack.c.b16 %v4605, %v4598
    %v5362 = vpack.c.b16 %v4606, %v4599
    %v5363 = vpack.c.b16 %v4607, %v4600
    %v5364 = vpack.c.b16 %v4608, %v4601
    %v5365 = vpack.c.b16 %v4609, %v4602
    %v5366 = vpack.c.b16 %v4610, %v4603
    %v5367 = vpack.c.b16 %v4618, %v4611
    %v5368 = vpack.c.b16 %v4619, %v4612
    %v5369 = vpack.c.b16 %v4620, %v4613
    %v5370 = vpack.c.b16 %v4621, %v4614
    %v5371 = vpack.c.b16 %v4622, %v4615
    %v5372 = vpack.c.b16 %v4623, %v4616
    %v5373 = vpack.c.b16 %v4624, %v4617
    %v5374 = vpack.c.b16 %v4632, %v4625
    %v5375 = vpack.c.b16 %v4633, %v4626
    %v5376 = vpack.c.b16 %v4634, %v4627
    %v5377 = vpack.c.b16 %v4635, %v4628
    %v5378 = vpack.c.b16 %v4636, %v4629
    %v5379 = vpack.c.b16 %v4637, %v4630
    %v5380 = vpack.c.b16 %v4638, %v4631
    %v5381 = vpack.c.b16 %v4646, %v4639
    %v5382 = vpack.c.b16 %v4647, %v4640
    %v5383 = vpack.c.b16 %v4648, %v4641
    %v5384 = vpack.c.b16 %v4649, %v4642
    %v5385 = vpack.c.b16 %v4650, %v4643
    %v5386 = vpack.c.b16 %v4651, %v4644
    %v5387 = vpack.c.b16 %v4652, %v4645
    %v5388 = vpack.c.b16 %v4660, %v4653
    %v5389 = vpack.c.b16 %v4661, %v4654
    %v5390 = vpack.c.b16 %v4662, %v4655
    %v5391 = vpack.c.b16 %v4663, %v4656
    %v5392 = vpack.c.b16 %v4664, %v4657
    %v5393 = vpack.c.b16 %v4665, %v4658
    %v5394 = vpack.c.b16 %v4666, %v4659
    %v5395 = vpack.c.b16 %v4674, %v4667
    %v5396 = vpack.c.b16 %v4675, %v4668
    %v5397 = vpack.c.b16 %v4676, %v4669
    %v5398 = vpack.c.b16 %v4677, %v4670
    %v5399 = vpack.c.b16 %v4678, %v4671
    %v5400 = vpack.c.b16 %v4679, %v4672
    %v5401 = vpack.c.b16 %v4680, %v4673
    %v5402 = vpack.c.b16 %v4688, %v4681
    %v5403 = vpack.c.b16 %v4689, %v4682
    %v5404 = vpack.c.b16 %v4690, %v4683
    %v5405 = vpack.c.b16 %v4691, %v4684
    %v5406 = vpack.c.b16 %v4692, %v4685
    %v5407 = vpack.c.b16 %v4693, %v4686
    %v5408 = vpack.c.b16 %v4694, %v4687
    %v5409 = vpack.c.b16 %v4702, %v4695
    %v5410 = vpack.c.b16 %v4703, %v4696
    %v5411 = vpack.c.b16 %v4704, %v4697
    %v5412 = vpack.c.b16 %v4705, %v4698
    %v5413 = vpack.c.b16 %v4706, %v4699
    %v5414 = vpack.c.b16 %v4707, %v4700
    %v5415 = vpack.c.b16 %v4708, %v4701
    %v5416 = vpack.c.b16 %v4716, %v4709
    %v5417 = vpack.c.b16 %v4717, %v4710
    %v5418 = vpack.c.b16 %v4718, %v4711
    %v5419 = vpack.c.b16 %v4719, %v4712
    %v5420 = vpack.c.b16 %v4720, %v4713
    %v5421 = vpack.c.b16 %v4721, %v4714
    %v5422 = vpack.c.b16 %v4722, %v4715
    %v5423 = vpack.c.b16 %v4730, %v4723
    %v5424 = vpack.c.b16 %v4731, %v4724
    %v5425 = vpack.c.b16 %v4732, %v4725
    %v5426 = vpack.c.b16 %v4733, %v4726
    %v5427 = vpack.c.b16 %v4734, %v4727
    %v5428 = vpack.c.b16 %v4735, %v4728
    %v5429 = vpack.c.b16 %v4736, %v4729
    %v5430 = vpack.c.b16 %v4744, %v4737
    %v5431 = vpack.c.b16 %v4745, %v4738
    %v5432 = vpack.c.b16 %v4746, %v4739
    %v5433 = vpack.c.b16 %v4747, %v4740
    %v5434 = vpack.c.b16 %v4748, %v4741
    %v5435 = vpack.c.b16 %v4749, %v4742
    %v5436 = vpack.c.b16 %v4750, %v4743
    %v5437 = vpack.c.b16 %v4758, %v4751
    %v5438 = vpack.c.b16 %v4759, %v4752
    %v5439 = vpack.c.b16 %v4760, %v4753
    %v5440 = vpack.c.b16 %v4761, %v4754
    %v5441 = vpack.c.b16 %v4762, %v4755
    %v5442 = vpack.c.b16 %v4763, %v4756
    %v5443 = vpack.c.b16 %v4764, %v4757
    %v5444 = vpack.c.b16 %v4772, %v4765
    %v5445 = vpack.c.b16 %v4773, %v4766
    %v5446 = vpack.c.b16 %v4774, %v4767
    %v5447 = vpack.c.b16 %v4775, %v4768
    %v5448 = vpack.c.b16 %v4776, %v4769
    %v5449 = vpack.c.b16 %v4777, %v4770
    %v5450 = vpack.c.b16 %v4778, %v4771
    %v5451 = vpack.c.b16 %v4786, %v4779
    %v5452 = vpack.c.b16 %v4787, %v4780
    %v5453 = vpack.c.b16 %v4788, %v4781
    %v5454 = vpack.c.b16 %v4789, %v4782
    %v5455 = vpack.c.b16 %v4790, %v4783
    %v5456 = vpack.c.b16 %v4791, %v4784
    %v5457 = vpack.c.b16 %v4792, %v4785
    %v5458 = vpack.c.b16 %v4800, %v4793
    %v5459 = vpack.c.b16 %v4801, %v4794
    %v5460 = vpack.c.b16 %v4802, %v4795
    %v5461 = vpack.c.b16 %v4803, %v4796
    %v5462 = vpack.c.b16 %v4804, %v4797
    %v5463 = vpack.c.b16 %v4805, %v4798
    %v5464 = vpack.c.b16 %v4806, %v4799
    %v5465 = vpack.c.b16 %v4814, %v4807
    %v5466 = vpack.c.b16 %v4815, %v4808
    %v5467 = vpack.c.b16 %v4816, %v4809
    %v5468 = vpack.c.b16 %v4817, %v4810
    %v5469 = vpack.c.b16 %v4818, %v4811
    %v5470 = vpack.c.b16 %v4819, %v4812
    %v5471 = vpack.c.b16 %v4820, %v4813
    %v5472 = vpack.c.b16 %v4828, %v4821
    %v5473 = vpack.c.b16 %v4829, %v4822
    %v5474 = vpack.c.b16 %v4830, %v4823
    %v5475 = vpack.c.b16 %v4831, %v4824
    %v5476 = vpack.c.b16 %v4832, %v4825
    %v5477 = vpack.c.b16 %v4833, %v4826
    %v5478 = vpack.c.b16 %v4834, %v4827
    %v5479 = vpack.c.b16 %v4842, %v4835
    %v5480 = vpack.c.b16 %v4843, %v4836
    %v5481 = vpack.c.b16 %v4844, %v4837
    %v5482 = vpack.c.b16 %v4845, %v4838
    %v5483 = vpack.c.b16 %v4846, %v4839
    %v5484 = vpack.c.b16 %v4847, %v4840
    %v5485 = vpack.c.b16 %v4848, %v4841
    %v5486 = vpack.c.b16 %v4856, %v4849
    %v5487 = vpack.c.b16 %v4857, %v4850
    %v5488 = vpack.c.b16 %v4858, %v4851
    %v5489 = vpack.c.b16 %v4859, %v4852
    %v5490 = vpack.c.b16 %v4860, %v4853
    %v5491 = vpack.c.b16 %v4861, %v4854
    %v5492 = vpack.c.b16 %v4862, %v4855
    %v5493 = vpack.c.b16 %v4870, %v4863
    %v5494 = vpack.c.b16 %v4871, %v4864
    %v5495 = vpack.c.b16 %v4872, %v4865
    %v5496 = vpack.c.b16 %v4873, %v4866
    %v5497 = vpack.c.b16 %v4874, %v4867
    %v5498 = vpack.c.b16 %v4875, %v4868
    %v5499 = vpack.c.b16 %v4876, %v4869
    %v5500 = vpack.c.b16 %v4884, %v4877
    %v5501 = vpack.c.b16 %v4885, %v4878
    %v5502 = vpack.c.b16 %v4886, %v4879
    %v5503 = vpack.c.b16 %v4887, %v4880
    %v5504 = vpack.c.b16 %v4888, %v4881
    %v5505 = vpack.c.b16 %v4889, %v4882
    %v5506 = vpack.c.b16 %v4890, %v4883
    %v5507 = vpack.c.b16 %v4898, %v4891
    %v5508 = vpack.c.b16 %v4899, %v4892
    %v5509 = vpack.c.b16 %v4900, %v4893
    %v5510 = vpack.c.b16 %v4901, %v4894
    %v5511 = vpack.c.b16 %v4902, %v4895
    %v5512 = vpack.c.b16 %v4903, %v4896
    %v5513 = vpack.c.b16 %v4904, %v4897
    %v5514 = vpack.c.b16 %v4912, %v4905
    %v5515 = vpack.c.b16 %v4913, %v4906
    %v5516 = vpack.c.b16 %v4914, %v4907
    %v5517 = vpack.c.b16 %v4915, %v4908
    %v5518 = vpack.c.b16 %v4916, %v4909
    %v5519 = vpack.c.b16 %v4917, %v4910
    %v5520 = vpack.c.b16 %v4918, %v4911
    %v5521 = vpack.c.b16 %v4926, %v4919
    %v5522 = vpack.c.b16 %v4927, %v4920
    %v5523 = vpack.c.b16 %v4928, %v4921
    %v5524 = vpack.c.b16 %v4929, %v4922
    %v5525 = vpack.c.b16 %v4930, %v4923
    %v5526 = vpack.c.b16 %v4931, %v4924
    %v5527 = vpack.c.b16 %v4932, %v4925
    %v5528 = vpack.c.b16 %v4940, %v4933
    %v5529 = vpack.c.b16 %v4941, %v4934
    %v5530 = vpack.c.b16 %v4942, %v4935
    %v5531 = vpack.c.b16 %v4943, %v4936
    %v5532 = vpack.c.b16 %v4944, %v4937
    %v5533 = vpack.c.b16 %v4945, %v4938
    %v5534 = vpack.c.b16 %v4946, %v4939
    %v5535 = vpack.c.b16 %v4954, %v4947
    %v5536 = vpack.c.b16 %v4955, %v4948
    %v5537 = vpack.c.b16 %v4956, %v4949
    %v5538 = vpack.c.b16 %v4957, %v4950
    %v5539 = vpack.c.b16 %v4958, %v4951
    %v5540 = vpack.c.b16 %v4959, %v4952
    %v5541 = vpack.c.b16 %v4960, %v4953
    %v5542 = vpack.c.b16 %v4968, %v4961
    %v5543 = vpack.c.b16 %v4969, %v4962
    %v5544 = vpack.c.b16 %v4970, %v4963
    %v5545 = vpack.c.b16 %v4971, %v4964
    %v5546 = vpack.c.b16 %v4972, %v4965
    %v5547 = vpack.c.b16 %v4973, %v4966
    %v5548 = vpack.c.b16 %v4974, %v4967
    %v5549 = vpack.c.b16 %v4982, %v4975
    %v5550 = vpack.c.b16 %v4983, %v4976
    %v5551 = vpack.c.b16 %v4984, %v4977
    %v5552 = vpack.c.b16 %v4985, %v4978
    %v5553 = vpack.c.b16 %v4986, %v4979
    %v5554 = vpack.c.b16 %v4987, %v4980
    %v5555 = vpack.c.b16 %v4988, %v4981
    %v5556 = vpack.c.b16 %v4996, %v4989
    %v5557 = vpack.c.b16 %v4997, %v4990
    %v5558 = vpack.c.b16 %v4998, %v4991
    %v5559 = vpack.c.b16 %v4999, %v4992
    %v5560 = vpack.c.b16 %v5000, %v4993
    %v5561 = vpack.c.b16 %v5001, %v4994
    %v5562 = vpack.c.b16 %v5002, %v4995
    %v5563 = vpack.c.b16 %v5010, %v5003
    %v5564 = vpack.c.b16 %v5011, %v5004
    %v5565 = vpack.c.b16 %v5012, %v5005
    %v5566 = vpack.c.b16 %v5013, %v5006
    %v5567 = vpack.c.b16 %v5014, %v5007
    %v5568 = vpack.c.b16 %v5015, %v5008
    %v5569 = vpack.c.b16 %v5016, %v5009
    %v5570 = vpack.c.b16 %v5024, %v5017
    %v5571 = vpack.c.b16 %v5025, %v5018
    %v5572 = vpack.c.b16 %v5026, %v5019
    %v5573 = vpack.c.b16 %v5027, %v5020
    %v5574 = vpack.c.b16 %v5028, %v5021
    %v5575 = vpack.c.b16 %v5029, %v5022
    %v5576 = vpack.c.b16 %v5030, %v5023
    %v5577 = vpack.c.b16 %v5038, %v5031
    %v5578 = vpack.c.b16 %v5039, %v5032
    %v5579 = vpack.c.b16 %v5040, %v5033
    %v5580 = vpack.c.b16 %v5041, %v5034
    %v5581 = vpack.c.b16 %v5042, %v5035
    %v5582 = vpack.c.b16 %v5043, %v5036
    %v5583 = vpack.c.b16 %v5044, %v5037
    %v5584 = vpack.c.b16 %v5052, %v5045
    %v5585 = vpack.c.b16 %v5053, %v5046
    %v5586 = vpack.c.b16 %v5054, %v5047
    %v5587 = vpack.c.b16 %v5055, %v5048
    %v5588 = vpack.c.b16 %v5056, %v5049
    %v5589 = vpack.c.b16 %v5057, %v5050
    %v5590 = vpack.c.b16 %v5058, %v5051
    %v5591 = vpack.c.b16 %v5066, %v5059
    %v5592 = vpack.c.b16 %v5067, %v5060
    %v5593 = vpack.c.b16 %v5068, %v5061
    %v5594 = vpack.c.b16 %v5069, %v5062
    %v5595 = vpack.c.b16 %v5070, %v5063
    %v5596 = vpack.c.b16 %v5071, %v5064
    %v5597 = vpack.c.b16 %v5072, %v5065
    %v5598 = vpack.c.b16 %v5080, %v5073
    %v5599 = vpack.c.b16 %v5081, %v5074
    %v5600 = vpack.c.b16 %v5082, %v5075
    %v5601 = vpack.c.b16 %v5083, %v5076
    %v5602 = vpack.c.b16 %v5084, %v5077
    %v5603 = vpack.c.b16 %v5085, %v5078
    %v5604 = vpack.c.b16 %v5086, %v5079
    %v5605 = vpack.c.b16 %v5094, %v5087
    %v5606 = vpack.c.b16 %v5095, %v5088
    %v5607 = vpack.c.b16 %v5096, %v5089
    %v5608 = vpack.c.b16 %v5097, %v5090
    %v5609 = vpack.c.b16 %v5098, %v5091
    %v5610 = vpack.c.b16 %v5099, %v5092
    %v5611 = vpack.c.b16 %v5100, %v5093
    %v5612 = vpack.c.b16 %v5108, %v5101
    %v5613 = vpack.c.b16 %v5109, %v5102
    %v5614 = vpack.c.b16 %v5110, %v5103
    %v5615 = vpack.c.b16 %v5111, %v5104
    %v5616 = vpack.c.b16 %v5112, %v5105
    %v5617 = vpack.c.b16 %v5113, %v5106
    %v5618 = vpack.c.b16 %v5114, %v5107
    %v5619 = vpack.c.b16 %v5122, %v5115
    %v5620 = vpack.c.b16 %v5123, %v5116
    %v5621 = vpack.c.b16 %v5124, %v5117
    %v5622 = vpack.c.b16 %v5125, %v5118
    %v5623 = vpack.c.b16 %v5126, %v5119
    %v5624 = vpack.c.b16 %v5127, %v5120
    %v5625 = vpack.c.b16 %v5128, %v5121
    %v5626 = vpack.c.b16 %v5136, %v5129
    %v5627 = vpack.c.b16 %v5137, %v5130
    %v5628 = vpack.c.b16 %v5138, %v5131
    %v5629 = vpack.c.b16 %v5139, %v5132
    %v5630 = vpack.c.b16 %v5140, %v5133
    %v5631 = vpack.c.b16 %v5141, %v5134
    %v5632 = vpack.c.b16 %v5142, %v5135
    %v5633 = vpack.c.b16 %v5150, %v5143
    %v5634 = vpack.c.b16 %v5151, %v5144
    %v5635 = vpack.c.b16 %v5152, %v5145
    %v5636 = vpack.c.b16 %v5153, %v5146
    %v5637 = vpack.c.b16 %v5154, %v5147
    %v5638 = vpack.c.b16 %v5155, %v5148
    %v5639 = vpack.c.b16 %v5156, %v5149
    %v5640 = vpack.c.b16 %v5164, %v5157
    %v5641 = vpack.c.b16 %v5165, %v5158
    %v5642 = vpack.c.b16 %v5166, %v5159
    %v5643 = vpack.c.b16 %v5167, %v5160
    %v5644 = vpack.c.b16 %v5168, %v5161
    %v5645 = vpack.c.b16 %v5169, %v5162
    %v5646 = vpack.c.b16 %v5170, %v5163
    %v5647 = vpack.c.b16 %v5178, %v5171
    %v5648 = vpack.c.b16 %v5179, %v5172
    %v5649 = vpack.c.b16 %v5180, %v5173
    %v5650 = vpack.c.b16 %v5181, %v5174
    %v5651 = vpack.c.b16 %v5182, %v5175
    %v5652 = vpack.c.b16 %v5183, %v5176
    %v5653 = vpack.c.b16 %v5184, %v5177
    %v5654 = vpack.c.b16 %v5192, %v5185
    %v5655 = vpack.c.b16 %v5193, %v5186
    %v5656 = vpack.c.b16 %v5194, %v5187
    %v5657 = vpack.c.b16 %v5195, %v5188
    %v5658 = vpack.c.b16 %v5196, %v5189
    %v5659 = vpack.c.b16 %v5197, %v5190
    %v5660 = vpack.c.b16 %v5198, %v5191
    %v5661 = vpack.c.b16 %v5206, %v5199
    %v5662 = vpack.c.b16 %v5207, %v5200
    %v5663 = vpack.c.b16 %v5208, %v5201
    %v5664 = vpack.c.b16 %v5209, %v5202
    %v5665 = vpack.c.b16 %v5210, %v5203
    %v5666 = vpack.c.b16 %v5211, %v5204
    %v5667 = vpack.c.b16 %v5212, %v5205
    %v5668 = vpack.c.b16 %v5220, %v5213
    %v5669 = vpack.c.b16 %v5221, %v5214
    %v5670 = vpack.c.b16 %v5222, %v5215
    %v5671 = vpack.c.b16 %v5223, %v5216
    %v5672 = vpack.c.b16 %v5224, %v5217
    %v5673 = vpack.c.b16 %v5225, %v5218
    %v5674 = vpack.c.b16 %v5226, %v5219
    %6123 = vmatprep.subr.bf16.mxu0 %v5228
    %6124 = vmatpush1.bf16.msra.mxu0 %v5227
    %6125 = vmatprep.subr.bf16.mxu0 %v5235
    %6126 = vmatpush1.bf16.msra.mxu0 %v5234
    %6127 = vmatprep.subr.bf16.mxu0 %v5242
    %6128 = vmatpush1.bf16.msra.mxu0 %v5241
    %6129 = vmatprep.subr.bf16.mxu0 %v5249
    %6130 = vmatpush1.bf16.msra.mxu0 %v5248
    %6131 = vmatprep.subr.bf16.mxu0 %v5256
    %6132 = vmatpush1.bf16.msra.mxu0 %v5255
    %6133 = vmatprep.subr.bf16.mxu0 %v5263
    %6134 = vmatpush1.bf16.msra.mxu0 %v5262
    %6135 = vmatprep.subr.bf16.mxu0 %v5270
    %6136 = vmatpush1.bf16.msra.mxu0 %v5269
    %6137 = vmatprep.subr.bf16.mxu0 %v5277
    %6138 = vmatpush1.bf16.msra.mxu0 %v5276
    %6139 = vmatprep.subr.bf16.mxu0 %v5284
    %6140 = vmatpush1.bf16.msra.mxu0 %v5283
    %6141 = vmatprep.subr.bf16.mxu0 %v5291
    %6142 = vmatpush1.bf16.msra.mxu0 %v5290
    %6143 = vmatprep.subr.bf16.mxu0 %v5298
    %6144 = vmatpush1.bf16.msra.mxu0 %v5297
    %6145 = vmatprep.subr.bf16.mxu0 %v5305
    %6146 = vmatpush1.bf16.msra.mxu0 %v5304
    %6147 = vmatprep.subr.bf16.mxu0 %v5312
    %6148 = vmatpush1.bf16.msra.mxu0 %v5311
    %6149 = vmatprep.subr.bf16.mxu0 %v5319
    %6150 = vmatpush1.bf16.msra.mxu0 %v5318
    %6151 = vmatprep.subr.bf16.mxu0 %v5326
    %6152 = vmatpush1.bf16.msra.mxu0 %v5325
    %6153 = vmatprep.subr.bf16.mxu0 %v5333
    %6154 = vmatpush1.bf16.msra.mxu0 %v5332
    %6155 = vmatprep.mubr.bf16.mxu0 %v3263
    %6156 = vmatmul.mubr.bf16.gmra.mrb[0].mxu0 %v3262
    %v6157 = vpop.f32.mrb[0].mxu0
    %v6158 = vadd.f32 %v3787, %v6157
    %v6159 = vpop.f32.mrb[0].mxu0
    %v6160 = vadd.f32 %v3791, %v6159
    %v6161 = vpop.f32.mrb[0].mxu0
    %v6162 = vpop.f32.mrb[0].mxu0
    %6163 = vdwg.mxu0
    %6164 = vmatprep.subr.bf16.mxu0 %v5340
    %6165 = vmatpush1.bf16.msra.mxu0 %v5339
    %6166 = vmatprep.subr.bf16.mxu0 %v5347
    %6167 = vmatpush1.bf16.msra.mxu0 %v5346
    %6168 = vmatprep.subr.bf16.mxu0 %v5354
    %6169 = vmatpush1.bf16.msra.mxu0 %v5353
    %6170 = vmatprep.subr.bf16.mxu0 %v5361
    %6171 = vmatpush1.bf16.msra.mxu0 %v5360
    %6172 = vmatprep.subr.bf16.mxu0 %v5368
    %6173 = vmatpush1.bf16.msra.mxu0 %v5367
    %6174 = vmatprep.subr.bf16.mxu0 %v5375
    %6175 = vmatpush1.bf16.msra.mxu0 %v5374
    %6176 = vmatprep.subr.bf16.mxu0 %v5382
    %6177 = vmatpush1.bf16.msra.mxu0 %v5381
    %6178 = vmatprep.subr.bf16.mxu0 %v5389
    %6179 = vmatpush1.bf16.msra.mxu0 %v5388
    %6180 = vmatprep.subr.bf16.mxu0 %v5396
    %6181 = vmatpush1.bf16.msra.mxu0 %v5395
    %6182 = vmatprep.subr.bf16.mxu0 %v5403
    %6183 = vmatpush1.bf16.msra.mxu0 %v5402
    %6184 = vmatprep.subr.bf16.mxu0 %v5410
    %6185 = vmatpush1.bf16.msra.mxu0 %v5409
    %6186 = vmatprep.subr.bf16.mxu0 %v5417
    %6187 = vmatpush1.bf16.msra.mxu0 %v5416
    %6188 = vmatprep.subr.bf16.mxu0 %v5424
    %6189 = vmatpush1.bf16.msra.mxu0 %v5423
    %6190 = vmatprep.subr.bf16.mxu0 %v5431
    %6191 = vmatpush1.bf16.msra.mxu0 %v5430
    %6192 = vmatprep.subr.bf16.mxu0 %v5438
    %6193 = vmatpush1.bf16.msra.mxu0 %v5437
    %6194 = vmatprep.subr.bf16.mxu0 %v5445
    %6195 = vmatpush1.bf16.msra.mxu0 %v5444
    %6196 = vmatprep.mubr.bf16.mxu0 %v3265
    %6197 = vmatmul.mubr.bf16.gmra.mrb[0].mxu0 %v3264
    %v6198 = vpop.f32.mrb[0].mxu0
    %v6199 = vadd.f32 %v6158, %v6198
    %v6200 = vpop.f32.mrb[0].mxu0
    %v6201 = vadd.f32 %v6160, %v6200
    %v6202 = vpop.f32.mrb[0].mxu0
    %v6203 = vpop.f32.mrb[0].mxu0
    %6204 = vdwg.mxu0
    %6205 = vmatprep.subr.bf16.mxu0 %v5452
    %6206 = vmatpush1.bf16.msra.mxu0 %v5451
    %6207 = vmatprep.subr.bf16.mxu0 %v5459
    %6208 = vmatpush1.bf16.msra.mxu0 %v5458
    %6209 = vmatprep.subr.bf16.mxu0 %v5466
    %6210 = vmatpush1.bf16.msra.mxu0 %v5465
    %6211 = vmatprep.subr.bf16.mxu0 %v5473
    %6212 = vmatpush1.bf16.msra.mxu0 %v5472
    %6213 = vmatprep.subr.bf16.mxu0 %v5480
    %6214 = vmatpush1.bf16.msra.mxu0 %v5479
    %6215 = vmatprep.subr.bf16.mxu0 %v5487
    %6216 = vmatpush1.bf16.msra.mxu0 %v5486
    %6217 = vmatprep.subr.bf16.mxu0 %v5494
    %6218 = vmatpush1.bf16.msra.mxu0 %v5493
    %6219 = vmatprep.subr.bf16.mxu0 %v5501
    %6220 = vmatpush1.bf16.msra.mxu0 %v5500
    %6221 = vmatprep.subr.bf16.mxu0 %v5508
    %6222 = vmatpush1.bf16.msra.mxu0 %v5507
    %6223 = vmatprep.subr.bf16.mxu0 %v5515
    %6224 = vmatpush1.bf16.msra.mxu0 %v5514
    %6225 = vmatprep.subr.bf16.mxu0 %v5522
    %6226 = vmatpush1.bf16.msra.mxu0 %v5521
    %6227 = vmatprep.subr.bf16.mxu0 %v5529
    %6228 = vmatpush1.bf16.msra.mxu0 %v5528
    %6229 = vmatprep.subr.bf16.mxu0 %v5536
    %6230 = vmatpush1.bf16.msra.mxu0 %v5535
    %6231 = vmatprep.subr.bf16.mxu0 %v5543
    %6232 = vmatpush1.bf16.msra.mxu0 %v5542
    %6233 = vmatprep.subr.bf16.mxu0 %v5550
    %6234 = vmatpush1.bf16.msra.mxu0 %v5549
    %6235 = vmatprep.subr.bf16.mxu0 %v5557
    %6236 = vmatpush1.bf16.msra.mxu0 %v5556
    %6237 = vmatprep.mubr.bf16.mxu0 %v3267
    %6238 = vmatmul.mubr.bf16.gmra.mrb[0].mxu0 %v3266
    %v6239 = vpop.f32.mrb[0].mxu0
    %v6240 = vadd.f32 %v6199, %v6239
    %v6241 = vpop.f32.mrb[0].mxu0
    %v6242 = vadd.f32 %v6201, %v6241
    %v6243 = vpop.f32.mrb[0].mxu0
    %v6244 = vpop.f32.mrb[0].mxu0
    %6245 = vdwg.mxu0
    %6246 = vmatprep.subr.bf16.mxu0 %v5564
    %6247 = vmatpush1.bf16.msra.mxu0 %v5563
    %6248 = vmatprep.subr.bf16.mxu0 %v5571
    %6249 = vmatpush1.bf16.msra.mxu0 %v5570
    %6250 = vmatprep.subr.bf16.mxu0 %v5578
    %6251 = vmatpush1.bf16.msra.mxu0 %v5577
    %6252 = vmatprep.subr.bf16.mxu0 %v5585
    %6253 = vmatpush1.bf16.msra.mxu0 %v5584
    %6254 = vmatprep.subr.bf16.mxu0 %v5592
    %6255 = vmatpush1.bf16.msra.mxu0 %v5591
    %6256 = vmatprep.subr.bf16.mxu0 %v5599
    %6257 = vmatpush1.bf16.msra.mxu0 %v5598
    %6258 = vmatprep.subr.bf16.mxu0 %v5606
    %6259 = vmatpush1.bf16.msra.mxu0 %v5605
    %6260 = vmatprep.subr.bf16.mxu0 %v5613
    %6261 = vmatpush1.bf16.msra.mxu0 %v5612
    %6262 = vmatprep.subr.bf16.mxu0 %v5620
    %6263 = vmatpush1.bf16.msra.mxu0 %v5619
    %6264 = vmatprep.subr.bf16.mxu0 %v5627
    %6265 = vmatpush1.bf16.msra.mxu0 %v5626
    %6266 = vmatprep.subr.bf16.mxu0 %v5634
    %6267 = vmatpush1.bf16.msra.mxu0 %v5633
    %6268 = vmatprep.subr.bf16.mxu0 %v5641
    %6269 = vmatpush1.bf16.msra.mxu0 %v5640
    %6270 = vmatprep.subr.bf16.mxu0 %v5648
    %6271 = vmatpush1.bf16.msra.mxu0 %v5647
    %6272 = vmatprep.subr.bf16.mxu0 %v5655
    %6273 = vmatpush1.bf16.msra.mxu0 %v5654
    %6274 = vmatprep.subr.bf16.mxu0 %v5662
    %6275 = vmatpush1.bf16.msra.mxu0 %v5661
    %6276 = vmatprep.subr.bf16.mxu0 %v5669
    %6277 = vmatpush1.bf16.msra.mxu0 %v5668
    %6278 = vmatprep.mubr.bf16.mxu0 %v3269
    %6279 = vmatmul.mubr.bf16.gmra.mrb[0].mxu0 %v3268
    %v6280 = vpop.f32.mrb[0].mxu0
    %v6281 = vadd.f32 %v6240, %v6280
    %v6282 = vpop.f32.mrb[0].mxu0
    %v6283 = vadd.f32 %v6242, %v6282
    %v6284 = vpop.f32.mrb[0].mxu0
    %v6285 = vpop.f32.mrb[0].mxu0
    %6286 = vdwg.mxu0
    %6287 = vmatprep.subr.bf16.mxu0 %v5230
    %6288 = vmatpush1.bf16.msra.mxu0 %v5229
    %6289 = vmatprep.subr.bf16.mxu0 %v5237
    %6290 = vmatpush1.bf16.msra.mxu0 %v5236
    %6291 = vmatprep.subr.bf16.mxu0 %v5244
    %6292 = vmatpush1.bf16.msra.mxu0 %v5243
    %6293 = vmatprep.subr.bf16.mxu0 %v5251
    %6294 = vmatpush1.bf16.msra.mxu0 %v5250
    %6295 = vmatprep.subr.bf16.mxu0 %v5258
    %6296 = vmatpush1.bf16.msra.mxu0 %v5257
    %6297 = vmatprep.subr.bf16.mxu0 %v5265
    %6298 = vmatpush1.bf16.msra.mxu0 %v5264
    %6299 = vmatprep.subr.bf16.mxu0 %v5272
    %6300 = vmatpush1.bf16.msra.mxu0 %v5271
    %6301 = vmatprep.subr.bf16.mxu0 %v5279
    %6302 = vmatpush1.bf16.msra.mxu0 %v5278
    %6303 = vmatprep.subr.bf16.mxu0 %v5286
    %6304 = vmatpush1.bf16.msra.mxu0 %v5285
    %6305 = vmatprep.subr.bf16.mxu0 %v5293
    %6306 = vmatpush1.bf16.msra.mxu0 %v5292
    %6307 = vmatprep.subr.bf16.mxu0 %v5300
    %6308 = vmatpush1.bf16.msra.mxu0 %v5299
    %6309 = vmatprep.subr.bf16.mxu0 %v5307
    %6310 = vmatpush1.bf16.msra.mxu0 %v5306
    %6311 = vmatprep.subr.bf16.mxu0 %v5314
    %6312 = vmatpush1.bf16.msra.mxu0 %v5313
    %6313 = vmatprep.subr.bf16.mxu0 %v5321
    %6314 = vmatpush1.bf16.msra.mxu0 %v5320
    %6315 = vmatprep.subr.bf16.mxu0 %v5328
    %6316 = vmatpush1.bf16.msra.mxu0 %v5327
    %6317 = vmatprep.subr.bf16.mxu0 %v5335
    %6318 = vmatpush1.bf16.msra.mxu0 %v5334
    %6319 = vmatprep.mubr.bf16.mxu0 %v3263
    %6320 = vmatmul.mubr.bf16.gmra.mrb[0].mxu0 %v3262
    %v6321 = vpop.f32.mrb[0].mxu0
    %v6322 = vadd.f32 %v3795, %v6321
    %v6323 = vpop.f32.mrb[0].mxu0
    %v6324 = vadd.f32 %v3799, %v6323
    %v6325 = vpop.f32.mrb[0].mxu0
    %v6326 = vpop.f32.mrb[0].mxu0
    %6327 = vdwg.mxu0
    %6328 = vmatprep.subr.bf16.mxu0 %v5342
    %6329 = vmatpush1.bf16.msra.mxu0 %v5341
    %6330 = vmatprep.subr.bf16.mxu0 %v5349
    %6331 = vmatpush1.bf16.msra.mxu0 %v5348
    %6332 = vmatprep.subr.bf16.mxu0 %v5356
    %6333 = vmatpush1.bf16.msra.mxu0 %v5355
    %6334 = vmatprep.subr.bf16.mxu0 %v5363
    %6335 = vmatpush1.bf16.msra.mxu0 %v5362
    %6336 = vmatprep.subr.bf16.mxu0 %v5370
    %6337 = vmatpush1.bf16.msra.mxu0 %v5369
    %6338 = vmatprep.subr.bf16.mxu0 %v5377
    %6339 = vmatpush1.bf16.msra.mxu0 %v5376
    %6340 = vmatprep.subr.bf16.mxu0 %v5384
    %6341 = vmatpush1.bf16.msra.mxu0 %v5383
    %6342 = vmatprep.subr.bf16.mxu0 %v5391
    %6343 = vmatpush1.bf16.msra.mxu0 %v5390
    %6344 = vmatprep.subr.bf16.mxu0 %v5398
    %6345 = vmatpush1.bf16.msra.mxu0 %v5397
    %6346 = vmatprep.subr.bf16.mxu0 %v5405
    %6347 = vmatpush1.bf16.msra.mxu0 %v5404
    %6348 = vmatprep.subr.bf16.mxu0 %v5412
    %6349 = vmatpush1.bf16.msra.mxu0 %v5411
    %6350 = vmatprep.subr.bf16.mxu0 %v5419
    %6351 = vmatpush1.bf16.msra.mxu0 %v5418
    %6352 = vmatprep.subr.bf16.mxu0 %v5426
    %6353 = vmatpush1.bf16.msra.mxu0 %v5425
    %6354 = vmatprep.subr.bf16.mxu0 %v5433
    %6355 = vmatpush1.bf16.msra.mxu0 %v5432
    %6356 = vmatprep.subr.bf16.mxu0 %v5440
    %6357 = vmatpush1.bf16.msra.mxu0 %v5439
    %6358 = vmatprep.subr.bf16.mxu0 %v5447
    %6359 = vmatpush1.bf16.msra.mxu0 %v5446
    %6360 = vmatprep.mubr.bf16.mxu0 %v3265
    %6361 = vmatmul.mubr.bf16.gmra.mrb[0].mxu0 %v3264
    %v6362 = vpop.f32.mrb[0].mxu0
    %v6363 = vadd.f32 %v6322, %v6362
    %v6364 = vpop.f32.mrb[0].mxu0
    %v6365 = vadd.f32 %v6324, %v6364
    %v6366 = vpop.f32.mrb[0].mxu0
    %v6367 = vpop.f32.mrb[0].mxu0
    %6368 = vdwg.mxu0
    %6369 = vmatprep.subr.bf16.mxu0 %v5454
    %6370 = vmatpush1.bf16.msra.mxu0 %v5453
    %6371 = vmatprep.subr.bf16.mxu0 %v5461
    %6372 = vmatpush1.bf16.msra.mxu0 %v5460
    %6373 = vmatprep.subr.bf16.mxu0 %v5468
    %6374 = vmatpush1.bf16.msra.mxu0 %v5467
    %6375 = vmatprep.subr.bf16.mxu0 %v5475
    %6376 = vmatpush1.bf16.msra.mxu0 %v5474
    %6377 = vmatprep.subr.bf16.mxu0 %v5482
    %6378 = vmatpush1.bf16.msra.mxu0 %v5481
    %6379 = vmatprep.subr.bf16.mxu0 %v5489
    %6380 = vmatpush1.bf16.msra.mxu0 %v5488
    %6381 = vmatprep.subr.bf16.mxu0 %v5496
    %6382 = vmatpush1.bf16.msra.mxu0 %v5495
    %6383 = vmatprep.subr.bf16.mxu0 %v5503
    %6384 = vmatpush1.bf16.msra.mxu0 %v5502
    %6385 = vmatprep.subr.bf16.mxu0 %v5510
    %6386 = vmatpush1.bf16.msra.mxu0 %v5509
    %6387 = vmatprep.subr.bf16.mxu0 %v5517
    %6388 = vmatpush1.bf16.msra.mxu0 %v5516
    %6389 = vmatprep.subr.bf16.mxu0 %v5524
    %6390 = vmatpush1.bf16.msra.mxu0 %v5523
    %6391 = vmatprep.subr.bf16.mxu0 %v5531
    %6392 = vmatpush1.bf16.msra.mxu0 %v5530
    %6393 = vmatprep.subr.bf16.mxu0 %v5538
    %6394 = vmatpush1.bf16.msra.mxu0 %v5537
    %6395 = vmatprep.subr.bf16.mxu0 %v5545
    %6396 = vmatpush1.bf16.msra.mxu0 %v5544
    %6397 = vmatprep.subr.bf16.mxu0 %v5552
    %6398 = vmatpush1.bf16.msra.mxu0 %v5551
    %6399 = vmatprep.subr.bf16.mxu0 %v5559
    %6400 = vmatpush1.bf16.msra.mxu0 %v5558
    %6401 = vmatprep.mubr.bf16.mxu0 %v3267
    %6402 = vmatmul.mubr.bf16.gmra.mrb[0].mxu0 %v3266
    %v6403 = vpop.f32.mrb[0].mxu0
    %v6404 = vadd.f32 %v6363, %v6403
    %v6405 = vpop.f32.mrb[0].mxu0
    %v6406 = vadd.f32 %v6365, %v6405
    %v6407 = vpop.f32.mrb[0].mxu0
    %v6408 = vpop.f32.mrb[0].mxu0
    %6409 = vdwg.mxu0
    %6410 = vmatprep.subr.bf16.mxu0 %v5566
    %6411 = vmatpush1.bf16.msra.mxu0 %v5565
    %6412 = vmatprep.subr.bf16.mxu0 %v5573
    %6413 = vmatpush1.bf16.msra.mxu0 %v5572
    %6414 = vmatprep.subr.bf16.mxu0 %v5580
    %6415 = vmatpush1.bf16.msra.mxu0 %v5579
    %6416 = vmatprep.subr.bf16.mxu0 %v5587
    %6417 = vmatpush1.bf16.msra.mxu0 %v5586
    %6418 = vmatprep.subr.bf16.mxu0 %v5594
    %6419 = vmatpush1.bf16.msra.mxu0 %v5593
    %6420 = vmatprep.subr.bf16.mxu0 %v5601
    %6421 = vmatpush1.bf16.msra.mxu0 %v5600
    %6422 = vmatprep.subr.bf16.mxu0 %v5608
    %6423 = vmatpush1.bf16.msra.mxu0 %v5607
    %6424 = vmatprep.subr.bf16.mxu0 %v5615
    %6425 = vmatpush1.bf16.msra.mxu0 %v5614
    %6426 = vmatprep.subr.bf16.mxu0 %v5622
    %6427 = vmatpush1.bf16.msra.mxu0 %v5621
    %6428 = vmatprep.subr.bf16.mxu0 %v5629
    %6429 = vmatpush1.bf16.msra.mxu0 %v5628
    %6430 = vmatprep.subr.bf16.mxu0 %v5636
    %6431 = vmatpush1.bf16.msra.mxu0 %v5635
    %6432 = vmatprep.subr.bf16.mxu0 %v5643
    %6433 = vmatpush1.bf16.msra.mxu0 %v5642
    %6434 = vmatprep.subr.bf16.mxu0 %v5650
    %6435 = vmatpush1.bf16.msra.mxu0 %v5649
    %6436 = vmatprep.subr.bf16.mxu0 %v5657
    %6437 = vmatpush1.bf16.msra.mxu0 %v5656
    %6438 = vmatprep.subr.bf16.mxu0 %v5664
    %6439 = vmatpush1.bf16.msra.mxu0 %v5663
    %6440 = vmatprep.subr.bf16.mxu0 %v5671
    %6441 = vmatpush1.bf16.msra.mxu0 %v5670
    %6442 = vmatprep.mubr.bf16.mxu0 %v3269
    %6443 = vmatmul.mubr.bf16.gmra.mrb[0].mxu0 %v3268
    %v6444 = vpop.f32.mrb[0].mxu0
    %v6445 = vadd.f32 %v6404, %v6444
    %v6446 = vpop.f32.mrb[0].mxu0
    %v6447 = vadd.f32 %v6406, %v6446
    %v6448 = vpop.f32.mrb[0].mxu0
    %v6449 = vpop.f32.mrb[0].mxu0
    %6450 = vdwg.mxu0
    %6451 = vmatprep.subr.bf16.mxu0 %v5232
    %6452 = vmatpush1.bf16.msra.mxu0 %v5231
    %6453 = vmatprep.subr.bf16.mxu0 %v5239
    %6454 = vmatpush1.bf16.msra.mxu0 %v5238
    %6455 = vmatprep.subr.bf16.mxu0 %v5246
    %6456 = vmatpush1.bf16.msra.mxu0 %v5245
    %6457 = vmatprep.subr.bf16.mxu0 %v5253
    %6458 = vmatpush1.bf16.msra.mxu0 %v5252
    %6459 = vmatprep.subr.bf16.mxu0 %v5260
    %6460 = vmatpush1.bf16.msra.mxu0 %v5259
    %6461 = vmatprep.subr.bf16.mxu0 %v5267
    %6462 = vmatpush1.bf16.msra.mxu0 %v5266
    %6463 = vmatprep.subr.bf16.mxu0 %v5274
    %6464 = vmatpush1.bf16.msra.mxu0 %v5273
    %6465 = vmatprep.subr.bf16.mxu0 %v5281
    %6466 = vmatpush1.bf16.msra.mxu0 %v5280
    %6467 = vmatprep.subr.bf16.mxu0 %v5288
    %6468 = vmatpush1.bf16.msra.mxu0 %v5287
    %6469 = vmatprep.subr.bf16.mxu0 %v5295
    %6470 = vmatpush1.bf16.msra.mxu0 %v5294
    %6471 = vmatprep.subr.bf16.mxu0 %v5302
    %6472 = vmatpush1.bf16.msra.mxu0 %v5301
    %6473 = vmatprep.subr.bf16.mxu0 %v5309
    %6474 = vmatpush1.bf16.msra.mxu0 %v5308
    %6475 = vmatprep.subr.bf16.mxu0 %v5316
    %6476 = vmatpush1.bf16.msra.mxu0 %v5315
    %6477 = vmatprep.subr.bf16.mxu0 %v5323
    %6478 = vmatpush1.bf16.msra.mxu0 %v5322
    %6479 = vmatprep.subr.bf16.mxu0 %v5330
    %6480 = vmatpush1.bf16.msra.mxu0 %v5329
    %6481 = vmatprep.subr.bf16.mxu0 %v5337
    %6482 = vmatpush1.bf16.msra.mxu0 %v5336
    %6483 = vmatprep.mubr.bf16.mxu0 %v3263
    %6484 = vmatmul.mubr.bf16.gmra.mrb[0].mxu0 %v3262
    %v6485 = vpop.f32.mrb[0].mxu0
    %v6486 = vadd.f32 %v3803, %v6485
    %v6487 = vpop.f32.mrb[0].mxu0
    %v6488 = vadd.f32 %v3807, %v6487
    %v6489 = vpop.f32.mrb[0].mxu0
    %v6490 = vpop.f32.mrb[0].mxu0
    %6491 = vdwg.mxu0
    %6492 = vmatprep.subr.bf16.mxu0 %v5344
    %6493 = vmatpush1.bf16.msra.mxu0 %v5343
    %6494 = vmatprep.subr.bf16.mxu0 %v5351
    %6495 = vmatpush1.bf16.msra.mxu0 %v5350
    %6496 = vmatprep.subr.bf16.mxu0 %v5358
    %6497 = vmatpush1.bf16.msra.mxu0 %v5357
    %6498 = vmatprep.subr.bf16.mxu0 %v5365
    %6499 = vmatpush1.bf16.msra.mxu0 %v5364
    %6500 = vmatprep.subr.bf16.mxu0 %v5372
    %6501 = vmatpush1.bf16.msra.mxu0 %v5371
    %6502 = vmatprep.subr.bf16.mxu0 %v5379
    %6503 = vmatpush1.bf16.msra.mxu0 %v5378
    %6504 = vmatprep.subr.bf16.mxu0 %v5386
    %6505 = vmatpush1.bf16.msra.mxu0 %v5385
    %6506 = vmatprep.subr.bf16.mxu0 %v5393
    %6507 = vmatpush1.bf16.msra.mxu0 %v5392
    %6508 = vmatprep.subr.bf16.mxu0 %v5400
    %6509 = vmatpush1.bf16.msra.mxu0 %v5399
    %6510 = vmatprep.subr.bf16.mxu0 %v5407
    %6511 = vmatpush1.bf16.msra.mxu0 %v5406
    %6512 = vmatprep.subr.bf16.mxu0 %v5414
    %6513 = vmatpush1.bf16.msra.mxu0 %v5413
    %6514 = vmatprep.subr.bf16.mxu0 %v5421
    %6515 = vmatpush1.bf16.msra.mxu0 %v5420
    %6516 = vmatprep.subr.bf16.mxu0 %v5428
    %6517 = vmatpush1.bf16.msra.mxu0 %v5427
    %6518 = vmatprep.subr.bf16.mxu0 %v5435
    %6519 = vmatpush1.bf16.msra.mxu0 %v5434
    %6520 = vmatprep.subr.bf16.mxu0 %v5442
    %6521 = vmatpush1.bf16.msra.mxu0 %v5441
    %6522 = vmatprep.subr.bf16.mxu0 %v5449
    %6523 = vmatpush1.bf16.msra.mxu0 %v5448
    %6524 = vmatprep.mubr.bf16.mxu0 %v3265
    %6525 = vmatmul.mubr.bf16.gmra.mrb[0].mxu0 %v3264
    %v6526 = vpop.f32.mrb[0].mxu0
    %v6527 = vadd.f32 %v6486, %v6526
    %v6528 = vpop.f32.mrb[0].mxu0
    %v6529 = vadd.f32 %v6488, %v6528
    %v6530 = vpop.f32.mrb[0].mxu0
    %v6531 = vpop.f32.mrb[0].mxu0
    %6532 = vdwg.mxu0
    %6533 = vmatprep.subr.bf16.mxu0 %v5456
    %6534 = vmatpush1.bf16.msra.mxu0 %v5455
    %6535 = vmatprep.subr.bf16.mxu0 %v5463
    %6536 = vmatpush1.bf16.msra.mxu0 %v5462
    %6537 = vmatprep.subr.bf16.mxu0 %v5470
    %6538 = vmatpush1.bf16.msra.mxu0 %v5469
    %6539 = vmatprep.subr.bf16.mxu0 %v5477
    %6540 = vmatpush1.bf16.msra.mxu0 %v5476
    %6541 = vmatprep.subr.bf16.mxu0 %v5484
    %6542 = vmatpush1.bf16.msra.mxu0 %v5483
    %6543 = vmatprep.subr.bf16.mxu0 %v5491
    %6544 = vmatpush1.bf16.msra.mxu0 %v5490
    %6545 = vmatprep.subr.bf16.mxu0 %v5498
    %6546 = vmatpush1.bf16.msra.mxu0 %v5497
    %6547 = vmatprep.subr.bf16.mxu0 %v5505
    %6548 = vmatpush1.bf16.msra.mxu0 %v5504
    %6549 = vmatprep.subr.bf16.mxu0 %v5512
    %6550 = vmatpush1.bf16.msra.mxu0 %v5511
    %6551 = vmatprep.subr.bf16.mxu0 %v5519
    %6552 = vmatpush1.bf16.msra.mxu0 %v5518
    %6553 = vmatprep.subr.bf16.mxu0 %v5526
    %6554 = vmatpush1.bf16.msra.mxu0 %v5525
    %6555 = vmatprep.subr.bf16.mxu0 %v5533
    %6556 = vmatpush1.bf16.msra.mxu0 %v5532
    %6557 = vmatprep.subr.bf16.mxu0 %v5540
    %6558 = vmatpush1.bf16.msra.mxu0 %v5539
    %6559 = vmatprep.subr.bf16.mxu0 %v5547
    %6560 = vmatpush1.bf16.msra.mxu0 %v5546
    %6561 = vmatprep.subr.bf16.mxu0 %v5554
    %6562 = vmatpush1.bf16.msra.mxu0 %v5553
    %6563 = vmatprep.subr.bf16.mxu0 %v5561
    %6564 = vmatpush1.bf16.msra.mxu0 %v5560
    %6565 = vmatprep.mubr.bf16.mxu0 %v3267
    %6566 = vmatmul.mubr.bf16.gmra.mrb[0].mxu0 %v3266
    %v6567 = vpop.f32.mrb[0].mxu0
    %v6568 = vadd.f32 %v6527, %v6567
    %v6569 = vpop.f32.mrb[0].mxu0
    %v6570 = vadd.f32 %v6529, %v6569
    %v6571 = vpop.f32.mrb[0].mxu0
    %v6572 = vpop.f32.mrb[0].mxu0
    %6573 = vdwg.mxu0
    %6574 = vmatprep.subr.bf16.mxu0 %v5568
    %6575 = vmatpush1.bf16.msra.mxu0 %v5567
    %6576 = vmatprep.subr.bf16.mxu0 %v5575
    %6577 = vmatpush1.bf16.msra.mxu0 %v5574
    %6578 = vmatprep.subr.bf16.mxu0 %v5582
    %6579 = vmatpush1.bf16.msra.mxu0 %v5581
    %6580 = vmatprep.subr.bf16.mxu0 %v5589
    %6581 = vmatpush1.bf16.msra.mxu0 %v5588
    %6582 = vmatprep.subr.bf16.mxu0 %v5596
    %6583 = vmatpush1.bf16.msra.mxu0 %v5595
    %6584 = vmatprep.subr.bf16.mxu0 %v5603
    %6585 = vmatpush1.bf16.msra.mxu0 %v5602
    %6586 = vmatprep.subr.bf16.mxu0 %v5610
    %6587 = vmatpush1.bf16.msra.mxu0 %v5609
    %6588 = vmatprep.subr.bf16.mxu0 %v5617
    %6589 = vmatpush1.bf16.msra.mxu0 %v5616
    %6590 = vmatprep.subr.bf16.mxu0 %v5624
    %6591 = vmatpush1.bf16.msra.mxu0 %v5623
    %6592 = vmatprep.subr.bf16.mxu0 %v5631
    %6593 = vmatpush1.bf16.msra.mxu0 %v5630
    %6594 = vmatprep.subr.bf16.mxu0 %v5638
    %6595 = vmatpush1.bf16.msra.mxu0 %v5637
    %6596 = vmatprep.subr.bf16.mxu0 %v5645
    %6597 = vmatpush1.bf16.msra.mxu0 %v5644
    %6598 = vmatprep.subr.bf16.mxu0 %v5652
    %6599 = vmatpush1.bf16.msra.mxu0 %v5651
    %6600 = vmatprep.subr.bf16.mxu0 %v5659
    %6601 = vmatpush1.bf16.msra.mxu0 %v5658
    %6602 = vmatprep.subr.bf16.mxu0 %v5666
    %6603 = vmatpush1.bf16.msra.mxu0 %v5665
    %6604 = vmatprep.subr.bf16.mxu0 %v5673
    %6605 = vmatpush1.bf16.msra.mxu0 %v5672
    %6606 = vmatprep.mubr.bf16.mxu0 %v3269
    %6607 = vmatmul.mubr.bf16.gmra.mrb[0].mxu0 %v3268
    %v6608 = vpop.f32.mrb[0].mxu0
    %v6609 = vadd.f32 %v6568, %v6608
    %v6610 = vpop.f32.mrb[0].mxu0
    %v6611 = vadd.f32 %v6570, %v6610
    %v6612 = vpop.f32.mrb[0].mxu0
    %v6613 = vpop.f32.mrb[0].mxu0
    %6614 = vdwg.mxu0
    %6615 = vmatprep.subr.bf16.mxu0 0
    %6616 = vmatpush1.bf16.msra.mxu0 %v5233
    %6617 = vmatprep.subr.bf16.mxu0 0
    %6618 = vmatpush1.bf16.msra.mxu0 %v5240
    %6619 = vmatprep.subr.bf16.mxu0 0
    %6620 = vmatpush1.bf16.msra.mxu0 %v5247
    %6621 = vmatprep.subr.bf16.mxu0 0
    %6622 = vmatpush1.bf16.msra.mxu0 %v5254
    %6623 = vmatprep.subr.bf16.mxu0 0
    %6624 = vmatpush1.bf16.msra.mxu0 %v5261
    %6625 = vmatprep.subr.bf16.mxu0 0
    %6626 = vmatpush1.bf16.msra.mxu0 %v5268
    %6627 = vmatprep.subr.bf16.mxu0 0
    %6628 = vmatpush1.bf16.msra.mxu0 %v5275
    %6629 = vmatprep.subr.bf16.mxu0 0
    %6630 = vmatpush1.bf16.msra.mxu0 %v5282
    %6631 = vmatprep.subr.bf16.mxu0 0
    %6632 = vmatpush1.bf16.msra.mxu0 %v5289
    %6633 = vmatprep.subr.bf16.mxu0 0
    %6634 = vmatpush1.bf16.msra.mxu0 %v5296
    %6635 = vmatprep.subr.bf16.mxu0 0
    %6636 = vmatpush1.bf16.msra.mxu0 %v5303
    %6637 = vmatprep.subr.bf16.mxu0 0
    %6638 = vmatpush1.bf16.msra.mxu0 %v5310
    %6639 = vmatprep.subr.bf16.mxu0 0
    %6640 = vmatpush1.bf16.msra.mxu0 %v5317
    %6641 = vmatprep.subr.bf16.mxu0 0
    %6642 = vmatpush1.bf16.msra.mxu0 %v5324
    %6643 = vmatprep.subr.bf16.mxu0 0
    %6644 = vmatpush1.bf16.msra.mxu0 %v5331
    %6645 = vmatprep.subr.bf16.mxu0 0
    %6646 = vmatpush1.bf16.msra.mxu0 %v5338
    %6647 = vmatprep.mubr.bf16.mxu0 %v3263
    %6648 = vmatmul.mubr.bf16.gmra.mrb[0].mxu0 %v3262
    %v6649 = vpop.f32.mrb[0].mxu0
    %v6650 = vadd.f32 %v3811, %v6649
    %v6651 = vpop.f32.mrb[0].mxu0
    %v6652 = vpop.f32.mrb[0].mxu0
    %v6653 = vpop.f32.mrb[0].mxu0
    %6654 = vdwg.mxu0
    %6655 = vmatprep.subr.bf16.mxu0 0
    %6656 = vmatpush1.bf16.msra.mxu0 %v5345
    %6657 = vmatprep.subr.bf16.mxu0 0
    %6658 = vmatpush1.bf16.msra.mxu0 %v5352
    %6659 = vmatprep.subr.bf16.mxu0 0
    %6660 = vmatpush1.bf16.msra.mxu0 %v5359
    %6661 = vmatprep.subr.bf16.mxu0 0
    %6662 = vmatpush1.bf16.msra.mxu0 %v5366
    %6663 = vmatprep.subr.bf16.mxu0 0
    %6664 = vmatpush1.bf16.msra.mxu0 %v5373
    %6665 = vmatprep.subr.bf16.mxu0 0
    %6666 = vmatpush1.bf16.msra.mxu0 %v5380
    %6667 = vmatprep.subr.bf16.mxu0 0
    %6668 = vmatpush1.bf16.msra.mxu0 %v5387
    %6669 = vmatprep.subr.bf16.mxu0 0
    %6670 = vmatpush1.bf16.msra.mxu0 %v5394
    %6671 = vmatprep.subr.bf16.mxu0 0
    %6672 = vmatpush1.bf16.msra.mxu0 %v5401
    %6673 = vmatprep.subr.bf16.mxu0 0
    %6674 = vmatpush1.bf16.msra.mxu0 %v5408
    %6675 = vmatprep.subr.bf16.mxu0 0
    %6676 = vmatpush1.bf16.msra.mxu0 %v5415
    %6677 = vmatprep.subr.bf16.mxu0 0
    %6678 = vmatpush1.bf16.msra.mxu0 %v5422
    %6679 = vmatprep.subr.bf16.mxu0 0
    %6680 = vmatpush1.bf16.msra.mxu0 %v5429
    %6681 = vmatprep.subr.bf16.mxu0 0
    %6682 = vmatpush1.bf16.msra.mxu0 %v5436
    %6683 = vmatprep.subr.bf16.mxu0 0
    %6684 = vmatpush1.bf16.msra.mxu0 %v5443
    %6685 = vmatprep.subr.bf16.mxu0 0
    %6686 = vmatpush1.bf16.msra.mxu0 %v5450
    %6687 = vmatprep.mubr.bf16.mxu0 %v3265
    %6688 = vmatmul.mubr.bf16.gmra.mrb[0].mxu0 %v3264
    %v6689 = vpop.f32.mrb[0].mxu0
    %v6690 = vadd.f32 %v6650, %v6689
    %v6691 = vpop.f32.mrb[0].mxu0
    %v6692 = vpop.f32.mrb[0].mxu0
    %v6693 = vpop.f32.mrb[0].mxu0
    %6694 = vdwg.mxu0
    %6695 = vmatprep.subr.bf16.mxu0 0
    %6696 = vmatpush1.bf16.msra.mxu0 %v5457
    %6697 = vmatprep.subr.bf16.mxu0 0
    %6698 = vmatpush1.bf16.msra.mxu0 %v5464
    %6699 = vmatprep.subr.bf16.mxu0 0
    %6700 = vmatpush1.bf16.msra.mxu0 %v5471
    %6701 = vmatprep.subr.bf16.mxu0 0
    %6702 = vmatpush1.bf16.msra.mxu0 %v5478
    %6703 = vmatprep.subr.bf16.mxu0 0
    %6704 = vmatpush1.bf16.msra.mxu0 %v5485
    %6705 = vmatprep.subr.bf16.mxu0 0
    %6706 = vmatpush1.bf16.msra.mxu0 %v5492
    %6707 = vmatprep.subr.bf16.mxu0 0
    %6708 = vmatpush1.bf16.msra.mxu0 %v5499
    %6709 = vmatprep.subr.bf16.mxu0 0
    %6710 = vmatpush1.bf16.msra.mxu0 %v5506
    %6711 = vmatprep.subr.bf16.mxu0 0
    %6712 = vmatpush1.bf16.msra.mxu0 %v5513
    %6713 = vmatprep.subr.bf16.mxu0 0
    %6714 = vmatpush1.bf16.msra.mxu0 %v5520
    %6715 = vmatprep.subr.bf16.mxu0 0
    %6716 = vmatpush1.bf16.msra.mxu0 %v5527
    %6717 = vmatprep.subr.bf16.mxu0 0
    %6718 = vmatpush1.bf16.msra.mxu0 %v5534
    %6719 = vmatprep.subr.bf16.mxu0 0
    %6720 = vmatpush1.bf16.msra.mxu0 %v5541
    %6721 = vmatprep.subr.bf16.mxu0 0
    %6722 = vmatpush1.bf16.msra.mxu0 %v5548
    %6723 = vmatprep.subr.bf16.mxu0 0
    %6724 = vmatpush1.bf16.msra.mxu0 %v5555
    %6725 = vmatprep.subr.bf16.mxu0 0
    %6726 = vmatpush1.bf16.msra.mxu0 %v5562
    %6727 = vmatprep.mubr.bf16.mxu0 %v3267
    %6728 = vmatmul.mubr.bf16.gmra.mrb[0].mxu0 %v3266
    %v6729 = vpop.f32.mrb[0].mxu0
    %v6730 = vadd.f32 %v6690, %v6729
    %v6731 = vpop.f32.mrb[0].mxu0
    %v6732 = vpop.f32.mrb[0].mxu0
    %v6733 = vpop.f32.mrb[0].mxu0
    %6734 = vdwg.mxu0
    %6735 = vmatprep.subr.bf16.mxu0 0
    %6736 = vmatpush1.bf16.msra.mxu0 %v5569
    %6737 = vmatprep.subr.bf16.mxu0 0
    %6738 = vmatpush1.bf16.msra.mxu0 %v5576
    %6739 = vmatprep.subr.bf16.mxu0 0
    %6740 = vmatpush1.bf16.msra.mxu0 %v5583
    %6741 = vmatprep.subr.bf16.mxu0 0
    %6742 = vmatpush1.bf16.msra.mxu0 %v5590
    %6743 = vmatprep.subr.bf16.mxu0 0
    %6744 = vmatpush1.bf16.msra.mxu0 %v5597
    %6745 = vmatprep.subr.bf16.mxu0 0
    %6746 = vmatpush1.bf16.msra.mxu0 %v5604
    %6747 = vmatprep.subr.bf16.mxu0 0
    %6748 = vmatpush1.bf16.msra.mxu0 %v5611
    %6749 = vmatprep.subr.bf16.mxu0 0
    %6750 = vmatpush1.bf16.msra.mxu0 %v5618
    %6751 = vmatprep.subr.bf16.mxu0 0
    %6752 = vmatpush1.bf16.msra.mxu0 %v5625
    %6753 = vmatprep.subr.bf16.mxu0 0
    %6754 = vmatpush1.bf16.msra.mxu0 %v5632
    %6755 = vmatprep.subr.bf16.mxu0 0
    %6756 = vmatpush1.bf16.msra.mxu0 %v5639
    %6757 = vmatprep.subr.bf16.mxu0 0
    %6758 = vmatpush1.bf16.msra.mxu0 %v5646
    %6759 = vmatprep.subr.bf16.mxu0 0
    %6760 = vmatpush1.bf16.msra.mxu0 %v5653
    %6761 = vmatprep.subr.bf16.mxu0 0
    %6762 = vmatpush1.bf16.msra.mxu0 %v5660
    %6763 = vmatprep.subr.bf16.mxu0 0
    %6764 = vmatpush1.bf16.msra.mxu0 %v5667
    %6765 = vmatprep.subr.bf16.mxu0 0
    %6766 = vmatpush1.bf16.msra.mxu0 %v5674
    %6767 = vmatprep.mubr.bf16.mxu0 %v3269
    %6768 = vmatmul.mubr.bf16.gmra.mrb[0].mxu0 %v3268
    %v6769 = vpop.f32.mrb[0].mxu0
    %v6770 = vadd.f32 %v6730, %v6769
    %v6771 = vpop.f32.mrb[0].mxu0
    %v6772 = vpop.f32.mrb[0].mxu0
    %v6773 = vpop.f32.mrb[0].mxu0
    %6774 = vdwg.mxu0
    %v6775 = vtanh.pop %v6281
    %v6776 = vtanh.pop %v6283
    %v6777 = vtanh.pop %v6445
    %v6778 = vtanh.pop %v6447
    %v6779 = vtanh.pop %v6609
    %v6780 = vtanh.pop %v6611
    %v6781 = vtanh.pop %v6770
    %6782 = vst [vmem:[%s11] sm:$0xff] %v6775
    %6783 = vst [vmem:[%s11 + $0x8] sm:$0xff] %v6776
    %6784 = vst [vmem:[%s11 + $0x10] sm:$0xff] %v6777
    %6785 = vst [vmem:[%s11 + $0x18] sm:$0xff] %v6778
    %6786 = vst [vmem:[%s11 + $0x20] sm:$0xff] %v6779
    %6787 = vst [vmem:[%s11 + $0x28] sm:$0xff] %v6780
    %vm6788 = vcmask 130048
    %6789 = vst.msk [vmem:[%s11 + $0x30] sm:$0xff] %vm6788, %v6781
    // Predicated region
    $region86: #{generator_forward.1} parent=1 // pred_check
      _
    $region87: #{generator_forward.1} parent=1 // pred_check_branch
      %6791 = sbr.rel (0) target = $region89
    $region88: #{generator_forward.1} parent=1 // pred_region
      _
    $region89: #{generator_forward.1} parent=1 // pred_fallthru
      _
    // Predicated region
    $region90: #{generator_forward.1} parent=1 // pred_check
      _
    $region91: #{generator_forward.1} parent=1 // pred_check_branch
      %6793 = sbr.rel (0) target = $region93
    $region92: #{generator_forward.1} parent=1 // pred_region
      _
    $region93: #{generator_forward.1} parent=1 // pred_fallthru
      _
    %6794 = vsyncpa [#allocation3], 1
    %6795 = vsyncpa [#allocation5], 1
    %6796 = vsyncpa [#allocation8], 1
    %6797 = vsyncpa [#allocation11], 1
    %6798 = vsyncpa [#allocation14], 1
    %6799 = vsyncpa [#allocation17], 1

</llo_original>
